<compile_context>
chip_gen: v7x
topology: tpu7x:2x2x1
jax: 0.10.0
libtpu: 0.0.40
codegen_flags: <defaults>
</compile_context>

<pallas_src>
import functools

import jax
import jax.numpy as jnp
from jax import lax
from jax.experimental import pallas as pl
from jax.experimental.pallas import tpu as pltpu

KH = KW = 3  # the module hard-codes 3x3 "same" convolutions


def _round_up(n, m):
    return (n + m - 1) // m * m


def _sigmoid(x):
    # One EUP op (tanh) instead of exp + divide; mathematically identical.
    return 0.5 * jnp.tanh(0.5 * x) + 0.5


# ----------------------------- fused Pallas kernel -----------------------------

def _make_fused_kernel(hidden_dims, H, W):
    L = len(hidden_dims)
    HW = H * W

    def kernel(*refs):
        it = iter(refs)
        # ---- inputs ----
        xpat_ref = next(it)                       # (1, Kx, HW)   layer-0 x patches (this step)
        w0x_ref = next(it)                        # (4*h0, Kx)
        wh_refs = [next(it) for _ in range(L)]    # (4*h_l, 9*K_l)
        b_refs = [next(it) for _ in range(L)]     # (4*h_l, 1)
        wout_ref = next(it)                       # (8, 9*h_{L-1}) (row 0 real, rows 1..7 zero)
        bout_ref = next(it)                       # (1, 1)
        mask_ref = next(it)                       # (9, HW) tap validity masks
        # ---- outputs ----
        y_ref = next(it)                          # (1, 1, HW)
        h_refs = [next(it) for _ in range(L)]     # (h_l, HW)  VMEM-resident state
        c_refs = [next(it) for _ in range(L)]     # (h_l, HW)  VMEM-resident state
        # ---- scratch ----
        pat_refs = [next(it) for _ in range(L)]   # (9*K_l, HW)
        pat_out_ref = next(it)                    # (9*h_{L-1}, HW)

        t = pl.program_id(0)

        @pl.when(t == 0)
        def _init():
            for l in range(L):
                h_refs[l][...] = jnp.zeros_like(h_refs[l])
                c_refs[l][...] = jnp.zeros_like(c_refs[l])

        def build_patches(pat_ref, srcs):
            # srcs: list of (C, HW) arrays; fills pat_ref with SAME-padded 3x3
            # im2col rows, tap-major / channel-minor (PyTorch concat order).
            ktot = sum(s.shape[0] for s in srcs)
            for k in range(KH * KW):
                oy = k // KW - 1
                ox = k % KW - 1
                shift = (-(oy * W + ox)) % HW
                m = mask_ref[k:k + 1, :]                       # (1, HW)
                off = k * ktot
                for s in srcs:
                    c = s.shape[0]
                    rolled = pltpu.roll(s, shift=shift, axis=1) if shift else s
                    pat_ref[off:off + c, :] = rolled * m
                    off += c

        h_below = None
        for l in range(L):
            hid = hidden_dims[l]
            h_prev = h_refs[l][...]
            c_prev = c_refs[l][...]
            if l == 0:
                build_patches(pat_refs[0], [h_prev])
                acc = jnp.dot(w0x_ref[...], xpat_ref[0],
                              preferred_element_type=jnp.float32)
                acc = acc + jnp.dot(wh_refs[0][...], pat_refs[0][...],
                                    preferred_element_type=jnp.float32)
            else:
                build_patches(pat_refs[l], [h_below, h_prev])
                acc = jnp.dot(wh_refs[l][...], pat_refs[l][...],
                              preferred_element_type=jnp.float32)
            acc = acc + b_refs[l][...]
            gi = _sigmoid(acc[0 * hid:1 * hid, :])
            gf = _sigmoid(acc[1 * hid:2 * hid, :])
            go = _sigmoid(acc[2 * hid:3 * hid, :])
            gg = jnp.tanh(acc[3 * hid:4 * hid, :])
            c_new = gf * c_prev + gi * gg
            h_new = go * jnp.tanh(c_new)
            c_refs[l][...] = c_new
            h_refs[l][...] = h_new
            h_below = h_new

        # Final Conv2d(hidden_dims[-1] -> 1, 3x3, SAME), fused into the same step.
        build_patches(pat_out_ref, [h_below])
        y8 = jnp.dot(wout_ref[...], pat_out_ref[...],
                     preferred_element_type=jnp.float32) + bout_ref[...]
        y_ref[...] = y8[0:1, :].reshape(1, 1, HW)

    return kernel


# ------------------------------- JAX glue ---------------------------------

def _im2col_cf(x_chw):
    """(C, H, W) -> (9*C, H*W): SAME-padded 3x3 patches, tap-major / channel-minor."""
    C, H, W = x_chw.shape
    xp = jnp.pad(x_chw, ((0, 0), (1, 1), (1, 1)))
    rows = [xp[:, dy:dy + H, dx:dx + W].reshape(C, H * W)
            for dy in range(KH) for dx in range(KW)]
    return jnp.concatenate(rows, axis=0)


def _tap_masks(H, W):
    """(9, H*W) f32 validity masks for SAME-padded 3x3 taps over the flat y*W+x axis."""
    yy, xx = jnp.meshgrid(jnp.arange(H), jnp.arange(W), indexing="ij")
    yy = yy.reshape(-1)
    xx = xx.reshape(-1)
    rows = []
    for k in range(KH * KW):
        oy, ox = k // KW - 1, k % KW - 1
        valid = ((yy + oy >= 0) & (yy + oy < H) & (xx + ox >= 0) & (xx + ox < W))
        rows.append(valid.astype(jnp.float32))
    return jnp.stack(rows, axis=0)


def prepare_params(raw, input_dim, hidden_dims):
    """PyTorch conv weights (Cout, Cin, KH, KW) -> matmul weights, transposed layout."""
    L = len(hidden_dims)
    h0 = hidden_dims[0]
    kx = _round_up(KH * KW * input_dim, 8)
    w0 = raw["w"][0]                              # (4*h0, input_dim + h0, 3, 3)
    w0x = jnp.transpose(w0[:, :input_dim], (0, 2, 3, 1)).reshape(4 * h0, KH * KW * input_dim)
    w0x = jnp.pad(w0x, ((0, 0), (0, kx - KH * KW * input_dim)))
    wh = [jnp.transpose(w0[:, input_dim:], (0, 2, 3, 1)).reshape(4 * h0, KH * KW * h0)]
    for l in range(1, L):
        wl = raw["w"][l]                          # (4*h_l, h_{l-1} + h_l, 3, 3)
        k_l = wl.shape[1]
        wh.append(jnp.transpose(wl, (0, 2, 3, 1)).reshape(4 * hidden_dims[l], KH * KW * k_l))
    w_out = jnp.transpose(raw["w_out"], (0, 2, 3, 1)).reshape(1, KH * KW * hidden_dims[-1])
    w_out = jnp.pad(w_out, ((0, 7), (0, 0)))      # pad M to 8 for a clean MXU tile
    return {
        "w0x": w0x,
        "wh": wh,
        "b": [raw["b"][l][:, None] for l in range(L)],   # (4*h_l, 1)
        "w_out": w_out,                                  # (8, 9*h_{L-1})
        "b_out": raw["b_out"].reshape(1, 1),
    }


def convlstm_forward(x, params, *, hidden_dims, H, W):
    """x: (1, T, Cin, H, W) float32 (batch_first; batch is 1 as in the module).

    Returns (train_y_vals (T, 1, H, W), last_layer_hidden_states), i.e. the
    forward_mode='Train', epsilon=1.0 path of the PyTorch module.
    """
    T = x.shape[1]
    L = len(hidden_dims)
    HW = H * W
    kx = params["w0x"].shape[1]

    # im2col of the external input: pure data movement, parallel over T, outside
    # the serial recurrence.  K padded to a multiple of 8 for clean MXU feeds.
    xpat = jax.vmap(_im2col_cf)(x[0])                                  # (T, 9*Cin, HW)
    xpat = jnp.pad(xpat, ((0, 0), (0, kx - xpat.shape[1]), (0, 0)))

    masks = _tap_masks(H, W)

    const2d = lambda t: (0, 0)
    in_specs = [
        pl.BlockSpec((1, kx, HW), lambda t: (t, 0, 0)),
        pl.BlockSpec(params["w0x"].shape, const2d),
        *[pl.BlockSpec(params["wh"][l].shape, const2d) for l in range(L)],
        *[pl.BlockSpec(params["b"][l].shape, const2d) for l in range(L)],
        pl.BlockSpec(params["w_out"].shape, const2d),
        pl.BlockSpec(params["b_out"].shape, const2d),
        pl.BlockSpec(masks.shape, const2d),
    ]
    out_specs = (
        pl.BlockSpec((1, 1, HW), lambda t: (t, 0, 0)),
        *[pl.BlockSpec((hidden_dims[l], HW), const2d) for l in range(L)],
        *[pl.BlockSpec((hidden_dims[l], HW), const2d) for l in range(L)],
    )
    out_shape = (
        jax.ShapeDtypeStruct((T, 1, HW), jnp.float32),
        *[jax.ShapeDtypeStruct((hidden_dims[l], HW), jnp.float32) for l in range(L)],
        *[jax.ShapeDtypeStruct((hidden_dims[l], HW), jnp.float32) for l in range(L)],
    )
    k_ins = [hidden_dims[0]] + [hidden_dims[l - 1] + hidden_dims[l] for l in range(1, L)]
    scratch_shapes = (
        [pltpu.VMEM((KH * KW * k_ins[l], HW), jnp.float32) for l in range(L)]
        + [pltpu.VMEM((KH * KW * hidden_dims[-1], HW), jnp.float32)]
    )

    outs = pl.pallas_call(
        _make_fused_kernel(tuple(hidden_dims), H, W),
        out_shape=out_shape,
        grid_spec=pltpu.PrefetchScalarGridSpec(
            num_scalar_prefetch=0,
            grid=(T,),
            in_specs=in_specs,
            out_specs=out_specs,
            scratch_shapes=scratch_shapes,
        ),
        compiler_params=pltpu.CompilerParams(
            dimension_semantics=("arbitrary",)),
    )(xpat, params["w0x"], *params["wh"], *params["b"],
      params["w_out"], params["b_out"], masks)

    y = outs[0].reshape(T, 1, H, W)
    h_fin = outs[1:1 + L]
    c_fin = outs[1 + L:1 + 2 * L]
    last_states = [(h_fin[l].reshape(hidden_dims[l], H, W)[None],
                    c_fin[l].reshape(hidden_dims[l], H, W)[None]) for l in range(L)]
    return y, last_states


# -------------------------- pure-JAX reference ----------------------------

def ref_forward(x, raw, hidden_dims):
    T, H, W = x.shape[1], x.shape[3], x.shape[4]
    L = len(hidden_dims)
    dn = ('NCHW', 'OIHW', 'NCHW')
    h = [jnp.zeros((1, hd, H, W), jnp.float32) for hd in hidden_dims]
    c = [jnp.zeros_like(v) for v in h]
    outs = []
    for t in range(T):
        xt = x[:, t]
        for l in range(L):
            comb = jnp.concatenate([xt, h[l]], axis=1)
            conv = lax.conv_general_dilated(comb, raw["w"][l], (1, 1), 'SAME',
                                            dimension_numbers=dn)
            conv = conv + raw["b"][l][None, :, None, None]
            i_, f_, o_, g_ = jnp.split(conv, 4, axis=1)
            i_, f_, o_ = jax.nn.sigmoid(i_), jax.nn.sigmoid(f_), jax.nn.sigmoid(o_)
            g_ = jnp.tanh(g_)
            c[l] = f_ * c[l] + i_ * g_
            h[l] = o_ * jnp.tanh(c[l])
            xt = h[l]
        y = lax.conv_general_dilated(h[-1], raw["w_out"], (1, 1), 'SAME',
                                     dimension_numbers=dn)
        y = y + raw["b_out"][None, :, None, None]
        outs.append(y[0])
    return jnp.stack(outs, axis=0), h, c


# --------------------------------- main ------------------------------------

if __name__ == "__main__":
    H = W = 16
    Cin = 4
    T = 8
    hidden_dims = (32, 32)
    L = len(hidden_dims)

    key = jax.random.PRNGKey(0)
    ks = jax.random.split(key, 2 * L + 3)

    # Deterministic synthetic parameters with PyTorch conv shapes.
    raw = {"w": [], "b": []}
    in_dims = [Cin] + list(hidden_dims[:-1])
    for l in range(L):
        cin_l = in_dims[l] + hidden_dims[l]
        raw["w"].append(0.1 * jax.random.normal(
            ks[2 * l], (4 * hidden_dims[l], cin_l, 3, 3), jnp.float32))
        raw["b"].append(0.1 * jax.random.normal(
            ks[2 * l + 1], (4 * hidden_dims[l],), jnp.float32))
    raw["w_out"] = 0.1 * jax.random.normal(ks[2 * L], (1, hidden_dims[-1], 3, 3),
                                           jnp.float32)
    raw["b_out"] = 0.1 * jax.random.normal(ks[2 * L + 1], (1,), jnp.float32)

    params = prepare_params(raw, Cin, hidden_dims)

    # Example input: (b=1, t, c, h, w), batch_first=True (module hard-codes b=1).
    x = jax.random.normal(ks[2 * L + 2], (1, T, Cin, H, W), jnp.float32)

    fwd = jax.jit(functools.partial(convlstm_forward,
                                    hidden_dims=hidden_dims, H=H, W=W))
    y, last_states = fwd(x, params)
    jax.block_until_ready(y)

    # Correctness check against a lax.conv reference of the same PyTorch semantics.
    y_ref, h_ref, c_ref = ref_forward(x, raw, list(hidden_dims))
    assert y.shape == (T, 1, H, W), y.shape
    assert last_states[-1][0].shape == (1, hidden_dims[-1], H, W)
    max_err = float(jnp.max(jnp.abs(y - y_ref)))
    assert jnp.allclose(y, y_ref, atol=1e-4, rtol=1e-4), max_err
    for l in range(L):
        assert jnp.allclose(last_states[l][0], h_ref[l], atol=1e-4, rtol=1e-4)
        assert jnp.allclose(last_states[l][1], c_ref[l], atol=1e-4, rtol=1e-4)

    print("KERNEL_OK")
</pallas_src>

<mosaic_0001>
module attributes {stable_mosaic.version = 11 : i64} {
  func.func @kernel(%arg0: i32, %arg1: memref<1x40x256xf32, #tpu.memory_space<vmem>>, %arg2: memref<128x40xf32, #tpu.memory_space<vmem>>, %arg3: memref<128x288xf32, #tpu.memory_space<vmem>>, %arg4: memref<128x576xf32, #tpu.memory_space<vmem>>, %arg5: memref<128x1xf32, #tpu.memory_space<vmem>>, %arg6: memref<128x1xf32, #tpu.memory_space<vmem>>, %arg7: memref<8x288xf32, #tpu.memory_space<vmem>>, %arg8: memref<1x1xf32, #tpu.memory_space<vmem>>, %arg9: memref<9x256xf32, #tpu.memory_space<vmem>>, %arg10: memref<1x1x256xf32, #tpu.memory_space<vmem>>, %arg11: memref<32x256xf32, #tpu.memory_space<vmem>>, %arg12: memref<32x256xf32, #tpu.memory_space<vmem>>, %arg13: memref<32x256xf32, #tpu.memory_space<vmem>>, %arg14: memref<32x256xf32, #tpu.memory_space<vmem>>, %arg15: memref<288x256xf32, #tpu.memory_space<vmem>>, %arg16: memref<576x256xf32, #tpu.memory_space<vmem>>, %arg17: memref<288x256xf32, #tpu.memory_space<vmem>>) attributes {dimension_semantics = [#tpu.dimension_semantics<arbitrary>], iteration_bounds = array<i64: 8>, scalar_prefetch = 0 : i64, scratch_operands = 3 : i64, tpu.core_type = #tpu.core_type<tc>, window_params = [{transform_indices = @transform_0, window_bounds = array<i64: 1, 40, 256>}, {pipeline_mode = #tpu.pipeline_mode<synchronous>, transform_indices = @transform_1, window_bounds = array<i64: 128, 40>}, {pipeline_mode = #tpu.pipeline_mode<synchronous>, transform_indices = @transform_2, window_bounds = array<i64: 128, 288>}, {pipeline_mode = #tpu.pipeline_mode<synchronous>, transform_indices = @transform_3, window_bounds = array<i64: 128, 576>}, {pipeline_mode = #tpu.pipeline_mode<synchronous>, transform_indices = @transform_4, window_bounds = array<i64: 128, 1>}, {pipeline_mode = #tpu.pipeline_mode<synchronous>, transform_indices = @transform_5, window_bounds = array<i64: 128, 1>}, {pipeline_mode = #tpu.pipeline_mode<synchronous>, transform_indices = @transform_6, window_bounds = array<i64: 8, 288>}, {pipeline_mode = #tpu.pipeline_mode<synchronous>, transform_indices = @transform_7, window_bounds = array<i64: 1, 1>}, {pipeline_mode = #tpu.pipeline_mode<synchronous>, transform_indices = @transform_8, window_bounds = array<i64: 9, 256>}, {transform_indices = @transform_9, window_bounds = array<i64: 1, 1, 256>}, {pipeline_mode = #tpu.pipeline_mode<synchronous>, transform_indices = @transform_10, window_bounds = array<i64: 32, 256>}, {pipeline_mode = #tpu.pipeline_mode<synchronous>, transform_indices = @transform_11, window_bounds = array<i64: 32, 256>}, {pipeline_mode = #tpu.pipeline_mode<synchronous>, transform_indices = @transform_12, window_bounds = array<i64: 32, 256>}, {pipeline_mode = #tpu.pipeline_mode<synchronous>, transform_indices = @transform_13, window_bounds = array<i64: 32, 256>}]} {
    %c0_i32 = arith.constant 0 : i32
    %0 = arith.cmpi eq, %arg0, %c0_i32 : i32
    %1 = arith.extui %0 : i1 to i32
    %c0_i32_0 = arith.constant 0 : i32
    %2 = arith.cmpi ne, %1, %c0_i32_0 : i32
    scf.if %2 {
      %cst_188 = arith.constant 0.000000e+00 : f32
      %266 = vector.broadcast %cst_188 : f32 to vector<32x256xf32>
      %c0_189 = arith.constant 0 : index
      %c0_190 = arith.constant 0 : index
      %267 = vector.load %arg11[%c0_189, %c0_190] : memref<32x256xf32, #tpu.memory_space<vmem>>, vector<32x256xf32>
      tpu.vector_store %arg11[%c0_189, %c0_190], %266 {strides = array<i32>} : memref<32x256xf32, #tpu.memory_space<vmem>>, vector<32x256xf32>,
      %cst_191 = arith.constant 0.000000e+00 : f32
      %268 = vector.broadcast %cst_191 : f32 to vector<32x256xf32>
      %c0_192 = arith.constant 0 : index
      %c0_193 = arith.constant 0 : index
      %269 = vector.load %arg13[%c0_192, %c0_193] : memref<32x256xf32, #tpu.memory_space<vmem>>, vector<32x256xf32>
      tpu.vector_store %arg13[%c0_192, %c0_193], %268 {strides = array<i32>} : memref<32x256xf32, #tpu.memory_space<vmem>>, vector<32x256xf32>,
      %cst_194 = arith.constant 0.000000e+00 : f32
      %270 = vector.broadcast %cst_194 : f32 to vector<32x256xf32>
      %c0_195 = arith.constant 0 : index
      %c0_196 = arith.constant 0 : index
      %271 = vector.load %arg12[%c0_195, %c0_196] : memref<32x256xf32, #tpu.memory_space<vmem>>, vector<32x256xf32>
      tpu.vector_store %arg12[%c0_195, %c0_196], %270 {strides = array<i32>} : memref<32x256xf32, #tpu.memory_space<vmem>>, vector<32x256xf32>,
      %cst_197 = arith.constant 0.000000e+00 : f32
      %272 = vector.broadcast %cst_197 : f32 to vector<32x256xf32>
      %c0_198 = arith.constant 0 : index
      %c0_199 = arith.constant 0 : index
      %273 = vector.load %arg14[%c0_198, %c0_199] : memref<32x256xf32, #tpu.memory_space<vmem>>, vector<32x256xf32>
      tpu.vector_store %arg14[%c0_198, %c0_199], %272 {strides = array<i32>} : memref<32x256xf32, #tpu.memory_space<vmem>>, vector<32x256xf32>,
    } else {
    }
    %c0 = arith.constant 0 : index
    %c0_1 = arith.constant 0 : index
    %3 = vector.load %arg11[%c0, %c0_1] : memref<32x256xf32, #tpu.memory_space<vmem>>, vector<32x256xf32>
    %c0_2 = arith.constant 0 : index
    %c0_3 = arith.constant 0 : index
    %4 = vector.load %arg13[%c0_2, %c0_3] : memref<32x256xf32, #tpu.memory_space<vmem>>, vector<32x256xf32>
    %c0_4 = arith.constant 0 : index
    %c0_5 = arith.constant 0 : index
    %5 = vector.load %arg9[%c0_4, %c0_5] : memref<9x256xf32, #tpu.memory_space<vmem>>, vector<1x256xf32>
    %c17_i32 = arith.constant 17 : i32
    %6 = tpu.dynamic_rotate %3 by %c17_i32 dim 1 : vector<32x256xf32>, i32 -> vector<32x256xf32>
    %7 = vector.broadcast %5 : vector<1x256xf32> to vector<32x256xf32>
    %8 = arith.mulf %6, %7 : vector<32x256xf32>
    %c0_6 = arith.constant 0 : index
    %c0_7 = arith.constant 0 : index
    %9 = vector.load %arg15[%c0_6, %c0_7] : memref<288x256xf32, #tpu.memory_space<vmem>>, vector<32x256xf32>
    tpu.vector_store %arg15[%c0_6, %c0_7], %8 {strides = array<i32>} : memref<288x256xf32, #tpu.memory_space<vmem>>, vector<32x256xf32>,
    %c1 = arith.constant 1 : index
    %c0_8 = arith.constant 0 : index
    %10 = vector.load %arg9[%c1, %c0_8] : memref<9x256xf32, #tpu.memory_space<vmem>>, vector<1x256xf32>
    %c16_i32 = arith.constant 16 : i32
    %11 = tpu.dynamic_rotate %3 by %c16_i32 dim 1 : vector<32x256xf32>, i32 -> vector<32x256xf32>
    %12 = vector.broadcast %10 : vector<1x256xf32> to vector<32x256xf32>
    %13 = arith.mulf %11, %12 : vector<32x256xf32>
    %c32 = arith.constant 32 : index
    %c0_9 = arith.constant 0 : index
    %14 = vector.load %arg15[%c32, %c0_9] : memref<288x256xf32, #tpu.memory_space<vmem>>, vector<32x256xf32>
    tpu.vector_store %arg15[%c32, %c0_9], %13 {strides = array<i32>} : memref<288x256xf32, #tpu.memory_space<vmem>>, vector<32x256xf32>,
    %c2 = arith.constant 2 : index
    %c0_10 = arith.constant 0 : index
    %15 = vector.load %arg9[%c2, %c0_10] : memref<9x256xf32, #tpu.memory_space<vmem>>, vector<1x256xf32>
    %c15_i32 = arith.constant 15 : i32
    %16 = tpu.dynamic_rotate %3 by %c15_i32 dim 1 : vector<32x256xf32>, i32 -> vector<32x256xf32>
    %17 = vector.broadcast %15 : vector<1x256xf32> to vector<32x256xf32>
    %18 = arith.mulf %16, %17 : vector<32x256xf32>
    %c64 = arith.constant 64 : index
    %c0_11 = arith.constant 0 : index
    %19 = vector.load %arg15[%c64, %c0_11] : memref<288x256xf32, #tpu.memory_space<vmem>>, vector<32x256xf32>
    tpu.vector_store %arg15[%c64, %c0_11], %18 {strides = array<i32>} : memref<288x256xf32, #tpu.memory_space<vmem>>, vector<32x256xf32>,
    %c3 = arith.constant 3 : index
    %c0_12 = arith.constant 0 : index
    %20 = vector.load %arg9[%c3, %c0_12] : memref<9x256xf32, #tpu.memory_space<vmem>>, vector<1x256xf32>
    %c1_i32 = arith.constant 1 : i32
    %21 = tpu.dynamic_rotate %3 by %c1_i32 dim 1 : vector<32x256xf32>, i32 -> vector<32x256xf32>
    %22 = vector.broadcast %20 : vector<1x256xf32> to vector<32x256xf32>
    %23 = arith.mulf %21, %22 : vector<32x256xf32>
    %c96 = arith.constant 96 : index
    %c0_13 = arith.constant 0 : index
    %24 = vector.load %arg15[%c96, %c0_13] : memref<288x256xf32, #tpu.memory_space<vmem>>, vector<32x256xf32>
    tpu.vector_store %arg15[%c96, %c0_13], %23 {strides = array<i32>} : memref<288x256xf32, #tpu.memory_space<vmem>>, vector<32x256xf32>,
    %c4 = arith.constant 4 : index
    %c0_14 = arith.constant 0 : index
    %25 = vector.load %arg9[%c4, %c0_14] : memref<9x256xf32, #tpu.memory_space<vmem>>, vector<1x256xf32>
    %26 = vector.broadcast %25 : vector<1x256xf32> to vector<32x256xf32>
    %27 = arith.mulf %3, %26 : vector<32x256xf32>
    %c128 = arith.constant 128 : index
    %c0_15 = arith.constant 0 : index
    %28 = vector.load %arg15[%c128, %c0_15] : memref<288x256xf32, #tpu.memory_space<vmem>>, vector<32x256xf32>
    tpu.vector_store %arg15[%c128, %c0_15], %27 {strides = array<i32>} : memref<288x256xf32, #tpu.memory_space<vmem>>, vector<32x256xf32>,
    %c5 = arith.constant 5 : index
    %c0_16 = arith.constant 0 : index
    %29 = vector.load %arg9[%c5, %c0_16] : memref<9x256xf32, #tpu.memory_space<vmem>>, vector<1x256xf32>
    %c255_i32 = arith.constant 255 : i32
    %30 = tpu.dynamic_rotate %3 by %c255_i32 dim 1 : vector<32x256xf32>, i32 -> vector<32x256xf32>
    %31 = vector.broadcast %29 : vector<1x256xf32> to vector<32x256xf32>
    %32 = arith.mulf %30, %31 : vector<32x256xf32>
    %c160 = arith.constant 160 : index
    %c0_17 = arith.constant 0 : index
    %33 = vector.load %arg15[%c160, %c0_17] : memref<288x256xf32, #tpu.memory_space<vmem>>, vector<32x256xf32>
    tpu.vector_store %arg15[%c160, %c0_17], %32 {strides = array<i32>} : memref<288x256xf32, #tpu.memory_space<vmem>>, vector<32x256xf32>,
    %c6 = arith.constant 6 : index
    %c0_18 = arith.constant 0 : index
    %34 = vector.load %arg9[%c6, %c0_18] : memref<9x256xf32, #tpu.memory_space<vmem>>, vector<1x256xf32>
    %c241_i32 = arith.constant 241 : i32
    %35 = tpu.dynamic_rotate %3 by %c241_i32 dim 1 : vector<32x256xf32>, i32 -> vector<32x256xf32>
    %36 = vector.broadcast %34 : vector<1x256xf32> to vector<32x256xf32>
    %37 = arith.mulf %35, %36 : vector<32x256xf32>
    %c192 = arith.constant 192 : index
    %c0_19 = arith.constant 0 : index
    %38 = vector.load %arg15[%c192, %c0_19] : memref<288x256xf32, #tpu.memory_space<vmem>>, vector<32x256xf32>
    tpu.vector_store %arg15[%c192, %c0_19], %37 {strides = array<i32>} : memref<288x256xf32, #tpu.memory_space<vmem>>, vector<32x256xf32>,
    %c7 = arith.constant 7 : index
    %c0_20 = arith.constant 0 : index
    %39 = vector.load %arg9[%c7, %c0_20] : memref<9x256xf32, #tpu.memory_space<vmem>>, vector<1x256xf32>
    %c240_i32 = arith.constant 240 : i32
    %40 = tpu.dynamic_rotate %3 by %c240_i32 dim 1 : vector<32x256xf32>, i32 -> vector<32x256xf32>
    %41 = vector.broadcast %39 : vector<1x256xf32> to vector<32x256xf32>
    %42 = arith.mulf %40, %41 : vector<32x256xf32>
    %c224 = arith.constant 224 : index
    %c0_21 = arith.constant 0 : index
    %43 = vector.load %arg15[%c224, %c0_21] : memref<288x256xf32, #tpu.memory_space<vmem>>, vector<32x256xf32>
    tpu.vector_store %arg15[%c224, %c0_21], %42 {strides = array<i32>} : memref<288x256xf32, #tpu.memory_space<vmem>>, vector<32x256xf32>,
    %c8 = arith.constant 8 : index
    %c0_22 = arith.constant 0 : index
    %44 = vector.load %arg9[%c8, %c0_22] : memref<9x256xf32, #tpu.memory_space<vmem>>, vector<1x256xf32>
    %c239_i32 = arith.constant 239 : i32
    %45 = tpu.dynamic_rotate %3 by %c239_i32 dim 1 : vector<32x256xf32>, i32 -> vector<32x256xf32>
    %46 = vector.broadcast %44 : vector<1x256xf32> to vector<32x256xf32>
    %47 = arith.mulf %45, %46 : vector<32x256xf32>
    %c256 = arith.constant 256 : index
    %c0_23 = arith.constant 0 : index
    %48 = vector.load %arg15[%c256, %c0_23] : memref<288x256xf32, #tpu.memory_space<vmem>>, vector<32x256xf32>
    tpu.vector_store %arg15[%c256, %c0_23], %47 {strides = array<i32>} : memref<288x256xf32, #tpu.memory_space<vmem>>, vector<32x256xf32>,
    %c0_24 = arith.constant 0 : index
    %c0_25 = arith.constant 0 : index
    %49 = vector.load %arg2[%c0_24, %c0_25] : memref<128x40xf32, #tpu.memory_space<vmem>>, vector<128x40xf32>
    %c0_26 = arith.constant 0 : index
    %c0_27 = arith.constant 0 : index
    %c0_28 = arith.constant 0 : index
    %50 = vector.load %arg1[%c0_26, %c0_27, %c0_28] : memref<1x40x256xf32, #tpu.memory_space<vmem>>, vector<1x40x256xf32>
    %51 = vector.shape_cast %50 : vector<1x40x256xf32> to vector<40x256xf32>
    %cst = arith.constant dense<0.000000e+00> : vector<128x256xf32>
    %52 = tpu.matmul %49, %51, %cst {dimension_numbers = #tpu.dot_dimension_numbers<[1], [0], [0], [1], [0, 0, 1, 1], [], []>} : vector<128x40xf32>, vector<40x256xf32>, vector<128x256xf32> -> vector<128x256xf32>
    %c0_29 = arith.constant 0 : index
    %c0_30 = arith.constant 0 : index
    %53 = vector.load %arg3[%c0_29, %c0_30] : memref<128x288xf32, #tpu.memory_space<vmem>>, vector<128x288xf32>
    %c0_31 = arith.constant 0 : index
    %c0_32 = arith.constant 0 : index
    %54 = vector.load %arg15[%c0_31, %c0_32] : memref<288x256xf32, #tpu.memory_space<vmem>>, vector<288x256xf32>
    %cst_33 = arith.constant dense<0.000000e+00> : vector<128x256xf32>
    %55 = tpu.matmul %53, %54, %cst_33 {dimension_numbers = #tpu.dot_dimension_numbers<[1], [0], [0], [1], [0, 0, 1, 1], [], []>} : vector<128x288xf32>, vector<288x256xf32>, vector<128x256xf32> -> vector<128x256xf32>
    %56 = arith.addf %52, %55 : vector<128x256xf32>
    %c0_34 = arith.constant 0 : index
    %c0_35 = arith.constant 0 : index
    %57 = vector.load %arg5[%c0_34, %c0_35] : memref<128x1xf32, #tpu.memory_space<vmem>>, vector<128x1xf32>
    %58 = vector.broadcast %57 : vector<128x1xf32> to vector<128x256xf32>
    %59 = arith.addf %56, %58 : vector<128x256xf32>
    %60 = vector.extract_strided_slice %59 {offsets = [0, 0], sizes = [32, 256], strides = [1, 1]} : vector<128x256xf32> to vector<32x256xf32>
    %cst_36 = arith.constant 5.000000e-01 : f32
    %61 = vector.broadcast %cst_36 : f32 to vector<32x256xf32>
    %62 = arith.mulf %61, %60 : vector<32x256xf32>
    %63 = math.tanh %62 : vector<32x256xf32>
    %cst_37 = arith.constant 5.000000e-01 : f32
    %64 = vector.broadcast %cst_37 : f32 to vector<32x256xf32>
    %65 = arith.mulf %64, %63 : vector<32x256xf32>
    %cst_38 = arith.constant 5.000000e-01 : f32
    %66 = vector.broadcast %cst_38 : f32 to vector<32x256xf32>
    %67 = arith.addf %65, %66 : vector<32x256xf32>
    %68 = vector.extract_strided_slice %59 {offsets = [32, 0], sizes = [32, 256], strides = [1, 1]} : vector<128x256xf32> to vector<32x256xf32>
    %cst_39 = arith.constant 5.000000e-01 : f32
    %69 = vector.broadcast %cst_39 : f32 to vector<32x256xf32>
    %70 = arith.mulf %69, %68 : vector<32x256xf32>
    %71 = math.tanh %70 : vector<32x256xf32>
    %cst_40 = arith.constant 5.000000e-01 : f32
    %72 = vector.broadcast %cst_40 : f32 to vector<32x256xf32>
    %73 = arith.mulf %72, %71 : vector<32x256xf32>
    %cst_41 = arith.constant 5.000000e-01 : f32
    %74 = vector.broadcast %cst_41 : f32 to vector<32x256xf32>
    %75 = arith.addf %73, %74 : vector<32x256xf32>
    %76 = vector.extract_strided_slice %59 {offsets = [64, 0], sizes = [32, 256], strides = [1, 1]} : vector<128x256xf32> to vector<32x256xf32>
    %cst_42 = arith.constant 5.000000e-01 : f32
    %77 = vector.broadcast %cst_42 : f32 to vector<32x256xf32>
    %78 = arith.mulf %77, %76 : vector<32x256xf32>
    %79 = math.tanh %78 : vector<32x256xf32>
    %cst_43 = arith.constant 5.000000e-01 : f32
    %80 = vector.broadcast %cst_43 : f32 to vector<32x256xf32>
    %81 = arith.mulf %80, %79 : vector<32x256xf32>
    %cst_44 = arith.constant 5.000000e-01 : f32
    %82 = vector.broadcast %cst_44 : f32 to vector<32x256xf32>
    %83 = arith.addf %81, %82 : vector<32x256xf32>
    %84 = vector.extract_strided_slice %59 {offsets = [96, 0], sizes = [32, 256], strides = [1, 1]} : vector<128x256xf32> to vector<32x256xf32>
    %85 = math.tanh %84 : vector<32x256xf32>
    %86 = arith.mulf %75, %4 : vector<32x256xf32>
    %87 = arith.mulf %67, %85 : vector<32x256xf32>
    %88 = arith.addf %86, %87 : vector<32x256xf32>
    %89 = math.tanh %88 : vector<32x256xf32>
    %90 = arith.mulf %83, %89 : vector<32x256xf32>
    %c0_45 = arith.constant 0 : index
    %c0_46 = arith.constant 0 : index
    %91 = vector.load %arg13[%c0_45, %c0_46] : memref<32x256xf32, #tpu.memory_space<vmem>>, vector<32x256xf32>
    tpu.vector_store %arg13[%c0_45, %c0_46], %88 {strides = array<i32>} : memref<32x256xf32, #tpu.memory_space<vmem>>, vector<32x256xf32>,
    %c0_47 = arith.constant 0 : index
    %c0_48 = arith.constant 0 : index
    %92 = vector.load %arg11[%c0_47, %c0_48] : memref<32x256xf32, #tpu.memory_space<vmem>>, vector<32x256xf32>
    tpu.vector_store %arg11[%c0_47, %c0_48], %90 {strides = array<i32>} : memref<32x256xf32, #tpu.memory_space<vmem>>, vector<32x256xf32>,
    %c0_49 = arith.constant 0 : index
    %c0_50 = arith.constant 0 : index
    %93 = vector.load %arg12[%c0_49, %c0_50] : memref<32x256xf32, #tpu.memory_space<vmem>>, vector<32x256xf32>
    %c0_51 = arith.constant 0 : index
    %c0_52 = arith.constant 0 : index
    %94 = vector.load %arg14[%c0_51, %c0_52] : memref<32x256xf32, #tpu.memory_space<vmem>>, vector<32x256xf32>
    %c0_53 = arith.constant 0 : index
    %c0_54 = arith.constant 0 : index
    %95 = vector.load %arg9[%c0_53, %c0_54] : memref<9x256xf32, #tpu.memory_space<vmem>>, vector<1x256xf32>
    %c17_i32_55 = arith.constant 17 : i32
    %96 = tpu.dynamic_rotate %90 by %c17_i32_55 dim 1 : vector<32x256xf32>, i32 -> vector<32x256xf32>
    %97 = vector.broadcast %95 : vector<1x256xf32> to vector<32x256xf32>
    %98 = arith.mulf %96, %97 : vector<32x256xf32>
    %c0_56 = arith.constant 0 : index
    %c0_57 = arith.constant 0 : index
    %99 = vector.load %arg16[%c0_56, %c0_57] : memref<576x256xf32, #tpu.memory_space<vmem>>, vector<32x256xf32>
    tpu.vector_store %arg16[%c0_56, %c0_57], %98 {strides = array<i32>} : memref<576x256xf32, #tpu.memory_space<vmem>>, vector<32x256xf32>,
    %c17_i32_58 = arith.constant 17 : i32
    %100 = tpu.dynamic_rotate %93 by %c17_i32_58 dim 1 : vector<32x256xf32>, i32 -> vector<32x256xf32>
    %101 = vector.broadcast %95 : vector<1x256xf32> to vector<32x256xf32>
    %102 = arith.mulf %100, %101 : vector<32x256xf32>
    %c32_59 = arith.constant 32 : index
    %c0_60 = arith.constant 0 : index
    %103 = vector.load %arg16[%c32_59, %c0_60] : memref<576x256xf32, #tpu.memory_space<vmem>>, vector<32x256xf32>
    tpu.vector_store %arg16[%c32_59, %c0_60], %102 {strides = array<i32>} : memref<576x256xf32, #tpu.memory_space<vmem>>, vector<32x256xf32>,
    %c1_61 = arith.constant 1 : index
    %c0_62 = arith.constant 0 : index
    %104 = vector.load %arg9[%c1_61, %c0_62] : memref<9x256xf32, #tpu.memory_space<vmem>>, vector<1x256xf32>
    %c16_i32_63 = arith.constant 16 : i32
    %105 = tpu.dynamic_rotate %90 by %c16_i32_63 dim 1 : vector<32x256xf32>, i32 -> vector<32x256xf32>
    %106 = vector.broadcast %104 : vector<1x256xf32> to vector<32x256xf32>
    %107 = arith.mulf %105, %106 : vector<32x256xf32>
    %c64_64 = arith.constant 64 : index
    %c0_65 = arith.constant 0 : index
    %108 = vector.load %arg16[%c64_64, %c0_65] : memref<576x256xf32, #tpu.memory_space<vmem>>, vector<32x256xf32>
    tpu.vector_store %arg16[%c64_64, %c0_65], %107 {strides = array<i32>} : memref<576x256xf32, #tpu.memory_space<vmem>>, vector<32x256xf32>,
    %c16_i32_66 = arith.constant 16 : i32
    %109 = tpu.dynamic_rotate %93 by %c16_i32_66 dim 1 : vector<32x256xf32>, i32 -> vector<32x256xf32>
    %110 = vector.broadcast %104 : vector<1x256xf32> to vector<32x256xf32>
    %111 = arith.mulf %109, %110 : vector<32x256xf32>
    %c96_67 = arith.constant 96 : index
    %c0_68 = arith.constant 0 : index
    %112 = vector.load %arg16[%c96_67, %c0_68] : memref<576x256xf32, #tpu.memory_space<vmem>>, vector<32x256xf32>
    tpu.vector_store %arg16[%c96_67, %c0_68], %111 {strides = array<i32>} : memref<576x256xf32, #tpu.memory_space<vmem>>, vector<32x256xf32>,
    %c2_69 = arith.constant 2 : index
    %c0_70 = arith.constant 0 : index
    %113 = vector.load %arg9[%c2_69, %c0_70] : memref<9x256xf32, #tpu.memory_space<vmem>>, vector<1x256xf32>
    %c15_i32_71 = arith.constant 15 : i32
    %114 = tpu.dynamic_rotate %90 by %c15_i32_71 dim 1 : vector<32x256xf32>, i32 -> vector<32x256xf32>
    %115 = vector.broadcast %113 : vector<1x256xf32> to vector<32x256xf32>
    %116 = arith.mulf %114, %115 : vector<32x256xf32>
    %c128_72 = arith.constant 128 : index
    %c0_73 = arith.constant 0 : index
    %117 = vector.load %arg16[%c128_72, %c0_73] : memref<576x256xf32, #tpu.memory_space<vmem>>, vector<32x256xf32>
    tpu.vector_store %arg16[%c128_72, %c0_73], %116 {strides = array<i32>} : memref<576x256xf32, #tpu.memory_space<vmem>>, vector<32x256xf32>,
    %c15_i32_74 = arith.constant 15 : i32
    %118 = tpu.dynamic_rotate %93 by %c15_i32_74 dim 1 : vector<32x256xf32>, i32 -> vector<32x256xf32>
    %119 = vector.broadcast %113 : vector<1x256xf32> to vector<32x256xf32>
    %120 = arith.mulf %118, %119 : vector<32x256xf32>
    %c160_75 = arith.constant 160 : index
    %c0_76 = arith.constant 0 : index
    %121 = vector.load %arg16[%c160_75, %c0_76] : memref<576x256xf32, #tpu.memory_space<vmem>>, vector<32x256xf32>
    tpu.vector_store %arg16[%c160_75, %c0_76], %120 {strides = array<i32>} : memref<576x256xf32, #tpu.memory_space<vmem>>, vector<32x256xf32>,
    %c3_77 = arith.constant 3 : index
    %c0_78 = arith.constant 0 : index
    %122 = vector.load %arg9[%c3_77, %c0_78] : memref<9x256xf32, #tpu.memory_space<vmem>>, vector<1x256xf32>
    %c1_i32_79 = arith.constant 1 : i32
    %123 = tpu.dynamic_rotate %90 by %c1_i32_79 dim 1 : vector<32x256xf32>, i32 -> vector<32x256xf32>
    %124 = vector.broadcast %122 : vector<1x256xf32> to vector<32x256xf32>
    %125 = arith.mulf %123, %124 : vector<32x256xf32>
    %c192_80 = arith.constant 192 : index
    %c0_81 = arith.constant 0 : index
    %126 = vector.load %arg16[%c192_80, %c0_81] : memref<576x256xf32, #tpu.memory_space<vmem>>, vector<32x256xf32>
    tpu.vector_store %arg16[%c192_80, %c0_81], %125 {strides = array<i32>} : memref<576x256xf32, #tpu.memory_space<vmem>>, vector<32x256xf32>,
    %c1_i32_82 = arith.constant 1 : i32
    %127 = tpu.dynamic_rotate %93 by %c1_i32_82 dim 1 : vector<32x256xf32>, i32 -> vector<32x256xf32>
    %128 = vector.broadcast %122 : vector<1x256xf32> to vector<32x256xf32>
    %129 = arith.mulf %127, %128 : vector<32x256xf32>
    %c224_83 = arith.constant 224 : index
    %c0_84 = arith.constant 0 : index
    %130 = vector.load %arg16[%c224_83, %c0_84] : memref<576x256xf32, #tpu.memory_space<vmem>>, vector<32x256xf32>
    tpu.vector_store %arg16[%c224_83, %c0_84], %129 {strides = array<i32>} : memref<576x256xf32, #tpu.memory_space<vmem>>, vector<32x256xf32>,
    %c4_85 = arith.constant 4 : index
    %c0_86 = arith.constant 0 : index
    %131 = vector.load %arg9[%c4_85, %c0_86] : memref<9x256xf32, #tpu.memory_space<vmem>>, vector<1x256xf32>
    %132 = vector.broadcast %131 : vector<1x256xf32> to vector<32x256xf32>
    %133 = arith.mulf %90, %132 : vector<32x256xf32>
    %c256_87 = arith.constant 256 : index
    %c0_88 = arith.constant 0 : index
    %134 = vector.load %arg16[%c256_87, %c0_88] : memref<576x256xf32, #tpu.memory_space<vmem>>, vector<32x256xf32>
    tpu.vector_store %arg16[%c256_87, %c0_88], %133 {strides = array<i32>} : memref<576x256xf32, #tpu.memory_space<vmem>>, vector<32x256xf32>,
    %135 = vector.broadcast %131 : vector<1x256xf32> to vector<32x256xf32>
    %136 = arith.mulf %93, %135 : vector<32x256xf32>
    %c288 = arith.constant 288 : index
    %c0_89 = arith.constant 0 : index
    %137 = vector.load %arg16[%c288, %c0_89] : memref<576x256xf32, #tpu.memory_space<vmem>>, vector<32x256xf32>
    tpu.vector_store %arg16[%c288, %c0_89], %136 {strides = array<i32>} : memref<576x256xf32, #tpu.memory_space<vmem>>, vector<32x256xf32>,
    %c5_90 = arith.constant 5 : index
    %c0_91 = arith.constant 0 : index
    %138 = vector.load %arg9[%c5_90, %c0_91] : memref<9x256xf32, #tpu.memory_space<vmem>>, vector<1x256xf32>
    %c255_i32_92 = arith.constant 255 : i32
    %139 = tpu.dynamic_rotate %90 by %c255_i32_92 dim 1 : vector<32x256xf32>, i32 -> vector<32x256xf32>
    %140 = vector.broadcast %138 : vector<1x256xf32> to vector<32x256xf32>
    %141 = arith.mulf %139, %140 : vector<32x256xf32>
    %c320 = arith.constant 320 : index
    %c0_93 = arith.constant 0 : index
    %142 = vector.load %arg16[%c320, %c0_93] : memref<576x256xf32, #tpu.memory_space<vmem>>, vector<32x256xf32>
    tpu.vector_store %arg16[%c320, %c0_93], %141 {strides = array<i32>} : memref<576x256xf32, #tpu.memory_space<vmem>>, vector<32x256xf32>,
    %c255_i32_94 = arith.constant 255 : i32
    %143 = tpu.dynamic_rotate %93 by %c255_i32_94 dim 1 : vector<32x256xf32>, i32 -> vector<32x256xf32>
    %144 = vector.broadcast %138 : vector<1x256xf32> to vector<32x256xf32>
    %145 = arith.mulf %143, %144 : vector<32x256xf32>
    %c352 = arith.constant 352 : index
    %c0_95 = arith.constant 0 : index
    %146 = vector.load %arg16[%c352, %c0_95] : memref<576x256xf32, #tpu.memory_space<vmem>>, vector<32x256xf32>
    tpu.vector_store %arg16[%c352, %c0_95], %145 {strides = array<i32>} : memref<576x256xf32, #tpu.memory_space<vmem>>, vector<32x256xf32>,
    %c6_96 = arith.constant 6 : index
    %c0_97 = arith.constant 0 : index
    %147 = vector.load %arg9[%c6_96, %c0_97] : memref<9x256xf32, #tpu.memory_space<vmem>>, vector<1x256xf32>
    %c241_i32_98 = arith.constant 241 : i32
    %148 = tpu.dynamic_rotate %90 by %c241_i32_98 dim 1 : vector<32x256xf32>, i32 -> vector<32x256xf32>
    %149 = vector.broadcast %147 : vector<1x256xf32> to vector<32x256xf32>
    %150 = arith.mulf %148, %149 : vector<32x256xf32>
    %c384 = arith.constant 384 : index
    %c0_99 = arith.constant 0 : index
    %151 = vector.load %arg16[%c384, %c0_99] : memref<576x256xf32, #tpu.memory_space<vmem>>, vector<32x256xf32>
    tpu.vector_store %arg16[%c384, %c0_99], %150 {strides = array<i32>} : memref<576x256xf32, #tpu.memory_space<vmem>>, vector<32x256xf32>,
    %c241_i32_100 = arith.constant 241 : i32
    %152 = tpu.dynamic_rotate %93 by %c241_i32_100 dim 1 : vector<32x256xf32>, i32 -> vector<32x256xf32>
    %153 = vector.broadcast %147 : vector<1x256xf32> to vector<32x256xf32>
    %154 = arith.mulf %152, %153 : vector<32x256xf32>
    %c416 = arith.constant 416 : index
    %c0_101 = arith.constant 0 : index
    %155 = vector.load %arg16[%c416, %c0_101] : memref<576x256xf32, #tpu.memory_space<vmem>>, vector<32x256xf32>
    tpu.vector_store %arg16[%c416, %c0_101], %154 {strides = array<i32>} : memref<576x256xf32, #tpu.memory_space<vmem>>, vector<32x256xf32>,
    %c7_102 = arith.constant 7 : index
    %c0_103 = arith.constant 0 : index
    %156 = vector.load %arg9[%c7_102, %c0_103] : memref<9x256xf32, #tpu.memory_space<vmem>>, vector<1x256xf32>
    %c240_i32_104 = arith.constant 240 : i32
    %157 = tpu.dynamic_rotate %90 by %c240_i32_104 dim 1 : vector<32x256xf32>, i32 -> vector<32x256xf32>
    %158 = vector.broadcast %156 : vector<1x256xf32> to vector<32x256xf32>
    %159 = arith.mulf %157, %158 : vector<32x256xf32>
    %c448 = arith.constant 448 : index
    %c0_105 = arith.constant 0 : index
    %160 = vector.load %arg16[%c448, %c0_105] : memref<576x256xf32, #tpu.memory_space<vmem>>, vector<32x256xf32>
    tpu.vector_store %arg16[%c448, %c0_105], %159 {strides = array<i32>} : memref<576x256xf32, #tpu.memory_space<vmem>>, vector<32x256xf32>,
    %c240_i32_106 = arith.constant 240 : i32
    %161 = tpu.dynamic_rotate %93 by %c240_i32_106 dim 1 : vector<32x256xf32>, i32 -> vector<32x256xf32>
    %162 = vector.broadcast %156 : vector<1x256xf32> to vector<32x256xf32>
    %163 = arith.mulf %161, %162 : vector<32x256xf32>
    %c480 = arith.constant 480 : index
    %c0_107 = arith.constant 0 : index
    %164 = vector.load %arg16[%c480, %c0_107] : memref<576x256xf32, #tpu.memory_space<vmem>>, vector<32x256xf32>
    tpu.vector_store %arg16[%c480, %c0_107], %163 {strides = array<i32>} : memref<576x256xf32, #tpu.memory_space<vmem>>, vector<32x256xf32>,
    %c8_108 = arith.constant 8 : index
    %c0_109 = arith.constant 0 : index
    %165 = vector.load %arg9[%c8_108, %c0_109] : memref<9x256xf32, #tpu.memory_space<vmem>>, vector<1x256xf32>
    %c239_i32_110 = arith.constant 239 : i32
    %166 = tpu.dynamic_rotate %90 by %c239_i32_110 dim 1 : vector<32x256xf32>, i32 -> vector<32x256xf32>
    %167 = vector.broadcast %165 : vector<1x256xf32> to vector<32x256xf32>
    %168 = arith.mulf %166, %167 : vector<32x256xf32>
    %c512 = arith.constant 512 : index
    %c0_111 = arith.constant 0 : index
    %169 = vector.load %arg16[%c512, %c0_111] : memref<576x256xf32, #tpu.memory_space<vmem>>, vector<32x256xf32>
    tpu.vector_store %arg16[%c512, %c0_111], %168 {strides = array<i32>} : memref<576x256xf32, #tpu.memory_space<vmem>>, vector<32x256xf32>,
    %c239_i32_112 = arith.constant 239 : i32
    %170 = tpu.dynamic_rotate %93 by %c239_i32_112 dim 1 : vector<32x256xf32>, i32 -> vector<32x256xf32>
    %171 = vector.broadcast %165 : vector<1x256xf32> to vector<32x256xf32>
    %172 = arith.mulf %170, %171 : vector<32x256xf32>
    %c544 = arith.constant 544 : index
    %c0_113 = arith.constant 0 : index
    %173 = vector.load %arg16[%c544, %c0_113] : memref<576x256xf32, #tpu.memory_space<vmem>>, vector<32x256xf32>
    tpu.vector_store %arg16[%c544, %c0_113], %172 {strides = array<i32>} : memref<576x256xf32, #tpu.memory_space<vmem>>, vector<32x256xf32>,
    %c0_114 = arith.constant 0 : index
    %c0_115 = arith.constant 0 : index
    %174 = vector.load %arg4[%c0_114, %c0_115] : memref<128x576xf32, #tpu.memory_space<vmem>>, vector<128x576xf32>
    %c0_116 = arith.constant 0 : index
    %c0_117 = arith.constant 0 : index
    %175 = vector.load %arg16[%c0_116, %c0_117] : memref<576x256xf32, #tpu.memory_space<vmem>>, vector<576x256xf32>
    %cst_118 = arith.constant dense<0.000000e+00> : vector<128x256xf32>
    %176 = tpu.matmul %174, %175, %cst_118 {dimension_numbers = #tpu.dot_dimension_numbers<[1], [0], [0], [1], [0, 0, 1, 1], [], []>} : vector<128x576xf32>, vector<576x256xf32>, vector<128x256xf32> -> vector<128x256xf32>
    %c0_119 = arith.constant 0 : index
    %c0_120 = arith.constant 0 : index
    %177 = vector.load %arg6[%c0_119, %c0_120] : memref<128x1xf32, #tpu.memory_space<vmem>>, vector<128x1xf32>
    %178 = vector.broadcast %177 : vector<128x1xf32> to vector<128x256xf32>
    %179 = arith.addf %176, %178 : vector<128x256xf32>
    %180 = vector.extract_strided_slice %179 {offsets = [0, 0], sizes = [32, 256], strides = [1, 1]} : vector<128x256xf32> to vector<32x256xf32>
    %cst_121 = arith.constant 5.000000e-01 : f32
    %181 = vector.broadcast %cst_121 : f32 to vector<32x256xf32>
    %182 = arith.mulf %181, %180 : vector<32x256xf32>
    %183 = math.tanh %182 : vector<32x256xf32>
    %cst_122 = arith.constant 5.000000e-01 : f32
    %184 = vector.broadcast %cst_122 : f32 to vector<32x256xf32>
    %185 = arith.mulf %184, %183 : vector<32x256xf32>
    %cst_123 = arith.constant 5.000000e-01 : f32
    %186 = vector.broadcast %cst_123 : f32 to vector<32x256xf32>
    %187 = arith.addf %185, %186 : vector<32x256xf32>
    %188 = vector.extract_strided_slice %179 {offsets = [32, 0], sizes = [32, 256], strides = [1, 1]} : vector<128x256xf32> to vector<32x256xf32>
    %cst_124 = arith.constant 5.000000e-01 : f32
    %189 = vector.broadcast %cst_124 : f32 to vector<32x256xf32>
    %190 = arith.mulf %189, %188 : vector<32x256xf32>
    %191 = math.tanh %190 : vector<32x256xf32>
    %cst_125 = arith.constant 5.000000e-01 : f32
    %192 = vector.broadcast %cst_125 : f32 to vector<32x256xf32>
    %193 = arith.mulf %192, %191 : vector<32x256xf32>
    %cst_126 = arith.constant 5.000000e-01 : f32
    %194 = vector.broadcast %cst_126 : f32 to vector<32x256xf32>
    %195 = arith.addf %193, %194 : vector<32x256xf32>
    %196 = vector.extract_strided_slice %179 {offsets = [64, 0], sizes = [32, 256], strides = [1, 1]} : vector<128x256xf32> to vector<32x256xf32>
    %cst_127 = arith.constant 5.000000e-01 : f32
    %197 = vector.broadcast %cst_127 : f32 to vector<32x256xf32>
    %198 = arith.mulf %197, %196 : vector<32x256xf32>
    %199 = math.tanh %198 : vector<32x256xf32>
    %cst_128 = arith.constant 5.000000e-01 : f32
    %200 = vector.broadcast %cst_128 : f32 to vector<32x256xf32>
    %201 = arith.mulf %200, %199 : vector<32x256xf32>
    %cst_129 = arith.constant 5.000000e-01 : f32
    %202 = vector.broadcast %cst_129 : f32 to vector<32x256xf32>
    %203 = arith.addf %201, %202 : vector<32x256xf32>
    %204 = vector.extract_strided_slice %179 {offsets = [96, 0], sizes = [32, 256], strides = [1, 1]} : vector<128x256xf32> to vector<32x256xf32>
    %205 = math.tanh %204 : vector<32x256xf32>
    %206 = arith.mulf %195, %94 : vector<32x256xf32>
    %207 = arith.mulf %187, %205 : vector<32x256xf32>
    %208 = arith.addf %206, %207 : vector<32x256xf32>
    %209 = math.tanh %208 : vector<32x256xf32>
    %210 = arith.mulf %203, %209 : vector<32x256xf32>
    %c0_130 = arith.constant 0 : index
    %c0_131 = arith.constant 0 : index
    %211 = vector.load %arg14[%c0_130, %c0_131] : memref<32x256xf32, #tpu.memory_space<vmem>>, vector<32x256xf32>
    tpu.vector_store %arg14[%c0_130, %c0_131], %208 {strides = array<i32>} : memref<32x256xf32, #tpu.memory_space<vmem>>, vector<32x256xf32>,
    %c0_132 = arith.constant 0 : index
    %c0_133 = arith.constant 0 : index
    %212 = vector.load %arg12[%c0_132, %c0_133] : memref<32x256xf32, #tpu.memory_space<vmem>>, vector<32x256xf32>
    tpu.vector_store %arg12[%c0_132, %c0_133], %210 {strides = array<i32>} : memref<32x256xf32, #tpu.memory_space<vmem>>, vector<32x256xf32>,
    %c0_134 = arith.constant 0 : index
    %c0_135 = arith.constant 0 : index
    %213 = vector.load %arg9[%c0_134, %c0_135] : memref<9x256xf32, #tpu.memory_space<vmem>>, vector<1x256xf32>
    %c17_i32_136 = arith.constant 17 : i32
    %214 = tpu.dynamic_rotate %210 by %c17_i32_136 dim 1 : vector<32x256xf32>, i32 -> vector<32x256xf32>
    %215 = vector.broadcast %213 : vector<1x256xf32> to vector<32x256xf32>
    %216 = arith.mulf %214, %215 : vector<32x256xf32>
    %c0_137 = arith.constant 0 : index
    %c0_138 = arith.constant 0 : index
    %217 = vector.load %arg17[%c0_137, %c0_138] : memref<288x256xf32, #tpu.memory_space<vmem>>, vector<32x256xf32>
    tpu.vector_store %arg17[%c0_137, %c0_138], %216 {strides = array<i32>} : memref<288x256xf32, #tpu.memory_space<vmem>>, vector<32x256xf32>,
    %c1_139 = arith.constant 1 : index
    %c0_140 = arith.constant 0 : index
    %218 = vector.load %arg9[%c1_139, %c0_140] : memref<9x256xf32, #tpu.memory_space<vmem>>, vector<1x256xf32>
    %c16_i32_141 = arith.constant 16 : i32
    %219 = tpu.dynamic_rotate %210 by %c16_i32_141 dim 1 : vector<32x256xf32>, i32 -> vector<32x256xf32>
    %220 = vector.broadcast %218 : vector<1x256xf32> to vector<32x256xf32>
    %221 = arith.mulf %219, %220 : vector<32x256xf32>
    %c32_142 = arith.constant 32 : index
    %c0_143 = arith.constant 0 : index
    %222 = vector.load %arg17[%c32_142, %c0_143] : memref<288x256xf32, #tpu.memory_space<vmem>>, vector<32x256xf32>
    tpu.vector_store %arg17[%c32_142, %c0_143], %221 {strides = array<i32>} : memref<288x256xf32, #tpu.memory_space<vmem>>, vector<32x256xf32>,
    %c2_144 = arith.constant 2 : index
    %c0_145 = arith.constant 0 : index
    %223 = vector.load %arg9[%c2_144, %c0_145] : memref<9x256xf32, #tpu.memory_space<vmem>>, vector<1x256xf32>
    %c15_i32_146 = arith.constant 15 : i32
    %224 = tpu.dynamic_rotate %210 by %c15_i32_146 dim 1 : vector<32x256xf32>, i32 -> vector<32x256xf32>
    %225 = vector.broadcast %223 : vector<1x256xf32> to vector<32x256xf32>
    %226 = arith.mulf %224, %225 : vector<32x256xf32>
    %c64_147 = arith.constant 64 : index
    %c0_148 = arith.constant 0 : index
    %227 = vector.load %arg17[%c64_147, %c0_148] : memref<288x256xf32, #tpu.memory_space<vmem>>, vector<32x256xf32>
    tpu.vector_store %arg17[%c64_147, %c0_148], %226 {strides = array<i32>} : memref<288x256xf32, #tpu.memory_space<vmem>>, vector<32x256xf32>,
    %c3_149 = arith.constant 3 : index
    %c0_150 = arith.constant 0 : index
    %228 = vector.load %arg9[%c3_149, %c0_150] : memref<9x256xf32, #tpu.memory_space<vmem>>, vector<1x256xf32>
    %c1_i32_151 = arith.constant 1 : i32
    %229 = tpu.dynamic_rotate %210 by %c1_i32_151 dim 1 : vector<32x256xf32>, i32 -> vector<32x256xf32>
    %230 = vector.broadcast %228 : vector<1x256xf32> to vector<32x256xf32>
    %231 = arith.mulf %229, %230 : vector<32x256xf32>
    %c96_152 = arith.constant 96 : index
    %c0_153 = arith.constant 0 : index
    %232 = vector.load %arg17[%c96_152, %c0_153] : memref<288x256xf32, #tpu.memory_space<vmem>>, vector<32x256xf32>
    tpu.vector_store %arg17[%c96_152, %c0_153], %231 {strides = array<i32>} : memref<288x256xf32, #tpu.memory_space<vmem>>, vector<32x256xf32>,
    %c4_154 = arith.constant 4 : index
    %c0_155 = arith.constant 0 : index
    %233 = vector.load %arg9[%c4_154, %c0_155] : memref<9x256xf32, #tpu.memory_space<vmem>>, vector<1x256xf32>
    %234 = vector.broadcast %233 : vector<1x256xf32> to vector<32x256xf32>
    %235 = arith.mulf %210, %234 : vector<32x256xf32>
    %c128_156 = arith.constant 128 : index
    %c0_157 = arith.constant 0 : index
    %236 = vector.load %arg17[%c128_156, %c0_157] : memref<288x256xf32, #tpu.memory_space<vmem>>, vector<32x256xf32>
    tpu.vector_store %arg17[%c128_156, %c0_157], %235 {strides = array<i32>} : memref<288x256xf32, #tpu.memory_space<vmem>>, vector<32x256xf32>,
    %c5_158 = arith.constant 5 : index
    %c0_159 = arith.constant 0 : index
    %237 = vector.load %arg9[%c5_158, %c0_159] : memref<9x256xf32, #tpu.memory_space<vmem>>, vector<1x256xf32>
    %c255_i32_160 = arith.constant 255 : i32
    %238 = tpu.dynamic_rotate %210 by %c255_i32_160 dim 1 : vector<32x256xf32>, i32 -> vector<32x256xf32>
    %239 = vector.broadcast %237 : vector<1x256xf32> to vector<32x256xf32>
    %240 = arith.mulf %238, %239 : vector<32x256xf32>
    %c160_161 = arith.constant 160 : index
    %c0_162 = arith.constant 0 : index
    %241 = vector.load %arg17[%c160_161, %c0_162] : memref<288x256xf32, #tpu.memory_space<vmem>>, vector<32x256xf32>
    tpu.vector_store %arg17[%c160_161, %c0_162], %240 {strides = array<i32>} : memref<288x256xf32, #tpu.memory_space<vmem>>, vector<32x256xf32>,
    %c6_163 = arith.constant 6 : index
    %c0_164 = arith.constant 0 : index
    %242 = vector.load %arg9[%c6_163, %c0_164] : memref<9x256xf32, #tpu.memory_space<vmem>>, vector<1x256xf32>
    %c241_i32_165 = arith.constant 241 : i32
    %243 = tpu.dynamic_rotate %210 by %c241_i32_165 dim 1 : vector<32x256xf32>, i32 -> vector<32x256xf32>
    %244 = vector.broadcast %242 : vector<1x256xf32> to vector<32x256xf32>
    %245 = arith.mulf %243, %244 : vector<32x256xf32>
    %c192_166 = arith.constant 192 : index
    %c0_167 = arith.constant 0 : index
    %246 = vector.load %arg17[%c192_166, %c0_167] : memref<288x256xf32, #tpu.memory_space<vmem>>, vector<32x256xf32>
    tpu.vector_store %arg17[%c192_166, %c0_167], %245 {strides = array<i32>} : memref<288x256xf32, #tpu.memory_space<vmem>>, vector<32x256xf32>,
    %c7_168 = arith.constant 7 : index
    %c0_169 = arith.constant 0 : index
    %247 = vector.load %arg9[%c7_168, %c0_169] : memref<9x256xf32, #tpu.memory_space<vmem>>, vector<1x256xf32>
    %c240_i32_170 = arith.constant 240 : i32
    %248 = tpu.dynamic_rotate %210 by %c240_i32_170 dim 1 : vector<32x256xf32>, i32 -> vector<32x256xf32>
    %249 = vector.broadcast %247 : vector<1x256xf32> to vector<32x256xf32>
    %250 = arith.mulf %248, %249 : vector<32x256xf32>
    %c224_171 = arith.constant 224 : index
    %c0_172 = arith.constant 0 : index
    %251 = vector.load %arg17[%c224_171, %c0_172] : memref<288x256xf32, #tpu.memory_space<vmem>>, vector<32x256xf32>
    tpu.vector_store %arg17[%c224_171, %c0_172], %250 {strides = array<i32>} : memref<288x256xf32, #tpu.memory_space<vmem>>, vector<32x256xf32>,
    %c8_173 = arith.constant 8 : index
    %c0_174 = arith.constant 0 : index
    %252 = vector.load %arg9[%c8_173, %c0_174] : memref<9x256xf32, #tpu.memory_space<vmem>>, vector<1x256xf32>
    %c239_i32_175 = arith.constant 239 : i32
    %253 = tpu.dynamic_rotate %210 by %c239_i32_175 dim 1 : vector<32x256xf32>, i32 -> vector<32x256xf32>
    %254 = vector.broadcast %252 : vector<1x256xf32> to vector<32x256xf32>
    %255 = arith.mulf %253, %254 : vector<32x256xf32>
    %c256_176 = arith.constant 256 : index
    %c0_177 = arith.constant 0 : index
    %256 = vector.load %arg17[%c256_176, %c0_177] : memref<288x256xf32, #tpu.memory_space<vmem>>, vector<32x256xf32>
    tpu.vector_store %arg17[%c256_176, %c0_177], %255 {strides = array<i32>} : memref<288x256xf32, #tpu.memory_space<vmem>>, vector<32x256xf32>,
    %c0_178 = arith.constant 0 : index
    %c0_179 = arith.constant 0 : index
    %257 = vector.load %arg7[%c0_178, %c0_179] : memref<8x288xf32, #tpu.memory_space<vmem>>, vector<8x288xf32>
    %c0_180 = arith.constant 0 : index
    %c0_181 = arith.constant 0 : index
    %258 = vector.load %arg17[%c0_180, %c0_181] : memref<288x256xf32, #tpu.memory_space<vmem>>, vector<288x256xf32>
    %cst_182 = arith.constant dense<0.000000e+00> : vector<8x256xf32>
    %259 = tpu.matmul %257, %258, %cst_182 {dimension_numbers = #tpu.dot_dimension_numbers<[1], [0], [0], [1], [0, 0, 1, 1], [], []>} : vector<8x288xf32>, vector<288x256xf32>, vector<8x256xf32> -> vector<8x256xf32>
    %c0_183 = arith.constant 0 : index
    %c0_184 = arith.constant 0 : index
    %260 = vector.load %arg8[%c0_183, %c0_184] : memref<1x1xf32, #tpu.memory_space<vmem>>, vector<1x1xf32>
    %261 = vector.broadcast %260 : vector<1x1xf32> to vector<8x256xf32>
    %262 = arith.addf %259, %261 : vector<8x256xf32>
    %263 = vector.extract_strided_slice %262 {offsets = [0, 0], sizes = [1, 256], strides = [1, 1]} : vector<8x256xf32> to vector<1x256xf32>
    %264 = vector.shape_cast %263 : vector<1x256xf32> to vector<1x1x256xf32>
    %c0_185 = arith.constant 0 : index
    %c0_186 = arith.constant 0 : index
    %c0_187 = arith.constant 0 : index
    %265 = vector.load %arg10[%c0_185, %c0_186, %c0_187] : memref<1x1x256xf32, #tpu.memory_space<vmem>>, vector<1x1x256xf32>
    tpu.vector_store %arg10[%c0_185, %c0_186, %c0_187], %264 {strides = array<i32>} : memref<1x1x256xf32, #tpu.memory_space<vmem>>, vector<1x1x256xf32>,
    return
  }
  func.func @transform_0(%arg0: i32) -> (i32, i32, i32) {
    %c0_i32 = arith.constant 0 : i32
    %c0_i32_0 = arith.constant 0 : i32
    %c0_i32_1 = arith.constant 0 : i32
    return %arg0, %c0_i32, %c0_i32_0 : i32, i32, i32
  }
  func.func @transform_1(%arg0: i32) -> (i32, i32) {
    %c0_i32 = arith.constant 0 : i32
    %c0_i32_0 = arith.constant 0 : i32
    %c0_i32_1 = arith.constant 0 : i32
    return %c0_i32, %c0_i32_0 : i32, i32
  }
  func.func @transform_2(%arg0: i32) -> (i32, i32) {
    %c0_i32 = arith.constant 0 : i32
    %c0_i32_0 = arith.constant 0 : i32
    %c0_i32_1 = arith.constant 0 : i32
    return %c0_i32, %c0_i32_0 : i32, i32
  }
  func.func @transform_3(%arg0: i32) -> (i32, i32) {
    %c0_i32 = arith.constant 0 : i32
    %c0_i32_0 = arith.constant 0 : i32
    %c0_i32_1 = arith.constant 0 : i32
    return %c0_i32, %c0_i32_0 : i32, i32
  }
  func.func @transform_4(%arg0: i32) -> (i32, i32) {
    %c0_i32 = arith.constant 0 : i32
    %c0_i32_0 = arith.constant 0 : i32
    %c0_i32_1 = arith.constant 0 : i32
    return %c0_i32, %c0_i32_0 : i32, i32
  }
  func.func @transform_5(%arg0: i32) -> (i32, i32) {
    %c0_i32 = arith.constant 0 : i32
    %c0_i32_0 = arith.constant 0 : i32
    %c0_i32_1 = arith.constant 0 : i32
    return %c0_i32, %c0_i32_0 : i32, i32
  }
  func.func @transform_6(%arg0: i32) -> (i32, i32) {
    %c0_i32 = arith.constant 0 : i32
    %c0_i32_0 = arith.constant 0 : i32
    %c0_i32_1 = arith.constant 0 : i32
    return %c0_i32, %c0_i32_0 : i32, i32
  }
  func.func @transform_7(%arg0: i32) -> (i32, i32) {
    %c0_i32 = arith.constant 0 : i32
    %c0_i32_0 = arith.constant 0 : i32
    %c0_i32_1 = arith.constant 0 : i32
    return %c0_i32, %c0_i32_0 : i32, i32
  }
  func.func @transform_8(%arg0: i32) -> (i32, i32) {
    %c0_i32 = arith.constant 0 : i32
    %c0_i32_0 = arith.constant 0 : i32
    %c0_i32_1 = arith.constant 0 : i32
    return %c0_i32, %c0_i32_0 : i32, i32
  }
  func.func @transform_9(%arg0: i32) -> (i32, i32, i32) {
    %c0_i32 = arith.constant 0 : i32
    %c0_i32_0 = arith.constant 0 : i32
    %c0_i32_1 = arith.constant 0 : i32
    return %arg0, %c0_i32, %c0_i32_0 : i32, i32, i32
  }
  func.func @transform_10(%arg0: i32) -> (i32, i32) {
    %c0_i32 = arith.constant 0 : i32
    %c0_i32_0 = arith.constant 0 : i32
    %c0_i32_1 = arith.constant 0 : i32
    return %c0_i32, %c0_i32_0 : i32, i32
  }
  func.func @transform_11(%arg0: i32) -> (i32, i32) {
    %c0_i32 = arith.constant 0 : i32
    %c0_i32_0 = arith.constant 0 : i32
    %c0_i32_1 = arith.constant 0 : i32
    return %c0_i32, %c0_i32_0 : i32, i32
  }
  func.func @transform_12(%arg0: i32) -> (i32, i32) {
    %c0_i32 = arith.constant 0 : i32
    %c0_i32_0 = arith.constant 0 : i32
    %c0_i32_1 = arith.constant 0 : i32
    return %c0_i32, %c0_i32_0 : i32, i32
  }
  func.func @transform_13(%arg0: i32) -> (i32, i32) {
    %c0_i32 = arith.constant 0 : i32
    %c0_i32_0 = arith.constant 0 : i32
    %c0_i32_1 = arith.constant 0 : i32
    return %c0_i32, %c0_i32_0 : i32, i32
  }
}

</mosaic_0001>

<llo_original>
// kernel: convlstm_forward.1
$region0: #{convlstm_forward.1}
  #allocation0 [shape = 'u32[]', space=smem, size = 0x4, offset = 0x4, fixed_abs, tag = 'smem constant byte address 0x4 - core index']
  #allocation1 [shape = 'u32[144,128]{1,0:T(1,128)}', space=vmem, size = 0x12000, scoped, tag = 'internal scratch']
  #allocation2 [shape = 'f32[288,256]{1,0:T(8,128)}', space=vmem, size = 0x48000, scoped, tag = 'scratch operand']
  #allocation3 [shape = 'f32[576,256]{1,0:T(8,128)}', space=vmem, size = 0x90000, scoped, tag = 'scratch operand']
  #allocation4 [shape = 'f32[288,256]{1,0:T(8,128)}', space=vmem, size = 0x48000, scoped, tag = 'scratch operand']
  #allocation5 [shape = 'f32[1,1]{1,0:T(1,128)S(1)}', space=vmem, size = 0x200, scoped, tag = 'scoped memory for convlstm_forward.1']
  %s0 = inlined_call_operand.vmem [shape: f32[8,40,256], index: 0, kind: input, shape index: {}]
  %s1 = inlined_call_operand.vmem [shape: f32[128,40], index: 1, kind: input, shape index: {}]
  %s2 = inlined_call_operand.vmem [shape: f32[128,288], index: 2, kind: input, shape index: {}]
  %s3 = inlined_call_operand.vmem [shape: f32[128,576], index: 3, kind: input, shape index: {}]
  %s4 = inlined_call_operand.vmem [shape: f32[128,1], index: 4, kind: input, shape index: {}]
  %s5 = inlined_call_operand.vmem [shape: f32[128,1], index: 5, kind: input, shape index: {}]
  %s6 = inlined_call_operand.vmem [shape: f32[8,288], index: 6, kind: input, shape index: {}]
  %s7 = inlined_call_operand.<no memory space> [shape: f32[1,1], index: 7, kind: input, shape index: {}]
  %s8 = inlined_call_operand.vmem [shape: f32[9,256], index: 8, kind: input, shape index: {}]
  %s9 = inlined_call_operand.vmem [shape: f32[8,1,256], index: 9, kind: output, shape index: {0}]
  %s10 = inlined_call_operand.vmem [shape: f32[32,256], index: 10, kind: output, shape index: {1}]
  %s11 = inlined_call_operand.vmem [shape: f32[32,256], index: 11, kind: output, shape index: {2}]
  %s12 = inlined_call_operand.vmem [shape: f32[32,256], index: 12, kind: output, shape index: {3}]
  %s13 = inlined_call_operand.vmem [shape: f32[32,256], index: 13, kind: output, shape index: {4}]
  %14 = xla_tuple %s9, %s10, %s11, %s12, %s13
  %s15 = sld [smem:[#allocation0]]
  $region105: #{convlstm_forward.1} parent=0
    _
  %s17 = ssub.s32 1, %s15
  %s18 = scalar_select 0, %s17, %s15
  %v19 = vstv %s7
  %20 = vst [vmem:[#allocation5] sm:$0x1] %v19
  loop: start=0, step=1, limit=10
  $region2: #{convlstm_forward.1} parent=0 // loop_pre_header
    _
  $region3: #{convlstm_forward.1} parent=0 // loop_header
    %s22 = sphi 0, %s26
    %p23 = scmp.ge.s32.totalorder %s22, 10
    %s32 = sphi 0, %s34
    %s35 = sphi 0, %s32
    %s36 = sphi 0, %s35
    %s52 = sphi 0, %s36
    %s56 = sphi 0, %s56
    %s58 = sphi 0, %s56
    %s59 = sphi 0, %s58
    %s73 = sphi 0, %s59
    %s77 = sphi 0, %s77
    %s79 = sphi 0, %s77
    %s80 = sphi 0, %s79
    %s94 = sphi 0, %s80
    %s98 = sphi 0, %s98
    %s100 = sphi 0, %s98
    %s101 = sphi 0, %s100
    %s115 = sphi 0, %s101
    %s119 = sphi 0, %s119
    %s121 = sphi 0, %s119
    %s122 = sphi 0, %s121
    %s136 = sphi 0, %s122
    %s140 = sphi 0, %s140
    %s142 = sphi 0, %s140
    %s143 = sphi 0, %s142
    %s157 = sphi 0, %s143
    %s161 = sphi 0, %s161
    %s163 = sphi 0, %s161
    %s164 = sphi 0, %s163
    %s178 = sphi 0, %s164
    %s182 = sphi 0, %s182
    %s184 = sphi 0, %s182
    %s185 = sphi 0, %s184
    %s199 = sphi 0, %s185
    %s203 = sphi 0, %s203
    %s205 = sphi 0, %s203
    %s206 = sphi 0, %s205
    %s220 = sphi 0, %s206
    %s226 = sphi 0, %s228
    %s229 = sphi 0, %s226
    %s230 = sphi 0, %s229
    %s246 = sphi 0, %s230
    %s250 = sphi 0, %s250
    %s252 = sphi 0, %s250
    %s253 = sphi 0, %s252
    %s267 = sphi 0, %s253
    %s271 = sphi 0, %s271
    %s273 = sphi 0, %s271
    %s274 = sphi 0, %s273
    %s288 = sphi 0, %s274
    %s292 = sphi 0, %s292
    %s294 = sphi 0, %s292
    %s295 = sphi 0, %s294
    %s309 = sphi 0, %s295
    %s313 = sphi 0, %s313
    %s315 = sphi 0, %s313
    %s316 = sphi 0, %s315
    %s330 = sphi 0, %s316
  $region4: #{convlstm_forward.1} parent=0 // loop_header_branch
    %25 = sbr.rel (%p23) target = $region8
  $region5: #{convlstm_forward.1} parent=0 // loop_body
    %s27 = ssub.s32 %s22, 1
    %s28 = ssub.s32 %s22, 2
    %s29 = sadd.s32 %s22, 1
    %s30 = ssub.s32 %s22, %s29
    %p31 = scmp.eq.s32.totalorder %s30, 0
    %s33 = sadd.s32 %s32, 1
    %s34 = scalar_select %p31, %s32, %s33
    %p37 = pneg %p31
    %p38 = scmp.eq.s32.totalorder %s22, 7
    %p39 = por %p37, %p38
    %p40 = scmp.ne.s32.totalorder %s32, %s35
    %p41 = scmp.eq.s32.totalorder %s22, 0
    %p42 = por %p40, %p41
    %p43 = scmp.ne.s32.totalorder %s32, %s35
    %p44 = scmp.eq.s32.totalorder %s27, 7
    %p45 = por %p43, %p44
    %p46 = scmp.ne.s32.totalorder %s35, %s36
    %p47 = scmp.eq.s32.totalorder %s27, 0
    %p48 = por %p46, %p47
    %p49 = scmp.ne.s32.totalorder %s35, %s36
    %p50 = scmp.eq.s32.totalorder %s28, 7
    %p51 = por %p49, %p50
    %p53 = scmp.ne.s32.totalorder %s36, %s52
    %p54 = scmp.eq.s32.totalorder %s28, 0
    %p55 = por %p53, %p54
    %s57 = sadd.s32 %s56, 1
    %p60 = scmp.eq.s32.totalorder %s22, 7
    %p61 = scmp.ne.s32.totalorder %s56, %s58
    %p62 = scmp.eq.s32.totalorder %s22, 0
    %p63 = por %p61, %p62
    %p64 = scmp.ne.s32.totalorder %s56, %s58
    %p65 = scmp.eq.s32.totalorder %s27, 7
    %p66 = por %p64, %p65
    %p67 = scmp.ne.s32.totalorder %s58, %s59
    %p68 = scmp.eq.s32.totalorder %s27, 0
    %p69 = por %p67, %p68
    %p70 = scmp.ne.s32.totalorder %s58, %s59
    %p71 = scmp.eq.s32.totalorder %s28, 7
    %p72 = por %p70, %p71
    %p74 = scmp.ne.s32.totalorder %s59, %s73
    %p75 = scmp.eq.s32.totalorder %s28, 0
    %p76 = por %p74, %p75
    %s78 = sadd.s32 %s77, 1
    %p81 = scmp.eq.s32.totalorder %s22, 7
    %p82 = scmp.ne.s32.totalorder %s77, %s79
    %p83 = scmp.eq.s32.totalorder %s22, 0
    %p84 = por %p82, %p83
    %p85 = scmp.ne.s32.totalorder %s77, %s79
    %p86 = scmp.eq.s32.totalorder %s27, 7
    %p87 = por %p85, %p86
    %p88 = scmp.ne.s32.totalorder %s79, %s80
    %p89 = scmp.eq.s32.totalorder %s27, 0
    %p90 = por %p88, %p89
    %p91 = scmp.ne.s32.totalorder %s79, %s80
    %p92 = scmp.eq.s32.totalorder %s28, 7
    %p93 = por %p91, %p92
    %p95 = scmp.ne.s32.totalorder %s80, %s94
    %p96 = scmp.eq.s32.totalorder %s28, 0
    %p97 = por %p95, %p96
    %s99 = sadd.s32 %s98, 1
    %p102 = scmp.eq.s32.totalorder %s22, 7
    %p103 = scmp.ne.s32.totalorder %s98, %s100
    %p104 = scmp.eq.s32.totalorder %s22, 0
    %p105 = por %p103, %p104
    %p106 = scmp.ne.s32.totalorder %s98, %s100
    %p107 = scmp.eq.s32.totalorder %s27, 7
    %p108 = por %p106, %p107
    %p109 = scmp.ne.s32.totalorder %s100, %s101
    %p110 = scmp.eq.s32.totalorder %s27, 0
    %p111 = por %p109, %p110
    %p112 = scmp.ne.s32.totalorder %s100, %s101
    %p113 = scmp.eq.s32.totalorder %s28, 7
    %p114 = por %p112, %p113
    %p116 = scmp.ne.s32.totalorder %s101, %s115
    %p117 = scmp.eq.s32.totalorder %s28, 0
    %p118 = por %p116, %p117
    %s120 = sadd.s32 %s119, 1
    %p123 = scmp.eq.s32.totalorder %s22, 7
    %p124 = scmp.ne.s32.totalorder %s119, %s121
    %p125 = scmp.eq.s32.totalorder %s22, 0
    %p126 = por %p124, %p125
    %p127 = scmp.ne.s32.totalorder %s119, %s121
    %p128 = scmp.eq.s32.totalorder %s27, 7
    %p129 = por %p127, %p128
    %p130 = scmp.ne.s32.totalorder %s121, %s122
    %p131 = scmp.eq.s32.totalorder %s27, 0
    %p132 = por %p130, %p131
    %p133 = scmp.ne.s32.totalorder %s121, %s122
    %p134 = scmp.eq.s32.totalorder %s28, 7
    %p135 = por %p133, %p134
    %p137 = scmp.ne.s32.totalorder %s122, %s136
    %p138 = scmp.eq.s32.totalorder %s28, 0
    %p139 = por %p137, %p138
    %s141 = sadd.s32 %s140, 1
    %p144 = scmp.eq.s32.totalorder %s22, 7
    %p145 = scmp.ne.s32.totalorder %s140, %s142
    %p146 = scmp.eq.s32.totalorder %s22, 0
    %p147 = por %p145, %p146
    %p148 = scmp.ne.s32.totalorder %s140, %s142
    %p149 = scmp.eq.s32.totalorder %s27, 7
    %p150 = por %p148, %p149
    %p151 = scmp.ne.s32.totalorder %s142, %s143
    %p152 = scmp.eq.s32.totalorder %s27, 0
    %p153 = por %p151, %p152
    %p154 = scmp.ne.s32.totalorder %s142, %s143
    %p155 = scmp.eq.s32.totalorder %s28, 7
    %p156 = por %p154, %p155
    %p158 = scmp.ne.s32.totalorder %s143, %s157
    %p159 = scmp.eq.s32.totalorder %s28, 0
    %p160 = por %p158, %p159
    %s162 = sadd.s32 %s161, 1
    %p165 = scmp.eq.s32.totalorder %s22, 7
    %p166 = scmp.ne.s32.totalorder %s161, %s163
    %p167 = scmp.eq.s32.totalorder %s22, 0
    %p168 = por %p166, %p167
    %p169 = scmp.ne.s32.totalorder %s161, %s163
    %p170 = scmp.eq.s32.totalorder %s27, 7
    %p171 = por %p169, %p170
    %p172 = scmp.ne.s32.totalorder %s163, %s164
    %p173 = scmp.eq.s32.totalorder %s27, 0
    %p174 = por %p172, %p173
    %p175 = scmp.ne.s32.totalorder %s163, %s164
    %p176 = scmp.eq.s32.totalorder %s28, 7
    %p177 = por %p175, %p176
    %p179 = scmp.ne.s32.totalorder %s164, %s178
    %p180 = scmp.eq.s32.totalorder %s28, 0
    %p181 = por %p179, %p180
    %s183 = sadd.s32 %s182, 1
    %p186 = scmp.eq.s32.totalorder %s22, 7
    %p187 = scmp.ne.s32.totalorder %s182, %s184
    %p188 = scmp.eq.s32.totalorder %s22, 0
    %p189 = por %p187, %p188
    %p190 = scmp.ne.s32.totalorder %s182, %s184
    %p191 = scmp.eq.s32.totalorder %s27, 7
    %p192 = por %p190, %p191
    %p193 = scmp.ne.s32.totalorder %s184, %s185
    %p194 = scmp.eq.s32.totalorder %s27, 0
    %p195 = por %p193, %p194
    %p196 = scmp.ne.s32.totalorder %s184, %s185
    %p197 = scmp.eq.s32.totalorder %s28, 7
    %p198 = por %p196, %p197
    %p200 = scmp.ne.s32.totalorder %s185, %s199
    %p201 = scmp.eq.s32.totalorder %s28, 0
    %p202 = por %p200, %p201
    %s204 = sadd.s32 %s203, 1
    %p207 = scmp.eq.s32.totalorder %s22, 7
    %p208 = scmp.ne.s32.totalorder %s203, %s205
    %p209 = scmp.eq.s32.totalorder %s22, 0
    %p210 = por %p208, %p209
    %p211 = scmp.ne.s32.totalorder %s203, %s205
    %p212 = scmp.eq.s32.totalorder %s27, 7
    %p213 = por %p211, %p212
    %p214 = scmp.ne.s32.totalorder %s205, %s206
    %p215 = scmp.eq.s32.totalorder %s27, 0
    %p216 = por %p214, %p215
    %p217 = scmp.ne.s32.totalorder %s205, %s206
    %p218 = scmp.eq.s32.totalorder %s28, 7
    %p219 = por %p217, %p218
    %p221 = scmp.ne.s32.totalorder %s206, %s220
    %p222 = scmp.eq.s32.totalorder %s28, 0
    %p223 = por %p221, %p222
    %s224 = ssub.s32 %s22, %s29
    %p225 = scmp.eq.s32.totalorder %s224, 0
    %s227 = sadd.s32 %s226, 1
    %s228 = scalar_select %p225, %s226, %s227
    %p231 = pneg %p225
    %p232 = scmp.eq.s32.totalorder %s22, 7
    %p233 = por %p231, %p232
    %p234 = scmp.ne.s32.totalorder %s226, %s229
    %p235 = scmp.eq.s32.totalorder %s22, 0
    %p236 = por %p234, %p235
    %p237 = scmp.ne.s32.totalorder %s226, %s229
    %p238 = scmp.eq.s32.totalorder %s27, 7
    %p239 = por %p237, %p238
    %p240 = scmp.ne.s32.totalorder %s229, %s230
    %p241 = scmp.eq.s32.totalorder %s27, 0
    %p242 = por %p240, %p241
    %p243 = scmp.ne.s32.totalorder %s229, %s230
    %p244 = scmp.eq.s32.totalorder %s28, 7
    %p245 = por %p243, %p244
    %p247 = scmp.ne.s32.totalorder %s230, %s246
    %p248 = scmp.eq.s32.totalorder %s28, 0
    %p249 = por %p247, %p248
    %s251 = sadd.s32 %s250, 1
    %p254 = scmp.eq.s32.totalorder %s22, 7
    %p255 = scmp.ne.s32.totalorder %s250, %s252
    %p256 = scmp.eq.s32.totalorder %s22, 0
    %p257 = por %p255, %p256
    %p258 = scmp.ne.s32.totalorder %s250, %s252
    %p259 = scmp.eq.s32.totalorder %s27, 7
    %p260 = por %p258, %p259
    %p261 = scmp.ne.s32.totalorder %s252, %s253
    %p262 = scmp.eq.s32.totalorder %s27, 0
    %p263 = por %p261, %p262
    %p264 = scmp.ne.s32.totalorder %s252, %s253
    %p265 = scmp.eq.s32.totalorder %s28, 7
    %p266 = por %p264, %p265
    %p268 = scmp.ne.s32.totalorder %s253, %s267
    %p269 = scmp.eq.s32.totalorder %s28, 0
    %p270 = por %p268, %p269
    %s272 = sadd.s32 %s271, 1
    %p275 = scmp.eq.s32.totalorder %s22, 7
    %p276 = scmp.ne.s32.totalorder %s271, %s273
    %p277 = scmp.eq.s32.totalorder %s22, 0
    %p278 = por %p276, %p277
    %p279 = scmp.ne.s32.totalorder %s271, %s273
    %p280 = scmp.eq.s32.totalorder %s27, 7
    %p281 = por %p279, %p280
    %p282 = scmp.ne.s32.totalorder %s273, %s274
    %p283 = scmp.eq.s32.totalorder %s27, 0
    %p284 = por %p282, %p283
    %p285 = scmp.ne.s32.totalorder %s273, %s274
    %p286 = scmp.eq.s32.totalorder %s28, 7
    %p287 = por %p285, %p286
    %p289 = scmp.ne.s32.totalorder %s274, %s288
    %p290 = scmp.eq.s32.totalorder %s28, 0
    %p291 = por %p289, %p290
    %s293 = sadd.s32 %s292, 1
    %p296 = scmp.eq.s32.totalorder %s22, 7
    %p297 = scmp.ne.s32.totalorder %s292, %s294
    %p298 = scmp.eq.s32.totalorder %s22, 0
    %p299 = por %p297, %p298
    %p300 = scmp.ne.s32.totalorder %s292, %s294
    %p301 = scmp.eq.s32.totalorder %s27, 7
    %p302 = por %p300, %p301
    %p303 = scmp.ne.s32.totalorder %s294, %s295
    %p304 = scmp.eq.s32.totalorder %s27, 0
    %p305 = por %p303, %p304
    %p306 = scmp.ne.s32.totalorder %s294, %s295
    %p307 = scmp.eq.s32.totalorder %s28, 7
    %p308 = por %p306, %p307
    %p310 = scmp.ne.s32.totalorder %s295, %s309
    %p311 = scmp.eq.s32.totalorder %s28, 0
    %p312 = por %p310, %p311
    %s314 = sadd.s32 %s313, 1
    %p317 = scmp.eq.s32.totalorder %s22, 7
    %p318 = scmp.ne.s32.totalorder %s313, %s315
    %p319 = scmp.eq.s32.totalorder %s22, 0
    %p320 = por %p318, %p319
    %p321 = scmp.ne.s32.totalorder %s313, %s315
    %p322 = scmp.eq.s32.totalorder %s27, 7
    %p323 = por %p321, %p322
    %p324 = scmp.ne.s32.totalorder %s315, %s316
    %p325 = scmp.eq.s32.totalorder %s27, 0
    %p326 = por %p324, %p325
    %p327 = scmp.ne.s32.totalorder %s315, %s316
    %p328 = scmp.eq.s32.totalorder %s28, 7
    %p329 = por %p327, %p328
    %p331 = scmp.ne.s32.totalorder %s316, %s330
    %p332 = scmp.eq.s32.totalorder %s28, 0
    %p333 = por %p331, %p332
    %p334 = scmp.le.s32.totalorder 1, %s22
    %p335 = scmp.lt.s32.totalorder %s22, 9
    %p336 = pnand %p334, %p335
    %p337 = pneg %p336
    // Predicated region
    $region9: #{convlstm_forward.1} parent=5 // pred_check
      _
    $region10: #{convlstm_forward.1} parent=5 // pred_check_branch
      %339 = sbr.rel (%p336) target = $region12
    $region11: #{convlstm_forward.1} parent=5 // pred_region
      %s340 = ssub.s32 %s22, 1
      // Predicated region
      $region13: #{convlstm_forward.1} parent=11 // pred_check
        %p341 = pneg %p69
      $region14: #{convlstm_forward.1} parent=11 // pred_check_branch
        %343 = sbr.rel (%p341) target = $region16
      $region15: #{convlstm_forward.1} parent=11 // pred_region
        _
      $region16: #{convlstm_forward.1} parent=11 // pred_fallthru
        _
      // Predicated region
      $region17: #{convlstm_forward.1} parent=11 // pred_check
        %p344 = pneg %p90
      $region18: #{convlstm_forward.1} parent=11 // pred_check_branch
        %346 = sbr.rel (%p344) target = $region20
      $region19: #{convlstm_forward.1} parent=11 // pred_region
        _
      $region20: #{convlstm_forward.1} parent=11 // pred_fallthru
        _
      // Predicated region
      $region21: #{convlstm_forward.1} parent=11 // pred_check
        %p347 = pneg %p111
      $region22: #{convlstm_forward.1} parent=11 // pred_check_branch
        %349 = sbr.rel (%p347) target = $region24
      $region23: #{convlstm_forward.1} parent=11 // pred_region
        _
      $region24: #{convlstm_forward.1} parent=11 // pred_fallthru
        _
      // Predicated region
      $region25: #{convlstm_forward.1} parent=11 // pred_check
        %p350 = pneg %p132
      $region26: #{convlstm_forward.1} parent=11 // pred_check_branch
        %352 = sbr.rel (%p350) target = $region28
      $region27: #{convlstm_forward.1} parent=11 // pred_region
        _
      $region28: #{convlstm_forward.1} parent=11 // pred_fallthru
        _
      // Predicated region
      $region29: #{convlstm_forward.1} parent=11 // pred_check
        %p353 = pneg %p153
      $region30: #{convlstm_forward.1} parent=11 // pred_check_branch
        %355 = sbr.rel (%p353) target = $region32
      $region31: #{convlstm_forward.1} parent=11 // pred_region
        _
      $region32: #{convlstm_forward.1} parent=11 // pred_fallthru
        _
      // Predicated region
      $region33: #{convlstm_forward.1} parent=11 // pred_check
        %p356 = pneg %p174
      $region34: #{convlstm_forward.1} parent=11 // pred_check_branch
        %358 = sbr.rel (%p356) target = $region36
      $region35: #{convlstm_forward.1} parent=11 // pred_region
        _
      $region36: #{convlstm_forward.1} parent=11 // pred_fallthru
        _
      // Predicated region
      $region37: #{convlstm_forward.1} parent=11 // pred_check
        %p359 = pneg %p195
      $region38: #{convlstm_forward.1} parent=11 // pred_check_branch
        %361 = sbr.rel (%p359) target = $region40
      $region39: #{convlstm_forward.1} parent=11 // pred_region
        _
      $region40: #{convlstm_forward.1} parent=11 // pred_fallthru
        _
      // Predicated region
      $region41: #{convlstm_forward.1} parent=11 // pred_check
        %p362 = pneg %p216
      $region42: #{convlstm_forward.1} parent=11 // pred_check_branch
        %364 = sbr.rel (%p362) target = $region44
      $region43: #{convlstm_forward.1} parent=11 // pred_region
        _
      $region44: #{convlstm_forward.1} parent=11 // pred_fallthru
        _
    $region12: #{convlstm_forward.1} parent=5 // pred_fallthru
      _
    %p365 = scmp.lt.s32.totalorder %s22, 8
    // Predicated region
    $region45: #{convlstm_forward.1} parent=5 // pred_check
      %p366 = pneg %p365
    $region46: #{convlstm_forward.1} parent=5 // pred_check_branch
      %368 = sbr.rel (%p366) target = $region48
    $region47: #{convlstm_forward.1} parent=5 // pred_region
      // Predicated region
      $region49: #{convlstm_forward.1} parent=47 // pred_check
        %p369 = pneg %p42
      $region50: #{convlstm_forward.1} parent=47 // pred_check_branch
        %371 = sbr.rel (%p369) target = $region52
      $region51: #{convlstm_forward.1} parent=47 // pred_region
        %p372 = scmp.lt.s32.totalorder %s22, 7
        %s373 = scalar_select %p372, %s22, 7
        %s374 = smul.addr %s373, 10
        %s375 = smul.addr %s374, 8
        %s376 = scalar_lea.vmem %s0, %s375
      $region52: #{convlstm_forward.1} parent=47 // pred_fallthru
        _
    $region48: #{convlstm_forward.1} parent=5 // pred_fallthru
      _
    %p377 = scmp.le.s32.totalorder 1, %s22
    %p378 = scmp.lt.s32.totalorder %s22, 9
    %p379 = pnand %p377, %p378
    %p380 = pneg %p379
    // Predicated region
    $region53: #{convlstm_forward.1} parent=5 // pred_check
      _
    $region54: #{convlstm_forward.1} parent=5 // pred_check_branch
      %382 = sbr.rel (%p379) target = $region56
    $region55: #{convlstm_forward.1} parent=5 // pred_region
      %s383 = ssub.s32 %s22, 1
      %p384 = scmp.lt.s32.totalorder %s27, 7
      %s385 = scalar_select %p384, %s27, 7
      %s386 = smul.addr %s385, 10
      %s387 = smul.addr %s386, 8
      %s388 = scalar_lea.vmem %s0, %s387
      %p389 = pneg %p48
      %p390 = pneg %p45
      %p391 = pneg %p69
      %p392 = pneg %p66
      %p393 = pneg %p90
      %p394 = pneg %p87
      %p395 = pneg %p111
      %p396 = pneg %p108
      %p397 = pneg %p132
      %p398 = pneg %p129
      %p399 = pneg %p153
      %p400 = pneg %p150
      %p401 = pneg %p174
      %p402 = pneg %p171
      %p403 = pneg %p195
      %p404 = pneg %p192
      %p405 = pneg %p216
      %p406 = pneg %p213
      %p407 = pneg %p242
      %p408 = pneg %p239
      %p409 = scmp.lt.s32.totalorder %s27, 7
      %s410 = scalar_select %p409, %s27, 7
      %s411 = smul.addr %s410, 2
      %s412 = scalar_lea.vmem %s9, %s411
      %p413 = pneg %p263
      %p414 = pneg %p260
      %p415 = pneg %p284
      %p416 = pneg %p281
      %p417 = pneg %p305
      %p418 = pneg %p302
      %p419 = pneg %p326
      %p420 = pneg %p323
      %p421 = scmp.lt.s32.totalorder %s27, 7
      %s422 = scalar_select %p421, %s27, 7
      %s423 = smul.addr %s422, 10
      %s424 = smul.addr %s423, 8
      %s425 = scalar_lea.vmem %s0, %s424
      %p426 = scmp.lt.s32.totalorder %s27, 7
      %s427 = scalar_select %p426, %s27, 7
      %s428 = smul.addr %s427, 2
      %s429 = scalar_lea.vmem %s9, %s428
      %p430 = scmp.eq.s32.totalorder %s27, 0
      // Predicated region
      $region57: #{convlstm_forward.1} parent=55 // pred_check
        %p431 = pneg %p430
      $region58: #{convlstm_forward.1} parent=55 // pred_check_branch
        %433 = sbr.rel (%p431) target = $region60
      $region59: #{convlstm_forward.1} parent=55 // pred_region
        %434 = vst [vmem:[%s10] sm:$0xff] 0.0
        %435 = vst [vmem:[%s10 + $0x8] sm:$0xff] 0.0
        %436 = vst [vmem:[%s10 + $0x10] sm:$0xff] 0.0
        %437 = vst [vmem:[%s10 + $0x18] sm:$0xff] 0.0
        %438 = vst [vmem:[%s10 + $0x20] sm:$0xff] 0.0
        %439 = vst [vmem:[%s10 + $0x28] sm:$0xff] 0.0
        %440 = vst [vmem:[%s10 + $0x30] sm:$0xff] 0.0
        %441 = vst [vmem:[%s10 + $0x38] sm:$0xff] 0.0
        %442 = vst [vmem:[%s12] sm:$0xff] 0.0
        %443 = vst [vmem:[%s12 + $0x8] sm:$0xff] 0.0
        %444 = vst [vmem:[%s12 + $0x10] sm:$0xff] 0.0
        %445 = vst [vmem:[%s12 + $0x18] sm:$0xff] 0.0
        %446 = vst [vmem:[%s12 + $0x20] sm:$0xff] 0.0
        %447 = vst [vmem:[%s12 + $0x28] sm:$0xff] 0.0
        %448 = vst [vmem:[%s12 + $0x30] sm:$0xff] 0.0
        %449 = vst [vmem:[%s12 + $0x38] sm:$0xff] 0.0
        %450 = vst [vmem:[%s11] sm:$0xff] 0.0
        %451 = vst [vmem:[%s11 + $0x8] sm:$0xff] 0.0
        %452 = vst [vmem:[%s11 + $0x10] sm:$0xff] 0.0
        %453 = vst [vmem:[%s11 + $0x18] sm:$0xff] 0.0
        %454 = vst [vmem:[%s11 + $0x20] sm:$0xff] 0.0
        %455 = vst [vmem:[%s11 + $0x28] sm:$0xff] 0.0
        %456 = vst [vmem:[%s11 + $0x30] sm:$0xff] 0.0
        %457 = vst [vmem:[%s11 + $0x38] sm:$0xff] 0.0
        %458 = vst [vmem:[%s13] sm:$0xff] 0.0
        %459 = vst [vmem:[%s13 + $0x8] sm:$0xff] 0.0
        %460 = vst [vmem:[%s13 + $0x10] sm:$0xff] 0.0
        %461 = vst [vmem:[%s13 + $0x18] sm:$0xff] 0.0
        %462 = vst [vmem:[%s13 + $0x20] sm:$0xff] 0.0
        %463 = vst [vmem:[%s13 + $0x28] sm:$0xff] 0.0
        %464 = vst [vmem:[%s13 + $0x30] sm:$0xff] 0.0
        %465 = vst [vmem:[%s13 + $0x38] sm:$0xff] 0.0
      $region60: #{convlstm_forward.1} parent=55 // pred_fallthru
        _
      %v466 = vld [vmem:[%s10] sm:$0xff]
      %v467 = vld [vmem:[%s10 + $0x8] sm:$0xff]
      %v468 = vld [vmem:[%s10 + $0x10] sm:$0xff]
      %v469 = vld [vmem:[%s10 + $0x18] sm:$0xff]
      %v470 = vld [vmem:[%s10 + $0x20] sm:$0xff]
      %v471 = vld [vmem:[%s10 + $0x28] sm:$0xff]
      %v472 = vld [vmem:[%s10 + $0x30] sm:$0xff]
      %v473 = vld [vmem:[%s10 + $0x38] sm:$0xff]
      %v474 = vld [vmem:[%s12] sm:$0xff]
      %v475 = vld [vmem:[%s12 + $0x8] sm:$0xff]
      %v476 = vld [vmem:[%s12 + $0x10] sm:$0xff]
      %v477 = vld [vmem:[%s12 + $0x18] sm:$0xff]
      %v478 = vld [vmem:[%s12 + $0x20] sm:$0xff]
      %v479 = vld [vmem:[%s12 + $0x28] sm:$0xff]
      %v480 = vld [vmem:[%s12 + $0x30] sm:$0xff]
      %v481 = vld [vmem:[%s12 + $0x38] sm:$0xff]
      %v482 = vld [vmem:[%s8] ss:$8 sm:$0x3]
      %483 = vrot.lane.b32.xlu0 %v466, 17
      %v484 = vpop.permute.xlu0 %483
      %485 = vrot.lane.b32.xlu0 %v468, 17
      %v486 = vpop.permute.xlu0 %485
      %487 = vrot.lane.b32.xlu0 %v470, 17
      %v488 = vpop.permute.xlu0 %487
      %489 = vrot.lane.b32.xlu0 %v472, 17
      %v490 = vpop.permute.xlu0 %489
      %491 = vrot.lane.b32.xlu0 %v467, 17
      %v492 = vpop.permute.xlu0 %491
      %493 = vrot.lane.b32.xlu0 %v469, 17
      %v494 = vpop.permute.xlu0 %493
      %495 = vrot.lane.b32.xlu0 %v471, 17
      %v496 = vpop.permute.xlu0 %495
      %497 = vrot.lane.b32.xlu0 %v473, 17
      %v498 = vpop.permute.xlu0 %497
      %v499 = vlaneseq
      %v500 = vand.u32 %v499, 127
      %vm501 = vcmp.lt.s32.totalorder %v500, 17
      %v502 = vsel %vm501, %v484, %v492
      %v503 = vsel %vm501, %v486, %v494
      %v504 = vsel %vm501, %v488, %v496
      %v505 = vsel %vm501, %v490, %v498
      %v506 = vsel %vm501, %v492, %v484
      %v507 = vsel %vm501, %v494, %v486
      %v508 = vsel %vm501, %v496, %v488
      %v509 = vsel %vm501, %v498, %v490
      %v511 = vlaneseq
      %v512 = vshrl.u32 %v511, 7
      %v513 = vsub.s32 0, %v512
      %v514 = vrot.slane %v482, %v513
      %v515 = vlaneseq
      %v516 = vshrl.u32 %v515, 7
      %v517 = vsub.s32 1, %v516
      %v518 = vrot.slane %v482, %v517
      %v521 = vmul.f32 %v506, %v514
      %v522 = vmul.f32 %v502, %v518
      %v523 = vmul.f32 %v507, %v514
      %v524 = vmul.f32 %v503, %v518
      %v525 = vmul.f32 %v508, %v514
      %v526 = vmul.f32 %v504, %v518
      %v527 = vmul.f32 %v509, %v514
      %v528 = vmul.f32 %v505, %v518
      %529 = vst [vmem:[#allocation2] sm:$0xff] %v521
      %530 = vst [vmem:[#allocation2 + $0x8] sm:$0xff] %v522
      %531 = vst [vmem:[#allocation2 + $0x10] sm:$0xff] %v523
      %532 = vst [vmem:[#allocation2 + $0x18] sm:$0xff] %v524
      %533 = vst [vmem:[#allocation2 + $0x20] sm:$0xff] %v525
      %534 = vst [vmem:[#allocation2 + $0x28] sm:$0xff] %v526
      %535 = vst [vmem:[#allocation2 + $0x30] sm:$0xff] %v527
      %536 = vst [vmem:[#allocation2 + $0x38] sm:$0xff] %v528
      %s537 = scalar_lea.vmem %s8, 1
      %v538 = vld [vmem:[%s537] ss:$8 sm:$0x3]
      %539 = vrot.lane.b32.xlu0 %v466, 16
      %v540 = vpop.permute.xlu0 %539
      %541 = vrot.lane.b32.xlu0 %v468, 16
      %v542 = vpop.permute.xlu0 %541
      %543 = vrot.lane.b32.xlu0 %v470, 16
      %v544 = vpop.permute.xlu0 %543
      %545 = vrot.lane.b32.xlu0 %v472, 16
      %v546 = vpop.permute.xlu0 %545
      %547 = vrot.lane.b32.xlu0 %v467, 16
      %v548 = vpop.permute.xlu0 %547
      %549 = vrot.lane.b32.xlu0 %v469, 16
      %v550 = vpop.permute.xlu0 %549
      %551 = vrot.lane.b32.xlu0 %v471, 16
      %v552 = vpop.permute.xlu0 %551
      %553 = vrot.lane.b32.xlu0 %v473, 16
      %v554 = vpop.permute.xlu0 %553
      %vm555 = vcmp.lt.s32.totalorder %v500, 16
      %v556 = vsel %vm555, %v540, %v548
      %v557 = vsel %vm555, %v542, %v550
      %v558 = vsel %vm555, %v544, %v552
      %v559 = vsel %vm555, %v546, %v554
      %v560 = vsel %vm555, %v548, %v540
      %v561 = vsel %vm555, %v550, %v542
      %v562 = vsel %vm555, %v552, %v544
      %v563 = vsel %vm555, %v554, %v546
      %v565 = vlaneseq
      %v566 = vshrl.u32 %v565, 7
      %v567 = vsub.s32 0, %v566
      %v568 = vrot.slane %v538, %v567
      %v569 = vlaneseq
      %v570 = vshrl.u32 %v569, 7
      %v571 = vsub.s32 1, %v570
      %v572 = vrot.slane %v538, %v571
      %v575 = vmul.f32 %v560, %v568
      %v576 = vmul.f32 %v556, %v572
      %v577 = vmul.f32 %v561, %v568
      %v578 = vmul.f32 %v557, %v572
      %v579 = vmul.f32 %v562, %v568
      %v580 = vmul.f32 %v558, %v572
      %v581 = vmul.f32 %v563, %v568
      %v582 = vmul.f32 %v559, %v572
      %583 = vst [vmem:[#allocation2 + $0x40] sm:$0xff] %v575
      %584 = vst [vmem:[#allocation2 + $0x48] sm:$0xff] %v576
      %585 = vst [vmem:[#allocation2 + $0x50] sm:$0xff] %v577
      %586 = vst [vmem:[#allocation2 + $0x58] sm:$0xff] %v578
      %587 = vst [vmem:[#allocation2 + $0x60] sm:$0xff] %v579
      %588 = vst [vmem:[#allocation2 + $0x68] sm:$0xff] %v580
      %589 = vst [vmem:[#allocation2 + $0x70] sm:$0xff] %v581
      %590 = vst [vmem:[#allocation2 + $0x78] sm:$0xff] %v582
      %s591 = scalar_lea.vmem %s8, 2
      %v592 = vld [vmem:[%s591] ss:$8 sm:$0x3]
      %593 = vrot.lane.b32.xlu0 %v466, 15
      %v594 = vpop.permute.xlu0 %593
      %595 = vrot.lane.b32.xlu0 %v468, 15
      %v596 = vpop.permute.xlu0 %595
      %597 = vrot.lane.b32.xlu0 %v470, 15
      %v598 = vpop.permute.xlu0 %597
      %599 = vrot.lane.b32.xlu0 %v472, 15
      %v600 = vpop.permute.xlu0 %599
      %601 = vrot.lane.b32.xlu0 %v467, 15
      %v602 = vpop.permute.xlu0 %601
      %603 = vrot.lane.b32.xlu0 %v469, 15
      %v604 = vpop.permute.xlu0 %603
      %605 = vrot.lane.b32.xlu0 %v471, 15
      %v606 = vpop.permute.xlu0 %605
      %607 = vrot.lane.b32.xlu0 %v473, 15
      %v608 = vpop.permute.xlu0 %607
      %vm609 = vcmp.lt.s32.totalorder %v500, 15
      %v610 = vsel %vm609, %v594, %v602
      %v611 = vsel %vm609, %v596, %v604
      %v612 = vsel %vm609, %v598, %v606
      %v613 = vsel %vm609, %v600, %v608
      %v614 = vsel %vm609, %v602, %v594
      %v615 = vsel %vm609, %v604, %v596
      %v616 = vsel %vm609, %v606, %v598
      %v617 = vsel %vm609, %v608, %v600
      %v619 = vlaneseq
      %v620 = vshrl.u32 %v619, 7
      %v621 = vsub.s32 0, %v620
      %v622 = vrot.slane %v592, %v621
      %v623 = vlaneseq
      %v624 = vshrl.u32 %v623, 7
      %v625 = vsub.s32 1, %v624
      %v626 = vrot.slane %v592, %v625
      %v629 = vmul.f32 %v614, %v622
      %v630 = vmul.f32 %v610, %v626
      %v631 = vmul.f32 %v615, %v622
      %v632 = vmul.f32 %v611, %v626
      %v633 = vmul.f32 %v616, %v622
      %v634 = vmul.f32 %v612, %v626
      %v635 = vmul.f32 %v617, %v622
      %v636 = vmul.f32 %v613, %v626
      %637 = vst [vmem:[#allocation2 + $0x80] sm:$0xff] %v629
      %638 = vst [vmem:[#allocation2 + $0x88] sm:$0xff] %v630
      %639 = vst [vmem:[#allocation2 + $0x90] sm:$0xff] %v631
      %640 = vst [vmem:[#allocation2 + $0x98] sm:$0xff] %v632
      %641 = vst [vmem:[#allocation2 + $0xa0] sm:$0xff] %v633
      %642 = vst [vmem:[#allocation2 + $0xa8] sm:$0xff] %v634
      %643 = vst [vmem:[#allocation2 + $0xb0] sm:$0xff] %v635
      %644 = vst [vmem:[#allocation2 + $0xb8] sm:$0xff] %v636
      %s645 = scalar_lea.vmem %s8, 3
      %v646 = vld [vmem:[%s645] ss:$8 sm:$0x3]
      %647 = vrot.lane.b32.xlu0 %v466, 1
      %v648 = vpop.permute.xlu0 %647
      %649 = vrot.lane.b32.xlu0 %v468, 1
      %v650 = vpop.permute.xlu0 %649
      %651 = vrot.lane.b32.xlu0 %v470, 1
      %v652 = vpop.permute.xlu0 %651
      %653 = vrot.lane.b32.xlu0 %v472, 1
      %v654 = vpop.permute.xlu0 %653
      %655 = vrot.lane.b32.xlu0 %v467, 1
      %v656 = vpop.permute.xlu0 %655
      %657 = vrot.lane.b32.xlu0 %v469, 1
      %v658 = vpop.permute.xlu0 %657
      %659 = vrot.lane.b32.xlu0 %v471, 1
      %v660 = vpop.permute.xlu0 %659
      %661 = vrot.lane.b32.xlu0 %v473, 1
      %v662 = vpop.permute.xlu0 %661
      %vm663 = vcmp.lt.s32.totalorder %v500, 1
      %v664 = vsel %vm663, %v648, %v656
      %v665 = vsel %vm663, %v650, %v658
      %v666 = vsel %vm663, %v652, %v660
      %v667 = vsel %vm663, %v654, %v662
      %v668 = vsel %vm663, %v656, %v648
      %v669 = vsel %vm663, %v658, %v650
      %v670 = vsel %vm663, %v660, %v652
      %v671 = vsel %vm663, %v662, %v654
      %v673 = vlaneseq
      %v674 = vshrl.u32 %v673, 7
      %v675 = vsub.s32 0, %v674
      %v676 = vrot.slane %v646, %v675
      %v677 = vlaneseq
      %v678 = vshrl.u32 %v677, 7
      %v679 = vsub.s32 1, %v678
      %v680 = vrot.slane %v646, %v679
      %v683 = vmul.f32 %v668, %v676
      %v684 = vmul.f32 %v664, %v680
      %v685 = vmul.f32 %v669, %v676
      %v686 = vmul.f32 %v665, %v680
      %v687 = vmul.f32 %v670, %v676
      %v688 = vmul.f32 %v666, %v680
      %v689 = vmul.f32 %v671, %v676
      %v690 = vmul.f32 %v667, %v680
      %691 = vst [vmem:[#allocation2 + $0xc0] sm:$0xff] %v683
      %692 = vst [vmem:[#allocation2 + $0xc8] sm:$0xff] %v684
      %693 = vst [vmem:[#allocation2 + $0xd0] sm:$0xff] %v685
      %694 = vst [vmem:[#allocation2 + $0xd8] sm:$0xff] %v686
      %695 = vst [vmem:[#allocation2 + $0xe0] sm:$0xff] %v687
      %696 = vst [vmem:[#allocation2 + $0xe8] sm:$0xff] %v688
      %697 = vst [vmem:[#allocation2 + $0xf0] sm:$0xff] %v689
      %698 = vst [vmem:[#allocation2 + $0xf8] sm:$0xff] %v690
      %s699 = scalar_lea.vmem %s8, 4
      %v700 = vld [vmem:[%s699] ss:$8 sm:$0x3]
      %v702 = vlaneseq
      %v703 = vshrl.u32 %v702, 7
      %v704 = vsub.s32 0, %v703
      %v705 = vrot.slane %v700, %v704
      %v706 = vlaneseq
      %v707 = vshrl.u32 %v706, 7
      %v708 = vsub.s32 1, %v707
      %v709 = vrot.slane %v700, %v708
      %v712 = vmul.f32 %v466, %v705
      %v713 = vmul.f32 %v467, %v709
      %v714 = vmul.f32 %v468, %v705
      %v715 = vmul.f32 %v469, %v709
      %v716 = vmul.f32 %v470, %v705
      %v717 = vmul.f32 %v471, %v709
      %v718 = vmul.f32 %v472, %v705
      %v719 = vmul.f32 %v473, %v709
      %720 = vst [vmem:[#allocation2 + $0x100] sm:$0xff] %v712
      %721 = vst [vmem:[#allocation2 + $0x108] sm:$0xff] %v713
      %722 = vst [vmem:[#allocation2 + $0x110] sm:$0xff] %v714
      %723 = vst [vmem:[#allocation2 + $0x118] sm:$0xff] %v715
      %724 = vst [vmem:[#allocation2 + $0x120] sm:$0xff] %v716
      %725 = vst [vmem:[#allocation2 + $0x128] sm:$0xff] %v717
      %726 = vst [vmem:[#allocation2 + $0x130] sm:$0xff] %v718
      %727 = vst [vmem:[#allocation2 + $0x138] sm:$0xff] %v719
      %s728 = scalar_lea.vmem %s8, 5
      %v729 = vld [vmem:[%s728] ss:$8 sm:$0x3]
      %730 = vrot.lane.b32.xlu0 %v466, 127
      %v731 = vpop.permute.xlu0 %730
      %732 = vrot.lane.b32.xlu0 %v468, 127
      %v733 = vpop.permute.xlu0 %732
      %734 = vrot.lane.b32.xlu0 %v470, 127
      %v735 = vpop.permute.xlu0 %734
      %736 = vrot.lane.b32.xlu0 %v472, 127
      %v737 = vpop.permute.xlu0 %736
      %738 = vrot.lane.b32.xlu0 %v467, 127
      %v739 = vpop.permute.xlu0 %738
      %740 = vrot.lane.b32.xlu0 %v469, 127
      %v741 = vpop.permute.xlu0 %740
      %742 = vrot.lane.b32.xlu0 %v471, 127
      %v743 = vpop.permute.xlu0 %742
      %744 = vrot.lane.b32.xlu0 %v473, 127
      %v745 = vpop.permute.xlu0 %744
      %vm746 = vcmp.lt.s32.totalorder %v500, 127
      %v747 = vsel %vm746, %v731, %v739
      %v748 = vsel %vm746, %v733, %v741
      %v749 = vsel %vm746, %v735, %v743
      %v750 = vsel %vm746, %v737, %v745
      %v751 = vsel %vm746, %v739, %v731
      %v752 = vsel %vm746, %v741, %v733
      %v753 = vsel %vm746, %v743, %v735
      %v754 = vsel %vm746, %v745, %v737
      %v756 = vlaneseq
      %v757 = vshrl.u32 %v756, 7
      %v758 = vsub.s32 0, %v757
      %v759 = vrot.slane %v729, %v758
      %v760 = vlaneseq
      %v761 = vshrl.u32 %v760, 7
      %v762 = vsub.s32 1, %v761
      %v763 = vrot.slane %v729, %v762
      %v766 = vmul.f32 %v747, %v759
      %v767 = vmul.f32 %v751, %v763
      %v768 = vmul.f32 %v748, %v759
      %v769 = vmul.f32 %v752, %v763
      %v770 = vmul.f32 %v749, %v759
      %v771 = vmul.f32 %v753, %v763
      %v772 = vmul.f32 %v750, %v759
      %v773 = vmul.f32 %v754, %v763
      %774 = vst [vmem:[#allocation2 + $0x140] sm:$0xff] %v766
      %775 = vst [vmem:[#allocation2 + $0x148] sm:$0xff] %v767
      %776 = vst [vmem:[#allocation2 + $0x150] sm:$0xff] %v768
      %777 = vst [vmem:[#allocation2 + $0x158] sm:$0xff] %v769
      %778 = vst [vmem:[#allocation2 + $0x160] sm:$0xff] %v770
      %779 = vst [vmem:[#allocation2 + $0x168] sm:$0xff] %v771
      %780 = vst [vmem:[#allocation2 + $0x170] sm:$0xff] %v772
      %781 = vst [vmem:[#allocation2 + $0x178] sm:$0xff] %v773
      %s782 = scalar_lea.vmem %s8, 6
      %v783 = vld [vmem:[%s782] ss:$8 sm:$0x3]
      %784 = vrot.lane.b32.xlu0 %v466, 113
      %v785 = vpop.permute.xlu0 %784
      %786 = vrot.lane.b32.xlu0 %v468, 113
      %v787 = vpop.permute.xlu0 %786
      %788 = vrot.lane.b32.xlu0 %v470, 113
      %v789 = vpop.permute.xlu0 %788
      %790 = vrot.lane.b32.xlu0 %v472, 113
      %v791 = vpop.permute.xlu0 %790
      %792 = vrot.lane.b32.xlu0 %v467, 113
      %v793 = vpop.permute.xlu0 %792
      %794 = vrot.lane.b32.xlu0 %v469, 113
      %v795 = vpop.permute.xlu0 %794
      %796 = vrot.lane.b32.xlu0 %v471, 113
      %v797 = vpop.permute.xlu0 %796
      %798 = vrot.lane.b32.xlu0 %v473, 113
      %v799 = vpop.permute.xlu0 %798
      %vm800 = vcmp.lt.s32.totalorder %v500, 113
      %v801 = vsel %vm800, %v785, %v793
      %v802 = vsel %vm800, %v787, %v795
      %v803 = vsel %vm800, %v789, %v797
      %v804 = vsel %vm800, %v791, %v799
      %v805 = vsel %vm800, %v793, %v785
      %v806 = vsel %vm800, %v795, %v787
      %v807 = vsel %vm800, %v797, %v789
      %v808 = vsel %vm800, %v799, %v791
      %v810 = vlaneseq
      %v811 = vshrl.u32 %v810, 7
      %v812 = vsub.s32 0, %v811
      %v813 = vrot.slane %v783, %v812
      %v814 = vlaneseq
      %v815 = vshrl.u32 %v814, 7
      %v816 = vsub.s32 1, %v815
      %v817 = vrot.slane %v783, %v816
      %v820 = vmul.f32 %v801, %v813
      %v821 = vmul.f32 %v805, %v817
      %v822 = vmul.f32 %v802, %v813
      %v823 = vmul.f32 %v806, %v817
      %v824 = vmul.f32 %v803, %v813
      %v825 = vmul.f32 %v807, %v817
      %v826 = vmul.f32 %v804, %v813
      %v827 = vmul.f32 %v808, %v817
      %828 = vst [vmem:[#allocation2 + $0x180] sm:$0xff] %v820
      %829 = vst [vmem:[#allocation2 + $0x188] sm:$0xff] %v821
      %830 = vst [vmem:[#allocation2 + $0x190] sm:$0xff] %v822
      %831 = vst [vmem:[#allocation2 + $0x198] sm:$0xff] %v823
      %832 = vst [vmem:[#allocation2 + $0x1a0] sm:$0xff] %v824
      %833 = vst [vmem:[#allocation2 + $0x1a8] sm:$0xff] %v825
      %834 = vst [vmem:[#allocation2 + $0x1b0] sm:$0xff] %v826
      %835 = vst [vmem:[#allocation2 + $0x1b8] sm:$0xff] %v827
      %s836 = scalar_lea.vmem %s8, 7
      %v837 = vld [vmem:[%s836] ss:$8 sm:$0x3]
      %838 = vrot.lane.b32.xlu0 %v466, 112
      %v839 = vpop.permute.xlu0 %838
      %840 = vrot.lane.b32.xlu0 %v468, 112
      %v841 = vpop.permute.xlu0 %840
      %842 = vrot.lane.b32.xlu0 %v470, 112
      %v843 = vpop.permute.xlu0 %842
      %844 = vrot.lane.b32.xlu0 %v472, 112
      %v845 = vpop.permute.xlu0 %844
      %846 = vrot.lane.b32.xlu0 %v467, 112
      %v847 = vpop.permute.xlu0 %846
      %848 = vrot.lane.b32.xlu0 %v469, 112
      %v849 = vpop.permute.xlu0 %848
      %850 = vrot.lane.b32.xlu0 %v471, 112
      %v851 = vpop.permute.xlu0 %850
      %852 = vrot.lane.b32.xlu0 %v473, 112
      %v853 = vpop.permute.xlu0 %852
      %vm854 = vcmp.lt.s32.totalorder %v500, 112
      %v855 = vsel %vm854, %v839, %v847
      %v856 = vsel %vm854, %v841, %v849
      %v857 = vsel %vm854, %v843, %v851
      %v858 = vsel %vm854, %v845, %v853
      %v859 = vsel %vm854, %v847, %v839
      %v860 = vsel %vm854, %v849, %v841
      %v861 = vsel %vm854, %v851, %v843
      %v862 = vsel %vm854, %v853, %v845
      %v864 = vlaneseq
      %v865 = vshrl.u32 %v864, 7
      %v866 = vsub.s32 0, %v865
      %v867 = vrot.slane %v837, %v866
      %v868 = vlaneseq
      %v869 = vshrl.u32 %v868, 7
      %v870 = vsub.s32 1, %v869
      %v871 = vrot.slane %v837, %v870
      %v874 = vmul.f32 %v855, %v867
      %v875 = vmul.f32 %v859, %v871
      %v876 = vmul.f32 %v856, %v867
      %v877 = vmul.f32 %v860, %v871
      %v878 = vmul.f32 %v857, %v867
      %v879 = vmul.f32 %v861, %v871
      %v880 = vmul.f32 %v858, %v867
      %v881 = vmul.f32 %v862, %v871
      %882 = vst [vmem:[#allocation2 + $0x1c0] sm:$0xff] %v874
      %883 = vst [vmem:[#allocation2 + $0x1c8] sm:$0xff] %v875
      %884 = vst [vmem:[#allocation2 + $0x1d0] sm:$0xff] %v876
      %885 = vst [vmem:[#allocation2 + $0x1d8] sm:$0xff] %v877
      %886 = vst [vmem:[#allocation2 + $0x1e0] sm:$0xff] %v878
      %887 = vst [vmem:[#allocation2 + $0x1e8] sm:$0xff] %v879
      %888 = vst [vmem:[#allocation2 + $0x1f0] sm:$0xff] %v880
      %889 = vst [vmem:[#allocation2 + $0x1f8] sm:$0xff] %v881
      %s890 = scalar_lea.vmem %s8, 16
      %v891 = vld [vmem:[%s890] ss:$8 sm:$0x3]
      %892 = vrot.lane.b32.xlu0 %v466, 111
      %v893 = vpop.permute.xlu0 %892
      %894 = vrot.lane.b32.xlu0 %v468, 111
      %v895 = vpop.permute.xlu0 %894
      %896 = vrot.lane.b32.xlu0 %v470, 111
      %v897 = vpop.permute.xlu0 %896
      %898 = vrot.lane.b32.xlu0 %v472, 111
      %v899 = vpop.permute.xlu0 %898
      %900 = vrot.lane.b32.xlu0 %v467, 111
      %v901 = vpop.permute.xlu0 %900
      %902 = vrot.lane.b32.xlu0 %v469, 111
      %v903 = vpop.permute.xlu0 %902
      %904 = vrot.lane.b32.xlu0 %v471, 111
      %v905 = vpop.permute.xlu0 %904
      %906 = vrot.lane.b32.xlu0 %v473, 111
      %v907 = vpop.permute.xlu0 %906
      %vm908 = vcmp.lt.s32.totalorder %v500, 111
      %v909 = vsel %vm908, %v893, %v901
      %v910 = vsel %vm908, %v895, %v903
      %v911 = vsel %vm908, %v897, %v905
      %v912 = vsel %vm908, %v899, %v907
      %v913 = vsel %vm908, %v901, %v893
      %v914 = vsel %vm908, %v903, %v895
      %v915 = vsel %vm908, %v905, %v897
      %v916 = vsel %vm908, %v907, %v899
      %v918 = vlaneseq
      %v919 = vshrl.u32 %v918, 7
      %v920 = vsub.s32 0, %v919
      %v921 = vrot.slane %v891, %v920
      %v922 = vlaneseq
      %v923 = vshrl.u32 %v922, 7
      %v924 = vsub.s32 1, %v923
      %v925 = vrot.slane %v891, %v924
      %v928 = vmul.f32 %v909, %v921
      %v929 = vmul.f32 %v913, %v925
      %v930 = vmul.f32 %v910, %v921
      %v931 = vmul.f32 %v914, %v925
      %v932 = vmul.f32 %v911, %v921
      %v933 = vmul.f32 %v915, %v925
      %v934 = vmul.f32 %v912, %v921
      %v935 = vmul.f32 %v916, %v925
      %936 = vst [vmem:[#allocation2 + $0x200] sm:$0xff] %v928
      %937 = vst [vmem:[#allocation2 + $0x208] sm:$0xff] %v929
      %938 = vst [vmem:[#allocation2 + $0x210] sm:$0xff] %v930
      %939 = vst [vmem:[#allocation2 + $0x218] sm:$0xff] %v931
      %940 = vst [vmem:[#allocation2 + $0x220] sm:$0xff] %v932
      %941 = vst [vmem:[#allocation2 + $0x228] sm:$0xff] %v933
      %942 = vst [vmem:[#allocation2 + $0x230] sm:$0xff] %v934
      %943 = vst [vmem:[#allocation2 + $0x238] sm:$0xff] %v935
      %v944 = vld [vmem:[%s1] sm:$0xff]
      %v945 = vld [vmem:[%s1 + $0x8] sm:$0xff]
      %v946 = vld [vmem:[%s1 + $0x10] sm:$0xff]
      %v947 = vld [vmem:[%s1 + $0x18] sm:$0xff]
      %v948 = vld [vmem:[%s1 + $0x20] sm:$0xff]
      %v949 = vld [vmem:[%s1 + $0x28] sm:$0xff]
      %v950 = vld [vmem:[%s1 + $0x30] sm:$0xff]
      %v951 = vld [vmem:[%s1 + $0x38] sm:$0xff]
      %v952 = vld [vmem:[%s1 + $0x40] sm:$0xff]
      %v953 = vld [vmem:[%s1 + $0x48] sm:$0xff]
      %v954 = vld [vmem:[%s1 + $0x50] sm:$0xff]
      %v955 = vld [vmem:[%s1 + $0x58] sm:$0xff]
      %v956 = vld [vmem:[%s1 + $0x60] sm:$0xff]
      %v957 = vld [vmem:[%s1 + $0x68] sm:$0xff]
      %v958 = vld [vmem:[%s1 + $0x70] sm:$0xff]
      %v959 = vld [vmem:[%s1 + $0x78] sm:$0xff]
      %v960 = vld [vmem:[%s425] sm:$0xff]
      %v961 = vld [vmem:[%s425 + $0x8] sm:$0xff]
      %v962 = vld [vmem:[%s425 + $0x10] sm:$0xff]
      %v963 = vld [vmem:[%s425 + $0x18] sm:$0xff]
      %v964 = vld [vmem:[%s425 + $0x20] sm:$0xff]
      %v965 = vld [vmem:[%s425 + $0x28] sm:$0xff]
      %v966 = vld [vmem:[%s425 + $0x30] sm:$0xff]
      %v967 = vld [vmem:[%s425 + $0x38] sm:$0xff]
      %v968 = vld [vmem:[%s425 + $0x40] sm:$0xff]
      %v969 = vld [vmem:[%s425 + $0x48] sm:$0xff]
      %v970 = vld [vmem:[%s2] sm:$0xff]
      %v971 = vld [vmem:[%s2 + $0x8] sm:$0xff]
      %v972 = vld [vmem:[%s2 + $0x10] sm:$0xff]
      %v973 = vld [vmem:[%s2 + $0x18] sm:$0xff]
      %v974 = vld [vmem:[%s2 + $0x20] sm:$0xff]
      %v975 = vld [vmem:[%s2 + $0x28] sm:$0xff]
      %v976 = vld [vmem:[%s2 + $0x30] sm:$0xff]
      %v977 = vld [vmem:[%s2 + $0x38] sm:$0xff]
      %v978 = vld [vmem:[%s2 + $0x40] sm:$0xff]
      %v979 = vld [vmem:[%s2 + $0x48] sm:$0xff]
      %v980 = vld [vmem:[%s2 + $0x50] sm:$0xff]
      %v981 = vld [vmem:[%s2 + $0x58] sm:$0xff]
      %v982 = vld [vmem:[%s2 + $0x60] sm:$0xff]
      %v983 = vld [vmem:[%s2 + $0x68] sm:$0xff]
      %v984 = vld [vmem:[%s2 + $0x70] sm:$0xff]
      %v985 = vld [vmem:[%s2 + $0x78] sm:$0xff]
      %v986 = vld [vmem:[%s2 + $0x80] sm:$0xff]
      %v987 = vld [vmem:[%s2 + $0x88] sm:$0xff]
      %v988 = vld [vmem:[%s2 + $0x90] sm:$0xff]
      %v989 = vld [vmem:[%s2 + $0x98] sm:$0xff]
      %v990 = vld [vmem:[%s2 + $0xa0] sm:$0xff]
      %v991 = vld [vmem:[%s2 + $0xa8] sm:$0xff]
      %v992 = vld [vmem:[%s2 + $0xb0] sm:$0xff]
      %v993 = vld [vmem:[%s2 + $0xb8] sm:$0xff]
      %v994 = vld [vmem:[%s2 + $0xc0] sm:$0xff]
      %v995 = vld [vmem:[%s2 + $0xc8] sm:$0xff]
      %v996 = vld [vmem:[%s2 + $0xd0] sm:$0xff]
      %v997 = vld [vmem:[%s2 + $0xd8] sm:$0xff]
      %v998 = vld [vmem:[%s2 + $0xe0] sm:$0xff]
      %v999 = vld [vmem:[%s2 + $0xe8] sm:$0xff]
      %v1000 = vld [vmem:[%s2 + $0xf0] sm:$0xff]
      %v1001 = vld [vmem:[%s2 + $0xf8] sm:$0xff]
      %v1002 = vld [vmem:[%s2 + $0x100] sm:$0xff]
      %v1003 = vld [vmem:[%s2 + $0x108] sm:$0xff]
      %v1004 = vld [vmem:[%s2 + $0x110] sm:$0xff]
      %v1005 = vld [vmem:[%s2 + $0x118] sm:$0xff]
      %v1006 = vld [vmem:[%s2 + $0x120] sm:$0xff]
      %v1007 = vld [vmem:[%s2 + $0x128] sm:$0xff]
      %v1008 = vld [vmem:[%s2 + $0x130] sm:$0xff]
      %v1009 = vld [vmem:[%s2 + $0x138] sm:$0xff]
      %v1010 = vld [vmem:[%s2 + $0x140] sm:$0xff]
      %v1011 = vld [vmem:[%s2 + $0x148] sm:$0xff]
      %v1012 = vld [vmem:[%s2 + $0x150] sm:$0xff]
      %v1013 = vld [vmem:[%s2 + $0x158] sm:$0xff]
      %v1014 = vld [vmem:[%s2 + $0x160] sm:$0xff]
      %v1015 = vld [vmem:[%s2 + $0x168] sm:$0xff]
      %v1016 = vld [vmem:[%s2 + $0x170] sm:$0xff]
      %v1017 = vld [vmem:[%s2 + $0x178] sm:$0xff]
      %v1018 = vld [vmem:[#allocation2] sm:$0xff]
      %v1019 = vld [vmem:[#allocation2 + $0x8] sm:$0xff]
      %v1020 = vld [vmem:[#allocation2 + $0x10] sm:$0xff]
      %v1021 = vld [vmem:[#allocation2 + $0x18] sm:$0xff]
      %v1022 = vld [vmem:[#allocation2 + $0x20] sm:$0xff]
      %v1023 = vld [vmem:[#allocation2 + $0x28] sm:$0xff]
      %v1024 = vld [vmem:[#allocation2 + $0x30] sm:$0xff]
      %v1025 = vld [vmem:[#allocation2 + $0x38] sm:$0xff]
      %v1026 = vld [vmem:[#allocation2 + $0x40] sm:$0xff]
      %v1027 = vld [vmem:[#allocation2 + $0x48] sm:$0xff]
      %v1028 = vld [vmem:[#allocation2 + $0x50] sm:$0xff]
      %v1029 = vld [vmem:[#allocation2 + $0x58] sm:$0xff]
      %v1030 = vld [vmem:[#allocation2 + $0x60] sm:$0xff]
      %v1031 = vld [vmem:[#allocation2 + $0x68] sm:$0xff]
      %v1032 = vld [vmem:[#allocation2 + $0x70] sm:$0xff]
      %v1033 = vld [vmem:[#allocation2 + $0x78] sm:$0xff]
      %v1034 = vld [vmem:[#allocation2 + $0x80] sm:$0xff]
      %v1035 = vld [vmem:[#allocation2 + $0x88] sm:$0xff]
      %v1036 = vld [vmem:[#allocation2 + $0x90] sm:$0xff]
      %v1037 = vld [vmem:[#allocation2 + $0x98] sm:$0xff]
      %v1038 = vld [vmem:[#allocation2 + $0xa0] sm:$0xff]
      %v1039 = vld [vmem:[#allocation2 + $0xa8] sm:$0xff]
      %v1040 = vld [vmem:[#allocation2 + $0xb0] sm:$0xff]
      %v1041 = vld [vmem:[#allocation2 + $0xb8] sm:$0xff]
      %v1042 = vld [vmem:[#allocation2 + $0xc0] sm:$0xff]
      %v1043 = vld [vmem:[#allocation2 + $0xc8] sm:$0xff]
      %v1044 = vld [vmem:[#allocation2 + $0xd0] sm:$0xff]
      %v1045 = vld [vmem:[#allocation2 + $0xd8] sm:$0xff]
      %v1046 = vld [vmem:[#allocation2 + $0xe0] sm:$0xff]
      %v1047 = vld [vmem:[#allocation2 + $0xe8] sm:$0xff]
      %v1048 = vld [vmem:[#allocation2 + $0xf0] sm:$0xff]
      %v1049 = vld [vmem:[#allocation2 + $0xf8] sm:$0xff]
      %v1050 = vld [vmem:[#allocation2 + $0x100] sm:$0xff]
      %v1051 = vld [vmem:[#allocation2 + $0x108] sm:$0xff]
      %v1052 = vld [vmem:[#allocation2 + $0x110] sm:$0xff]
      %v1053 = vld [vmem:[#allocation2 + $0x118] sm:$0xff]
      %v1054 = vld [vmem:[#allocation2 + $0x120] sm:$0xff]
      %v1055 = vld [vmem:[#allocation2 + $0x128] sm:$0xff]
      %v1056 = vld [vmem:[#allocation2 + $0x130] sm:$0xff]
      %v1057 = vld [vmem:[#allocation2 + $0x138] sm:$0xff]
      %v1058 = vld [vmem:[#allocation2 + $0x140] sm:$0xff]
      %v1059 = vld [vmem:[#allocation2 + $0x148] sm:$0xff]
      %v1060 = vld [vmem:[#allocation2 + $0x150] sm:$0xff]
      %v1061 = vld [vmem:[#allocation2 + $0x158] sm:$0xff]
      %v1062 = vld [vmem:[#allocation2 + $0x160] sm:$0xff]
      %v1063 = vld [vmem:[#allocation2 + $0x168] sm:$0xff]
      %v1064 = vld [vmem:[#allocation2 + $0x170] sm:$0xff]
      %v1065 = vld [vmem:[#allocation2 + $0x178] sm:$0xff]
      %v1066 = vld [vmem:[#allocation2 + $0x180] sm:$0xff]
      %v1067 = vld [vmem:[#allocation2 + $0x188] sm:$0xff]
      %v1068 = vld [vmem:[#allocation2 + $0x190] sm:$0xff]
      %v1069 = vld [vmem:[#allocation2 + $0x198] sm:$0xff]
      %v1070 = vld [vmem:[#allocation2 + $0x1a0] sm:$0xff]
      %v1071 = vld [vmem:[#allocation2 + $0x1a8] sm:$0xff]
      %v1072 = vld [vmem:[#allocation2 + $0x1b0] sm:$0xff]
      %v1073 = vld [vmem:[#allocation2 + $0x1b8] sm:$0xff]
      %v1074 = vld [vmem:[#allocation2 + $0x1c0] sm:$0xff]
      %v1075 = vld [vmem:[#allocation2 + $0x1c8] sm:$0xff]
      %v1076 = vld [vmem:[#allocation2 + $0x1d0] sm:$0xff]
      %v1077 = vld [vmem:[#allocation2 + $0x1d8] sm:$0xff]
      %v1078 = vld [vmem:[#allocation2 + $0x1e0] sm:$0xff]
      %v1079 = vld [vmem:[#allocation2 + $0x1e8] sm:$0xff]
      %v1080 = vld [vmem:[#allocation2 + $0x1f0] sm:$0xff]
      %v1081 = vld [vmem:[#allocation2 + $0x1f8] sm:$0xff]
      %v1082 = vld [vmem:[#allocation2 + $0x200] sm:$0xff]
      %v1083 = vld [vmem:[#allocation2 + $0x208] sm:$0xff]
      %v1084 = vld [vmem:[#allocation2 + $0x210] sm:$0xff]
      %v1085 = vld [vmem:[#allocation2 + $0x218] sm:$0xff]
      %v1086 = vld [vmem:[#allocation2 + $0x220] sm:$0xff]
      %v1087 = vld [vmem:[#allocation2 + $0x228] sm:$0xff]
      %v1088 = vld [vmem:[#allocation2 + $0x230] sm:$0xff]
      %v1089 = vld [vmem:[#allocation2 + $0x238] sm:$0xff]
      %vm1090 = vcmask 261120
      %v1092 = vsel %vm1090, %v972, 0
      %v1095 = vsel %vm1090, %v975, 0
      %v1098 = vsel %vm1090, %v978, 0
      %v1101 = vsel %vm1090, %v981, 0
      %v1104 = vsel %vm1090, %v984, 0
      %v1107 = vsel %vm1090, %v987, 0
      %v1110 = vsel %vm1090, %v990, 0
      %v1113 = vsel %vm1090, %v993, 0
      %v1116 = vsel %vm1090, %v996, 0
      %v1119 = vsel %vm1090, %v999, 0
      %v1122 = vsel %vm1090, %v1002, 0
      %v1125 = vsel %vm1090, %v1005, 0
      %v1128 = vsel %vm1090, %v1008, 0
      %v1131 = vsel %vm1090, %v1011, 0
      %v1134 = vsel %vm1090, %v1014, 0
      %v1137 = vsel %vm1090, %v1017, 0
      %1139 = vmatprep.subr.mxu0 %v1019
      %1140 = vmatpush1.msra.mxu0 %v1018
      %1141 = vmatprep.subr.mxu0 %v1021
      %1142 = vmatpush1.msra.mxu0 %v1020
      %1143 = vmatprep.subr.mxu0 %v1023
      %1144 = vmatpush1.msra.mxu0 %v1022
      %1145 = vmatprep.subr.mxu0 %v1025
      %1146 = vmatpush1.msra.mxu0 %v1024
      %1147 = vmatprep.subr.mxu0 %v1027
      %1148 = vmatpush1.msra.mxu0 %v1026
      %1149 = vmatprep.subr.mxu0 %v1029
      %1150 = vmatpush1.msra.mxu0 %v1028
      %1151 = vmatprep.subr.mxu0 %v1031
      %1152 = vmatpush1.msra.mxu0 %v1030
      %1153 = vmatprep.subr.mxu0 %v1033
      %1154 = vmatpush1.msra.mxu0 %v1032
      %1155 = vmatprep.subr.mxu0 %v1035
      %1156 = vmatpush1.msra.mxu0 %v1034
      %1157 = vmatprep.subr.mxu0 %v1037
      %1158 = vmatpush1.msra.mxu0 %v1036
      %1159 = vmatprep.subr.mxu0 %v1039
      %1160 = vmatpush1.msra.mxu0 %v1038
      %1161 = vmatprep.subr.mxu0 %v1041
      %1162 = vmatpush1.msra.mxu0 %v1040
      %1163 = vmatprep.subr.mxu0 %v1043
      %1164 = vmatpush1.msra.mxu0 %v1042
      %1165 = vmatprep.subr.mxu0 %v1045
      %1166 = vmatpush1.msra.mxu0 %v1044
      %1167 = vmatprep.subr.mxu0 %v1047
      %1168 = vmatpush1.msra.mxu0 %v1046
      %1169 = vmatprep.subr.mxu0 %v1049
      %1170 = vmatpush1.msra.mxu0 %v1048
      %1171 = vmatprep.subr.mxu0 %v1051
      %1172 = vmatpush1.msra.mxu0 %v1050
      %1173 = vmatprep.subr.mxu0 %v1053
      %1174 = vmatpush1.msra.mxu0 %v1052
      %1175 = vmatprep.subr.mxu0 %v1055
      %1176 = vmatpush1.msra.mxu0 %v1054
      %1177 = vmatprep.subr.mxu0 %v1057
      %1178 = vmatpush1.msra.mxu0 %v1056
      %1179 = vmatprep.subr.mxu0 %v1059
      %1180 = vmatpush1.msra.mxu0 %v1058
      %1181 = vmatprep.subr.mxu0 %v1061
      %1182 = vmatpush1.msra.mxu0 %v1060
      %1183 = vmatprep.subr.mxu0 %v1063
      %1184 = vmatpush1.msra.mxu0 %v1062
      %1185 = vmatprep.subr.mxu0 %v1065
      %1186 = vmatpush1.msra.mxu0 %v1064
      %1187 = vmatprep.subr.mxu0 %v1067
      %1188 = vmatpush1.msra.mxu0 %v1066
      %1189 = vmatprep.subr.mxu0 %v1069
      %1190 = vmatpush1.msra.mxu0 %v1068
      %1191 = vmatprep.subr.mxu0 %v1071
      %1192 = vmatpush1.msra.mxu0 %v1070
      %1193 = vmatprep.subr.mxu0 %v1073
      %1194 = vmatpush1.msra.mxu0 %v1072
      %1195 = vmatprep.subr.mxu0 %v1075
      %1196 = vmatpush1.msra.mxu0 %v1074
      %1197 = vmatprep.subr.mxu0 %v1077
      %1198 = vmatpush1.msra.mxu0 %v1076
      %1199 = vmatprep.subr.mxu0 %v1079
      %1200 = vmatpush1.msra.mxu0 %v1078
      %1201 = vmatprep.subr.mxu0 %v1081
      %1202 = vmatpush1.msra.mxu0 %v1080
      %1203 = vmatprep.mubr.f32.mxu0 %v971
      %1204 = vmatmul.mubr.f32.gmra.mrb[0].mxu0 %v970
      %v1205 = vpop.f32.mrb[0].mxu0
      %v1206 = vadd.f32 0.0, %v1205
      %v1207 = vpop.f32.mrb[0].mxu0
      %v1208 = vadd.f32 0.0, %v1207
      %1209 = vmatprep.mubr.f32.mxu0 %v974
      %1210 = vmatmul.mubr.f32.gmra.mrb[0].mxu0 %v973
      %v1211 = vpop.f32.mrb[0].mxu0
      %v1212 = vadd.f32 0.0, %v1211
      %v1213 = vpop.f32.mrb[0].mxu0
      %v1214 = vadd.f32 0.0, %v1213
      %1215 = vmatprep.mubr.f32.mxu0 %v977
      %1216 = vmatmul.mubr.f32.gmra.mrb[0].mxu0 %v976
      %v1217 = vpop.f32.mrb[0].mxu0
      %v1218 = vadd.f32 0.0, %v1217
      %v1219 = vpop.f32.mrb[0].mxu0
      %v1220 = vadd.f32 0.0, %v1219
      %1221 = vmatprep.mubr.f32.mxu0 %v980
      %1222 = vmatmul.mubr.f32.gmra.mrb[0].mxu0 %v979
      %v1223 = vpop.f32.mrb[0].mxu0
      %v1224 = vadd.f32 0.0, %v1223
      %v1225 = vpop.f32.mrb[0].mxu0
      %v1226 = vadd.f32 0.0, %v1225
      %1227 = vmatprep.mubr.f32.mxu0 %v983
      %1228 = vmatmul.mubr.f32.gmra.mrb[0].mxu0 %v982
      %v1229 = vpop.f32.mrb[0].mxu0
      %v1230 = vadd.f32 0.0, %v1229
      %v1231 = vpop.f32.mrb[0].mxu0
      %v1232 = vadd.f32 0.0, %v1231
      %1233 = vmatprep.mubr.f32.mxu0 %v986
      %1234 = vmatmul.mubr.f32.gmra.mrb[0].mxu0 %v985
      %v1235 = vpop.f32.mrb[0].mxu0
      %v1236 = vadd.f32 0.0, %v1235
      %v1237 = vpop.f32.mrb[0].mxu0
      %v1238 = vadd.f32 0.0, %v1237
      %1239 = vmatprep.mubr.f32.mxu0 %v989
      %1240 = vmatmul.mubr.f32.gmra.mrb[0].mxu0 %v988
      %v1241 = vpop.f32.mrb[0].mxu0
      %v1242 = vadd.f32 0.0, %v1241
      %v1243 = vpop.f32.mrb[0].mxu0
      %v1244 = vadd.f32 0.0, %v1243
      %1245 = vmatprep.mubr.f32.mxu0 %v992
      %1246 = vmatmul.mubr.f32.gmra.mrb[0].mxu0 %v991
      %v1247 = vpop.f32.mrb[0].mxu0
      %v1248 = vadd.f32 0.0, %v1247
      %v1249 = vpop.f32.mrb[0].mxu0
      %v1250 = vadd.f32 0.0, %v1249
      %1251 = vmatprep.mubr.f32.mxu0 %v995
      %1252 = vmatmul.mubr.f32.gmra.mrb[0].mxu0 %v994
      %v1253 = vpop.f32.mrb[0].mxu0
      %v1254 = vadd.f32 0.0, %v1253
      %v1255 = vpop.f32.mrb[0].mxu0
      %v1256 = vadd.f32 0.0, %v1255
      %1257 = vmatprep.mubr.f32.mxu0 %v998
      %1258 = vmatmul.mubr.f32.gmra.mrb[0].mxu0 %v997
      %v1259 = vpop.f32.mrb[0].mxu0
      %v1260 = vadd.f32 0.0, %v1259
      %v1261 = vpop.f32.mrb[0].mxu0
      %v1262 = vadd.f32 0.0, %v1261
      %1263 = vmatprep.mubr.f32.mxu0 %v1001
      %1264 = vmatmul.mubr.f32.gmra.mrb[0].mxu0 %v1000
      %v1265 = vpop.f32.mrb[0].mxu0
      %v1266 = vadd.f32 0.0, %v1265
      %v1267 = vpop.f32.mrb[0].mxu0
      %v1268 = vadd.f32 0.0, %v1267
      %1269 = vmatprep.mubr.f32.mxu0 %v1004
      %1270 = vmatmul.mubr.f32.gmra.mrb[0].mxu0 %v1003
      %v1271 = vpop.f32.mrb[0].mxu0
      %v1272 = vadd.f32 0.0, %v1271
      %v1273 = vpop.f32.mrb[0].mxu0
      %v1274 = vadd.f32 0.0, %v1273
      %1275 = vmatprep.mubr.f32.mxu0 %v1007
      %1276 = vmatmul.mubr.f32.gmra.mrb[0].mxu0 %v1006
      %v1277 = vpop.f32.mrb[0].mxu0
      %v1278 = vadd.f32 0.0, %v1277
      %v1279 = vpop.f32.mrb[0].mxu0
      %v1280 = vadd.f32 0.0, %v1279
      %1281 = vmatprep.mubr.f32.mxu0 %v1010
      %1282 = vmatmul.mubr.f32.gmra.mrb[0].mxu0 %v1009
      %v1283 = vpop.f32.mrb[0].mxu0
      %v1284 = vadd.f32 0.0, %v1283
      %v1285 = vpop.f32.mrb[0].mxu0
      %v1286 = vadd.f32 0.0, %v1285
      %1287 = vmatprep.mubr.f32.mxu0 %v1013
      %1288 = vmatmul.mubr.f32.gmra.mrb[0].mxu0 %v1012
      %v1289 = vpop.f32.mrb[0].mxu0
      %v1290 = vadd.f32 0.0, %v1289
      %v1291 = vpop.f32.mrb[0].mxu0
      %v1292 = vadd.f32 0.0, %v1291
      %1293 = vmatprep.mubr.f32.mxu0 %v1016
      %1294 = vmatmul.mubr.f32.gmra.mrb[0].mxu0 %v1015
      %v1295 = vpop.f32.mrb[0].mxu0
      %v1296 = vadd.f32 0.0, %v1295
      %v1297 = vpop.f32.mrb[0].mxu0
      %v1298 = vadd.f32 0.0, %v1297
      %1299 = vdwg.mxu0
      %1300 = vmatprep.subr.mxu0 %v1083
      %1301 = vmatpush1.msra.mxu0 %v1082
      %1302 = vmatprep.subr.mxu0 %v1085
      %1303 = vmatpush1.msra.mxu0 %v1084
      %1304 = vmatprep.subr.mxu0 %v1087
      %1305 = vmatpush1.msra.mxu0 %v1086
      %1306 = vmatprep.subr.mxu0 %v1089
      %1307 = vmatpush1.msra.mxu0 %v1088
      %1308 = vmatprep.subr.mxu0 0.0
      %1309 = vmatpush1.msra.mxu0 0.0
      %1310 = vmatprep.subr.mxu0 0.0
      %1311 = vmatpush1.msra.mxu0 0.0
      %1312 = vmatprep.subr.mxu0 0.0
      %1313 = vmatpush1.msra.mxu0 0.0
      %1314 = vmatprep.subr.mxu0 0.0
      %1315 = vmatpush1.msra.mxu0 0.0
      %1316 = vmatprep.subr.mxu0 0.0
      %1317 = vmatpush1.msra.mxu0 0.0
      %1318 = vmatprep.subr.mxu0 0.0
      %1319 = vmatpush1.msra.mxu0 0.0
      %1320 = vmatprep.subr.mxu0 0.0
      %1321 = vmatpush1.msra.mxu0 0.0
      %1322 = vmatprep.subr.mxu0 0.0
      %1323 = vmatpush1.msra.mxu0 0.0
      %1324 = vmatprep.subr.mxu0 0.0
      %1325 = vmatpush1.msra.mxu0 0.0
      %1326 = vmatprep.subr.mxu0 0.0
      %1327 = vmatpush1.msra.mxu0 0.0
      %1328 = vmatprep.subr.mxu0 0.0
      %1329 = vmatpush1.msra.mxu0 0.0
      %1330 = vmatprep.subr.mxu0 0.0
      %1331 = vmatpush1.msra.mxu0 0.0
      %1332 = vmatprep.subr.mxu0 0.0
      %1333 = vmatpush1.msra.mxu0 0.0
      %1334 = vmatprep.subr.mxu0 0.0
      %1335 = vmatpush1.msra.mxu0 0.0
      %1336 = vmatprep.subr.mxu0 0.0
      %1337 = vmatpush1.msra.mxu0 0.0
      %1338 = vmatprep.subr.mxu0 0.0
      %1339 = vmatpush1.msra.mxu0 0.0
      %1340 = vmatprep.subr.mxu0 0.0
      %1341 = vmatpush1.msra.mxu0 0.0
      %1342 = vmatprep.subr.mxu0 0.0
      %1343 = vmatpush1.msra.mxu0 0.0
      %1344 = vmatprep.subr.mxu0 0.0
      %1345 = vmatpush1.msra.mxu0 0.0
      %1346 = vmatprep.subr.mxu0 0.0
      %1347 = vmatpush1.msra.mxu0 0.0
      %1348 = vmatprep.subr.mxu0 0.0
      %1349 = vmatpush1.msra.mxu0 0.0
      %1350 = vmatprep.subr.mxu0 0.0
      %1351 = vmatpush1.msra.mxu0 0.0
      %1352 = vmatprep.subr.mxu0 0.0
      %1353 = vmatpush1.msra.mxu0 0.0
      %1354 = vmatprep.subr.mxu0 0.0
      %1355 = vmatpush1.msra.mxu0 0.0
      %1356 = vmatprep.subr.mxu0 0.0
      %1357 = vmatpush1.msra.mxu0 0.0
      %1358 = vmatprep.subr.mxu0 0.0
      %1359 = vmatpush1.msra.mxu0 0.0
      %1360 = vmatprep.subr.mxu0 0.0
      %1361 = vmatpush1.msra.mxu0 0.0
      %1362 = vmatprep.subr.mxu0 0.0
      %1363 = vmatpush1.msra.mxu0 0.0
      %1364 = vmatprep.mubr.f32.mxu0 0.0
      %1365 = vmatmul.mubr.f32.gmra.mrb[0].mxu0 %v1092
      %v1366 = vpop.f32.mrb[0].mxu0
      %v1367 = vadd.f32 %v1206, %v1366
      %v1368 = vpop.f32.mrb[0].mxu0
      %v1369 = vadd.f32 %v1208, %v1368
      %1370 = vmatprep.mubr.f32.mxu0 0.0
      %1371 = vmatmul.mubr.f32.gmra.mrb[0].mxu0 %v1095
      %v1372 = vpop.f32.mrb[0].mxu0
      %v1373 = vadd.f32 %v1212, %v1372
      %v1374 = vpop.f32.mrb[0].mxu0
      %v1375 = vadd.f32 %v1214, %v1374
      %1376 = vmatprep.mubr.f32.mxu0 0.0
      %1377 = vmatmul.mubr.f32.gmra.mrb[0].mxu0 %v1098
      %v1378 = vpop.f32.mrb[0].mxu0
      %v1379 = vadd.f32 %v1218, %v1378
      %v1380 = vpop.f32.mrb[0].mxu0
      %v1381 = vadd.f32 %v1220, %v1380
      %1382 = vmatprep.mubr.f32.mxu0 0.0
      %1383 = vmatmul.mubr.f32.gmra.mrb[0].mxu0 %v1101
      %v1384 = vpop.f32.mrb[0].mxu0
      %v1385 = vadd.f32 %v1224, %v1384
      %v1386 = vpop.f32.mrb[0].mxu0
      %v1387 = vadd.f32 %v1226, %v1386
      %1388 = vmatprep.mubr.f32.mxu0 0.0
      %1389 = vmatmul.mubr.f32.gmra.mrb[0].mxu0 %v1104
      %v1390 = vpop.f32.mrb[0].mxu0
      %v1391 = vadd.f32 %v1230, %v1390
      %v1392 = vpop.f32.mrb[0].mxu0
      %v1393 = vadd.f32 %v1232, %v1392
      %1394 = vmatprep.mubr.f32.mxu0 0.0
      %1395 = vmatmul.mubr.f32.gmra.mrb[0].mxu0 %v1107
      %v1396 = vpop.f32.mrb[0].mxu0
      %v1397 = vadd.f32 %v1236, %v1396
      %v1398 = vpop.f32.mrb[0].mxu0
      %v1399 = vadd.f32 %v1238, %v1398
      %1400 = vmatprep.mubr.f32.mxu0 0.0
      %1401 = vmatmul.mubr.f32.gmra.mrb[0].mxu0 %v1110
      %v1402 = vpop.f32.mrb[0].mxu0
      %v1403 = vadd.f32 %v1242, %v1402
      %v1404 = vpop.f32.mrb[0].mxu0
      %v1405 = vadd.f32 %v1244, %v1404
      %1406 = vmatprep.mubr.f32.mxu0 0.0
      %1407 = vmatmul.mubr.f32.gmra.mrb[0].mxu0 %v1113
      %v1408 = vpop.f32.mrb[0].mxu0
      %v1409 = vadd.f32 %v1248, %v1408
      %v1410 = vpop.f32.mrb[0].mxu0
      %v1411 = vadd.f32 %v1250, %v1410
      %1412 = vmatprep.mubr.f32.mxu0 0.0
      %1413 = vmatmul.mubr.f32.gmra.mrb[0].mxu0 %v1116
      %v1414 = vpop.f32.mrb[0].mxu0
      %v1415 = vadd.f32 %v1254, %v1414
      %v1416 = vpop.f32.mrb[0].mxu0
      %v1417 = vadd.f32 %v1256, %v1416
      %1418 = vmatprep.mubr.f32.mxu0 0.0
      %1419 = vmatmul.mubr.f32.gmra.mrb[0].mxu0 %v1119
      %v1420 = vpop.f32.mrb[0].mxu0
      %v1421 = vadd.f32 %v1260, %v1420
      %v1422 = vpop.f32.mrb[0].mxu0
      %v1423 = vadd.f32 %v1262, %v1422
      %1424 = vmatprep.mubr.f32.mxu0 0.0
      %1425 = vmatmul.mubr.f32.gmra.mrb[0].mxu0 %v1122
      %v1426 = vpop.f32.mrb[0].mxu0
      %v1427 = vadd.f32 %v1266, %v1426
      %v1428 = vpop.f32.mrb[0].mxu0
      %v1429 = vadd.f32 %v1268, %v1428
      %1430 = vmatprep.mubr.f32.mxu0 0.0
      %1431 = vmatmul.mubr.f32.gmra.mrb[0].mxu0 %v1125
      %v1432 = vpop.f32.mrb[0].mxu0
      %v1433 = vadd.f32 %v1272, %v1432
      %v1434 = vpop.f32.mrb[0].mxu0
      %v1435 = vadd.f32 %v1274, %v1434
      %1436 = vmatprep.mubr.f32.mxu0 0.0
      %1437 = vmatmul.mubr.f32.gmra.mrb[0].mxu0 %v1128
      %v1438 = vpop.f32.mrb[0].mxu0
      %v1439 = vadd.f32 %v1278, %v1438
      %v1440 = vpop.f32.mrb[0].mxu0
      %v1441 = vadd.f32 %v1280, %v1440
      %1442 = vmatprep.mubr.f32.mxu0 0.0
      %1443 = vmatmul.mubr.f32.gmra.mrb[0].mxu0 %v1131
      %v1444 = vpop.f32.mrb[0].mxu0
      %v1445 = vadd.f32 %v1284, %v1444
      %v1446 = vpop.f32.mrb[0].mxu0
      %v1447 = vadd.f32 %v1286, %v1446
      %1448 = vmatprep.mubr.f32.mxu0 0.0
      %1449 = vmatmul.mubr.f32.gmra.mrb[0].mxu0 %v1134
      %v1450 = vpop.f32.mrb[0].mxu0
      %v1451 = vadd.f32 %v1290, %v1450
      %v1452 = vpop.f32.mrb[0].mxu0
      %v1453 = vadd.f32 %v1292, %v1452
      %1454 = vmatprep.mubr.f32.mxu0 0.0
      %1455 = vmatmul.mubr.f32.gmra.mrb[0].mxu0 %v1137
      %v1456 = vpop.f32.mrb[0].mxu0
      %v1457 = vadd.f32 %v1296, %v1456
      %v1458 = vpop.f32.mrb[0].mxu0
      %v1459 = vadd.f32 %v1298, %v1458
      %1460 = vdwg.mxu0
      %vm1461 = vcmask 326656
      %v1463 = vsel %vm1461, %v944, 0
      %v1466 = vsel %vm1461, %v945, 0
      %v1469 = vsel %vm1461, %v946, 0
      %v1472 = vsel %vm1461, %v947, 0
      %v1475 = vsel %vm1461, %v948, 0
      %v1478 = vsel %vm1461, %v949, 0
      %v1481 = vsel %vm1461, %v950, 0
      %v1484 = vsel %vm1461, %v951, 0
      %v1487 = vsel %vm1461, %v952, 0
      %v1490 = vsel %vm1461, %v953, 0
      %v1493 = vsel %vm1461, %v954, 0
      %v1496 = vsel %vm1461, %v955, 0
      %v1499 = vsel %vm1461, %v956, 0
      %v1502 = vsel %vm1461, %v957, 0
      %v1505 = vsel %vm1461, %v958, 0
      %v1508 = vsel %vm1461, %v959, 0
      %1510 = vmatprep.subr.mxu0 %v961
      %1511 = vmatpush1.msra.mxu0 %v960
      %1512 = vmatprep.subr.mxu0 %v963
      %1513 = vmatpush1.msra.mxu0 %v962
      %1514 = vmatprep.subr.mxu0 %v965
      %1515 = vmatpush1.msra.mxu0 %v964
      %1516 = vmatprep.subr.mxu0 %v967
      %1517 = vmatpush1.msra.mxu0 %v966
      %1518 = vmatprep.subr.mxu0 %v969
      %1519 = vmatpush1.msra.mxu0 %v968
      %1520 = vmatprep.subr.mxu0 0.0
      %1521 = vmatpush1.msra.mxu0 0.0
      %1522 = vmatprep.subr.mxu0 0.0
      %1523 = vmatpush1.msra.mxu0 0.0
      %1524 = vmatprep.subr.mxu0 0.0
      %1525 = vmatpush1.msra.mxu0 0.0
      %1526 = vmatprep.subr.mxu0 0.0
      %1527 = vmatpush1.msra.mxu0 0.0
      %1528 = vmatprep.subr.mxu0 0.0
      %1529 = vmatpush1.msra.mxu0 0.0
      %1530 = vmatprep.subr.mxu0 0.0
      %1531 = vmatpush1.msra.mxu0 0.0
      %1532 = vmatprep.subr.mxu0 0.0
      %1533 = vmatpush1.msra.mxu0 0.0
      %1534 = vmatprep.subr.mxu0 0.0
      %1535 = vmatpush1.msra.mxu0 0.0
      %1536 = vmatprep.subr.mxu0 0.0
      %1537 = vmatpush1.msra.mxu0 0.0
      %1538 = vmatprep.subr.mxu0 0.0
      %1539 = vmatpush1.msra.mxu0 0.0
      %1540 = vmatprep.subr.mxu0 0.0
      %1541 = vmatpush1.msra.mxu0 0.0
      %1542 = vmatprep.subr.mxu0 0.0
      %1543 = vmatpush1.msra.mxu0 0.0
      %1544 = vmatprep.subr.mxu0 0.0
      %1545 = vmatpush1.msra.mxu0 0.0
      %1546 = vmatprep.subr.mxu0 0.0
      %1547 = vmatpush1.msra.mxu0 0.0
      %1548 = vmatprep.subr.mxu0 0.0
      %1549 = vmatpush1.msra.mxu0 0.0
      %1550 = vmatprep.subr.mxu0 0.0
      %1551 = vmatpush1.msra.mxu0 0.0
      %1552 = vmatprep.subr.mxu0 0.0
      %1553 = vmatpush1.msra.mxu0 0.0
      %1554 = vmatprep.subr.mxu0 0.0
      %1555 = vmatpush1.msra.mxu0 0.0
      %1556 = vmatprep.subr.mxu0 0.0
      %1557 = vmatpush1.msra.mxu0 0.0
      %1558 = vmatprep.subr.mxu0 0.0
      %1559 = vmatpush1.msra.mxu0 0.0
      %1560 = vmatprep.subr.mxu0 0.0
      %1561 = vmatpush1.msra.mxu0 0.0
      %1562 = vmatprep.subr.mxu0 0.0
      %1563 = vmatpush1.msra.mxu0 0.0
      %1564 = vmatprep.subr.mxu0 0.0
      %1565 = vmatpush1.msra.mxu0 0.0
      %1566 = vmatprep.subr.mxu0 0.0
      %1567 = vmatpush1.msra.mxu0 0.0
      %1568 = vmatprep.subr.mxu0 0.0
      %1569 = vmatpush1.msra.mxu0 0.0
      %1570 = vmatprep.subr.mxu0 0.0
      %1571 = vmatpush1.msra.mxu0 0.0
      %1572 = vmatprep.subr.mxu0 0.0
      %1573 = vmatpush1.msra.mxu0 0.0
      %1574 = vmatprep.mubr.f32.mxu0 0.0
      %1575 = vmatmul.mubr.f32.gmra.mrb[0].mxu0 %v1463
      %v1576 = vpop.f32.mrb[0].mxu0
      %v1577 = vadd.f32 %v1367, %v1576
      %v1578 = vpop.f32.mrb[0].mxu0
      %v1579 = vadd.f32 %v1369, %v1578
      %1580 = vmatprep.mubr.f32.mxu0 0.0
      %1581 = vmatmul.mubr.f32.gmra.mrb[0].mxu0 %v1466
      %v1582 = vpop.f32.mrb[0].mxu0
      %v1583 = vadd.f32 %v1373, %v1582
      %v1584 = vpop.f32.mrb[0].mxu0
      %v1585 = vadd.f32 %v1375, %v1584
      %1586 = vmatprep.mubr.f32.mxu0 0.0
      %1587 = vmatmul.mubr.f32.gmra.mrb[0].mxu0 %v1469
      %v1588 = vpop.f32.mrb[0].mxu0
      %v1589 = vadd.f32 %v1379, %v1588
      %v1590 = vpop.f32.mrb[0].mxu0
      %v1591 = vadd.f32 %v1381, %v1590
      %1592 = vmatprep.mubr.f32.mxu0 0.0
      %1593 = vmatmul.mubr.f32.gmra.mrb[0].mxu0 %v1472
      %v1594 = vpop.f32.mrb[0].mxu0
      %v1595 = vadd.f32 %v1385, %v1594
      %v1596 = vpop.f32.mrb[0].mxu0
      %v1597 = vadd.f32 %v1387, %v1596
      %1598 = vmatprep.mubr.f32.mxu0 0.0
      %1599 = vmatmul.mubr.f32.gmra.mrb[0].mxu0 %v1475
      %v1600 = vpop.f32.mrb[0].mxu0
      %v1601 = vadd.f32 %v1391, %v1600
      %v1602 = vpop.f32.mrb[0].mxu0
      %v1603 = vadd.f32 %v1393, %v1602
      %1604 = vmatprep.mubr.f32.mxu0 0.0
      %1605 = vmatmul.mubr.f32.gmra.mrb[0].mxu0 %v1478
      %v1606 = vpop.f32.mrb[0].mxu0
      %v1607 = vadd.f32 %v1397, %v1606
      %v1608 = vpop.f32.mrb[0].mxu0
      %v1609 = vadd.f32 %v1399, %v1608
      %1610 = vmatprep.mubr.f32.mxu0 0.0
      %1611 = vmatmul.mubr.f32.gmra.mrb[0].mxu0 %v1481
      %v1612 = vpop.f32.mrb[0].mxu0
      %v1613 = vadd.f32 %v1403, %v1612
      %v1614 = vpop.f32.mrb[0].mxu0
      %v1615 = vadd.f32 %v1405, %v1614
      %1616 = vmatprep.mubr.f32.mxu0 0.0
      %1617 = vmatmul.mubr.f32.gmra.mrb[0].mxu0 %v1484
      %v1618 = vpop.f32.mrb[0].mxu0
      %v1619 = vadd.f32 %v1409, %v1618
      %v1620 = vpop.f32.mrb[0].mxu0
      %v1621 = vadd.f32 %v1411, %v1620
      %1622 = vmatprep.mubr.f32.mxu0 0.0
      %1623 = vmatmul.mubr.f32.gmra.mrb[0].mxu0 %v1487
      %v1624 = vpop.f32.mrb[0].mxu0
      %v1625 = vadd.f32 %v1415, %v1624
      %v1626 = vpop.f32.mrb[0].mxu0
      %v1627 = vadd.f32 %v1417, %v1626
      %1628 = vmatprep.mubr.f32.mxu0 0.0
      %1629 = vmatmul.mubr.f32.gmra.mrb[0].mxu0 %v1490
      %v1630 = vpop.f32.mrb[0].mxu0
      %v1631 = vadd.f32 %v1421, %v1630
      %v1632 = vpop.f32.mrb[0].mxu0
      %v1633 = vadd.f32 %v1423, %v1632
      %1634 = vmatprep.mubr.f32.mxu0 0.0
      %1635 = vmatmul.mubr.f32.gmra.mrb[0].mxu0 %v1493
      %v1636 = vpop.f32.mrb[0].mxu0
      %v1637 = vadd.f32 %v1427, %v1636
      %v1638 = vpop.f32.mrb[0].mxu0
      %v1639 = vadd.f32 %v1429, %v1638
      %1640 = vmatprep.mubr.f32.mxu0 0.0
      %1641 = vmatmul.mubr.f32.gmra.mrb[0].mxu0 %v1496
      %v1642 = vpop.f32.mrb[0].mxu0
      %v1643 = vadd.f32 %v1433, %v1642
      %v1644 = vpop.f32.mrb[0].mxu0
      %v1645 = vadd.f32 %v1435, %v1644
      %1646 = vmatprep.mubr.f32.mxu0 0.0
      %1647 = vmatmul.mubr.f32.gmra.mrb[0].mxu0 %v1499
      %v1648 = vpop.f32.mrb[0].mxu0
      %v1649 = vadd.f32 %v1439, %v1648
      %v1650 = vpop.f32.mrb[0].mxu0
      %v1651 = vadd.f32 %v1441, %v1650
      %1652 = vmatprep.mubr.f32.mxu0 0.0
      %1653 = vmatmul.mubr.f32.gmra.mrb[0].mxu0 %v1502
      %v1654 = vpop.f32.mrb[0].mxu0
      %v1655 = vadd.f32 %v1445, %v1654
      %v1656 = vpop.f32.mrb[0].mxu0
      %v1657 = vadd.f32 %v1447, %v1656
      %1658 = vmatprep.mubr.f32.mxu0 0.0
      %1659 = vmatmul.mubr.f32.gmra.mrb[0].mxu0 %v1505
      %v1660 = vpop.f32.mrb[0].mxu0
      %v1661 = vadd.f32 %v1451, %v1660
      %v1662 = vpop.f32.mrb[0].mxu0
      %v1663 = vadd.f32 %v1453, %v1662
      %1664 = vmatprep.mubr.f32.mxu0 0.0
      %1665 = vmatmul.mubr.f32.gmra.mrb[0].mxu0 %v1508
      %v1666 = vpop.f32.mrb[0].mxu0
      %v1667 = vadd.f32 %v1457, %v1666
      %v1668 = vpop.f32.mrb[0].mxu0
      %v1669 = vadd.f32 %v1459, %v1668
      %1670 = vdwg.mxu0
      %v1671 = vld [vmem:[%s4] sm:$0xff]
      %v1672 = vld [vmem:[%s4 + $0x8] sm:$0xff]
      %v1673 = vld [vmem:[%s4 + $0x10] sm:$0xff]
      %v1674 = vld [vmem:[%s4 + $0x18] sm:$0xff]
      %v1675 = vld [vmem:[%s4 + $0x20] sm:$0xff]
      %v1676 = vld [vmem:[%s4 + $0x28] sm:$0xff]
      %v1677 = vld [vmem:[%s4 + $0x30] sm:$0xff]
      %v1678 = vld [vmem:[%s4 + $0x38] sm:$0xff]
      %v1679 = vld [vmem:[%s4 + $0x40] sm:$0xff]
      %v1680 = vld [vmem:[%s4 + $0x48] sm:$0xff]
      %v1681 = vld [vmem:[%s4 + $0x50] sm:$0xff]
      %v1682 = vld [vmem:[%s4 + $0x58] sm:$0xff]
      %v1683 = vld [vmem:[%s4 + $0x60] sm:$0xff]
      %v1684 = vld [vmem:[%s4 + $0x68] sm:$0xff]
      %v1685 = vld [vmem:[%s4 + $0x70] sm:$0xff]
      %v1686 = vld [vmem:[%s4 + $0x78] sm:$0xff]
      %1688 = vset.pattern.permute.xlu0 0
      %1689 = vperm.xlu0 %1688, %v1671
      %v1690 = vpop.permute.xlu0 %1689
      %1693 = vset.pattern.permute.xlu0 0
      %1694 = vperm.xlu0 %1693, %v1672
      %v1695 = vpop.permute.xlu0 %1694
      %1698 = vset.pattern.permute.xlu0 0
      %1699 = vperm.xlu0 %1698, %v1673
      %v1700 = vpop.permute.xlu0 %1699
      %1703 = vset.pattern.permute.xlu0 0
      %1704 = vperm.xlu0 %1703, %v1674
      %v1705 = vpop.permute.xlu0 %1704
      %1708 = vset.pattern.permute.xlu0 0
      %1709 = vperm.xlu0 %1708, %v1675
      %v1710 = vpop.permute.xlu0 %1709
      %1713 = vset.pattern.permute.xlu0 0
      %1714 = vperm.xlu0 %1713, %v1676
      %v1715 = vpop.permute.xlu0 %1714
      %1718 = vset.pattern.permute.xlu0 0
      %1719 = vperm.xlu0 %1718, %v1677
      %v1720 = vpop.permute.xlu0 %1719
      %1723 = vset.pattern.permute.xlu0 0
      %1724 = vperm.xlu0 %1723, %v1678
      %v1725 = vpop.permute.xlu0 %1724
      %1728 = vset.pattern.permute.xlu0 0
      %1729 = vperm.xlu0 %1728, %v1679
      %v1730 = vpop.permute.xlu0 %1729
      %1733 = vset.pattern.permute.xlu0 0
      %1734 = vperm.xlu0 %1733, %v1680
      %v1735 = vpop.permute.xlu0 %1734
      %1738 = vset.pattern.permute.xlu0 0
      %1739 = vperm.xlu0 %1738, %v1681
      %v1740 = vpop.permute.xlu0 %1739
      %1743 = vset.pattern.permute.xlu0 0
      %1744 = vperm.xlu0 %1743, %v1682
      %v1745 = vpop.permute.xlu0 %1744
      %1748 = vset.pattern.permute.xlu0 0
      %1749 = vperm.xlu0 %1748, %v1683
      %v1750 = vpop.permute.xlu0 %1749
      %1753 = vset.pattern.permute.xlu0 0
      %1754 = vperm.xlu0 %1753, %v1684
      %v1755 = vpop.permute.xlu0 %1754
      %1758 = vset.pattern.permute.xlu0 0
      %1759 = vperm.xlu0 %1758, %v1685
      %v1760 = vpop.permute.xlu0 %1759
      %1763 = vset.pattern.permute.xlu0 0
      %1764 = vperm.xlu0 %1763, %v1686
      %v1765 = vpop.permute.xlu0 %1764
      %v1767 = vadd.f32 %v1577, %v1690
      %v1768 = vadd.f32 %v1579, %v1690
      %v1769 = vadd.f32 %v1583, %v1695
      %v1770 = vadd.f32 %v1585, %v1695
      %v1771 = vadd.f32 %v1589, %v1700
      %v1772 = vadd.f32 %v1591, %v1700
      %v1773 = vadd.f32 %v1595, %v1705
      %v1774 = vadd.f32 %v1597, %v1705
      %v1775 = vadd.f32 %v1601, %v1710
      %v1776 = vadd.f32 %v1603, %v1710
      %v1777 = vadd.f32 %v1607, %v1715
      %v1778 = vadd.f32 %v1609, %v1715
      %v1779 = vadd.f32 %v1613, %v1720
      %v1780 = vadd.f32 %v1615, %v1720
      %v1781 = vadd.f32 %v1619, %v1725
      %v1782 = vadd.f32 %v1621, %v1725
      %v1783 = vadd.f32 %v1625, %v1730
      %v1784 = vadd.f32 %v1627, %v1730
      %v1785 = vadd.f32 %v1631, %v1735
      %v1786 = vadd.f32 %v1633, %v1735
      %v1787 = vadd.f32 %v1637, %v1740
      %v1788 = vadd.f32 %v1639, %v1740
      %v1789 = vadd.f32 %v1643, %v1745
      %v1790 = vadd.f32 %v1645, %v1745
      %v1791 = vadd.f32 %v1649, %v1750
      %v1792 = vadd.f32 %v1651, %v1750
      %v1793 = vadd.f32 %v1655, %v1755
      %v1794 = vadd.f32 %v1657, %v1755
      %v1795 = vadd.f32 %v1661, %v1760
      %v1796 = vadd.f32 %v1663, %v1760
      %v1797 = vadd.f32 %v1667, %v1765
      %v1798 = vadd.f32 %v1669, %v1765
      %v1799 = vmul.f32 %v1767, 0.5
      %v1800 = vmul.f32 %v1768, 0.5
      %v1801 = vmul.f32 %v1769, 0.5
      %v1802 = vmul.f32 %v1770, 0.5
      %v1803 = vmul.f32 %v1771, 0.5
      %v1804 = vmul.f32 %v1772, 0.5
      %v1805 = vmul.f32 %v1773, 0.5
      %v1806 = vmul.f32 %v1774, 0.5
      %v1807 = vtanh.pop %v1799
      %v1808 = vtanh.pop %v1800
      %v1809 = vtanh.pop %v1801
      %v1810 = vtanh.pop %v1802
      %v1811 = vtanh.pop %v1803
      %v1812 = vtanh.pop %v1804
      %v1813 = vtanh.pop %v1805
      %v1814 = vtanh.pop %v1806
      %v1815 = vmul.f32 %v1807, 0.5
      %v1816 = vmul.f32 %v1808, 0.5
      %v1817 = vmul.f32 %v1809, 0.5
      %v1818 = vmul.f32 %v1810, 0.5
      %v1819 = vmul.f32 %v1811, 0.5
      %v1820 = vmul.f32 %v1812, 0.5
      %v1821 = vmul.f32 %v1813, 0.5
      %v1822 = vmul.f32 %v1814, 0.5
      %v1823 = vadd.f32 %v1815, 0.5
      %v1824 = vadd.f32 %v1816, 0.5
      %v1825 = vadd.f32 %v1817, 0.5
      %v1826 = vadd.f32 %v1818, 0.5
      %v1827 = vadd.f32 %v1819, 0.5
      %v1828 = vadd.f32 %v1820, 0.5
      %v1829 = vadd.f32 %v1821, 0.5
      %v1830 = vadd.f32 %v1822, 0.5
      %v1831 = vmul.f32 %v1775, 0.5
      %v1832 = vmul.f32 %v1776, 0.5
      %v1833 = vmul.f32 %v1777, 0.5
      %v1834 = vmul.f32 %v1778, 0.5
      %v1835 = vmul.f32 %v1779, 0.5
      %v1836 = vmul.f32 %v1780, 0.5
      %v1837 = vmul.f32 %v1781, 0.5
      %v1838 = vmul.f32 %v1782, 0.5
      %v1839 = vtanh.pop %v1831
      %v1840 = vtanh.pop %v1832
      %v1841 = vtanh.pop %v1833
      %v1842 = vtanh.pop %v1834
      %v1843 = vtanh.pop %v1835
      %v1844 = vtanh.pop %v1836
      %v1845 = vtanh.pop %v1837
      %v1846 = vtanh.pop %v1838
      %v1847 = vmul.f32 %v1839, 0.5
      %v1848 = vmul.f32 %v1840, 0.5
      %v1849 = vmul.f32 %v1841, 0.5
      %v1850 = vmul.f32 %v1842, 0.5
      %v1851 = vmul.f32 %v1843, 0.5
      %v1852 = vmul.f32 %v1844, 0.5
      %v1853 = vmul.f32 %v1845, 0.5
      %v1854 = vmul.f32 %v1846, 0.5
      %v1855 = vadd.f32 %v1847, 0.5
      %v1856 = vadd.f32 %v1848, 0.5
      %v1857 = vadd.f32 %v1849, 0.5
      %v1858 = vadd.f32 %v1850, 0.5
      %v1859 = vadd.f32 %v1851, 0.5
      %v1860 = vadd.f32 %v1852, 0.5
      %v1861 = vadd.f32 %v1853, 0.5
      %v1862 = vadd.f32 %v1854, 0.5
      %v1863 = vmul.f32 %v1783, 0.5
      %v1864 = vmul.f32 %v1784, 0.5
      %v1865 = vmul.f32 %v1785, 0.5
      %v1866 = vmul.f32 %v1786, 0.5
      %v1867 = vmul.f32 %v1787, 0.5
      %v1868 = vmul.f32 %v1788, 0.5
      %v1869 = vmul.f32 %v1789, 0.5
      %v1870 = vmul.f32 %v1790, 0.5
      %v1871 = vtanh.pop %v1863
      %v1872 = vtanh.pop %v1864
      %v1873 = vtanh.pop %v1865
      %v1874 = vtanh.pop %v1866
      %v1875 = vtanh.pop %v1867
      %v1876 = vtanh.pop %v1868
      %v1877 = vtanh.pop %v1869
      %v1878 = vtanh.pop %v1870
      %v1879 = vmul.f32 %v1871, 0.5
      %v1880 = vmul.f32 %v1872, 0.5
      %v1881 = vmul.f32 %v1873, 0.5
      %v1882 = vmul.f32 %v1874, 0.5
      %v1883 = vmul.f32 %v1875, 0.5
      %v1884 = vmul.f32 %v1876, 0.5
      %v1885 = vmul.f32 %v1877, 0.5
      %v1886 = vmul.f32 %v1878, 0.5
      %v1887 = vadd.f32 %v1879, 0.5
      %v1888 = vadd.f32 %v1880, 0.5
      %v1889 = vadd.f32 %v1881, 0.5
      %v1890 = vadd.f32 %v1882, 0.5
      %v1891 = vadd.f32 %v1883, 0.5
      %v1892 = vadd.f32 %v1884, 0.5
      %v1893 = vadd.f32 %v1885, 0.5
      %v1894 = vadd.f32 %v1886, 0.5
      %v1895 = vtanh.pop %v1791
      %v1896 = vtanh.pop %v1792
      %v1897 = vtanh.pop %v1793
      %v1898 = vtanh.pop %v1794
      %v1899 = vtanh.pop %v1795
      %v1900 = vtanh.pop %v1796
      %v1901 = vtanh.pop %v1797
      %v1902 = vtanh.pop %v1798
      %v1903 = vmul.f32 %v1855, %v474
      %v1904 = vmul.f32 %v1856, %v475
      %v1905 = vmul.f32 %v1857, %v476
      %v1906 = vmul.f32 %v1858, %v477
      %v1907 = vmul.f32 %v1859, %v478
      %v1908 = vmul.f32 %v1860, %v479
      %v1909 = vmul.f32 %v1861, %v480
      %v1910 = vmul.f32 %v1862, %v481
      %v1911 = vmul.f32 %v1823, %v1895
      %v1912 = vmul.f32 %v1824, %v1896
      %v1913 = vmul.f32 %v1825, %v1897
      %v1914 = vmul.f32 %v1826, %v1898
      %v1915 = vmul.f32 %v1827, %v1899
      %v1916 = vmul.f32 %v1828, %v1900
      %v1917 = vmul.f32 %v1829, %v1901
      %v1918 = vmul.f32 %v1830, %v1902
      %v1919 = vadd.f32 %v1903, %v1911
      %v1920 = vadd.f32 %v1904, %v1912
      %v1921 = vadd.f32 %v1905, %v1913
      %v1922 = vadd.f32 %v1906, %v1914
      %v1923 = vadd.f32 %v1907, %v1915
      %v1924 = vadd.f32 %v1908, %v1916
      %v1925 = vadd.f32 %v1909, %v1917
      %v1926 = vadd.f32 %v1910, %v1918
      %v1927 = vtanh.pop %v1919
      %v1928 = vtanh.pop %v1920
      %v1929 = vtanh.pop %v1921
      %v1930 = vtanh.pop %v1922
      %v1931 = vtanh.pop %v1923
      %v1932 = vtanh.pop %v1924
      %v1933 = vtanh.pop %v1925
      %v1934 = vtanh.pop %v1926
      %v1935 = vmul.f32 %v1887, %v1927
      %v1936 = vmul.f32 %v1888, %v1928
      %v1937 = vmul.f32 %v1889, %v1929
      %v1938 = vmul.f32 %v1890, %v1930
      %v1939 = vmul.f32 %v1891, %v1931
      %v1940 = vmul.f32 %v1892, %v1932
      %v1941 = vmul.f32 %v1893, %v1933
      %v1942 = vmul.f32 %v1894, %v1934
      %1943 = vst [vmem:[%s12] sm:$0xff] %v1919
      %1944 = vst [vmem:[%s12 + $0x8] sm:$0xff] %v1920
      %1945 = vst [vmem:[%s12 + $0x10] sm:$0xff] %v1921
      %1946 = vst [vmem:[%s12 + $0x18] sm:$0xff] %v1922
      %1947 = vst [vmem:[%s12 + $0x20] sm:$0xff] %v1923
      %1948 = vst [vmem:[%s12 + $0x28] sm:$0xff] %v1924
      %1949 = vst [vmem:[%s12 + $0x30] sm:$0xff] %v1925
      %1950 = vst [vmem:[%s12 + $0x38] sm:$0xff] %v1926
      %1951 = vst [vmem:[%s10] sm:$0xff] %v1935
      %1952 = vst [vmem:[%s10 + $0x8] sm:$0xff] %v1936
      %1953 = vst [vmem:[%s10 + $0x10] sm:$0xff] %v1937
      %1954 = vst [vmem:[%s10 + $0x18] sm:$0xff] %v1938
      %1955 = vst [vmem:[%s10 + $0x20] sm:$0xff] %v1939
      %1956 = vst [vmem:[%s10 + $0x28] sm:$0xff] %v1940
      %1957 = vst [vmem:[%s10 + $0x30] sm:$0xff] %v1941
      %1958 = vst [vmem:[%s10 + $0x38] sm:$0xff] %v1942
      %v1959 = vld [vmem:[%s11] sm:$0xff]
      %v1960 = vld [vmem:[%s11 + $0x8] sm:$0xff]
      %v1961 = vld [vmem:[%s11 + $0x10] sm:$0xff]
      %v1962 = vld [vmem:[%s11 + $0x18] sm:$0xff]
      %v1963 = vld [vmem:[%s11 + $0x20] sm:$0xff]
      %v1964 = vld [vmem:[%s11 + $0x28] sm:$0xff]
      %v1965 = vld [vmem:[%s11 + $0x30] sm:$0xff]
      %v1966 = vld [vmem:[%s11 + $0x38] sm:$0xff]
      %v1967 = vld [vmem:[%s13] sm:$0xff]
      %v1968 = vld [vmem:[%s13 + $0x8] sm:$0xff]
      %v1969 = vld [vmem:[%s13 + $0x10] sm:$0xff]
      %v1970 = vld [vmem:[%s13 + $0x18] sm:$0xff]
      %v1971 = vld [vmem:[%s13 + $0x20] sm:$0xff]
      %v1972 = vld [vmem:[%s13 + $0x28] sm:$0xff]
      %v1973 = vld [vmem:[%s13 + $0x30] sm:$0xff]
      %v1974 = vld [vmem:[%s13 + $0x38] sm:$0xff]
      %v1975 = vld [vmem:[%s8] ss:$8 sm:$0x3]
      %1976 = vrot.lane.b32.xlu0 %v1935, 17
      %v1977 = vpop.permute.xlu0 %1976
      %1978 = vrot.lane.b32.xlu0 %v1937, 17
      %v1979 = vpop.permute.xlu0 %1978
      %1980 = vrot.lane.b32.xlu0 %v1939, 17
      %v1981 = vpop.permute.xlu0 %1980
      %1982 = vrot.lane.b32.xlu0 %v1941, 17
      %v1983 = vpop.permute.xlu0 %1982
      %1984 = vrot.lane.b32.xlu0 %v1936, 17
      %v1985 = vpop.permute.xlu0 %1984
      %1986 = vrot.lane.b32.xlu0 %v1938, 17
      %v1987 = vpop.permute.xlu0 %1986
      %1988 = vrot.lane.b32.xlu0 %v1940, 17
      %v1989 = vpop.permute.xlu0 %1988
      %1990 = vrot.lane.b32.xlu0 %v1942, 17
      %v1991 = vpop.permute.xlu0 %1990
      %v1992 = vsel %vm501, %v1977, %v1985
      %v1993 = vsel %vm501, %v1979, %v1987
      %v1994 = vsel %vm501, %v1981, %v1989
      %v1995 = vsel %vm501, %v1983, %v1991
      %v1996 = vsel %vm501, %v1985, %v1977
      %v1997 = vsel %vm501, %v1987, %v1979
      %v1998 = vsel %vm501, %v1989, %v1981
      %v1999 = vsel %vm501, %v1991, %v1983
      %v2001 = vlaneseq
      %v2002 = vshrl.u32 %v2001, 7
      %v2003 = vsub.s32 0, %v2002
      %v2004 = vrot.slane %v1975, %v2003
      %v2005 = vlaneseq
      %v2006 = vshrl.u32 %v2005, 7
      %v2007 = vsub.s32 1, %v2006
      %v2008 = vrot.slane %v1975, %v2007
      %v2011 = vmul.f32 %v1996, %v2004
      %v2012 = vmul.f32 %v1992, %v2008
      %v2013 = vmul.f32 %v1997, %v2004
      %v2014 = vmul.f32 %v1993, %v2008
      %v2015 = vmul.f32 %v1998, %v2004
      %v2016 = vmul.f32 %v1994, %v2008
      %v2017 = vmul.f32 %v1999, %v2004
      %v2018 = vmul.f32 %v1995, %v2008
      %2019 = vst [vmem:[#allocation3] sm:$0xff] %v2011
      %2020 = vst [vmem:[#allocation3 + $0x8] sm:$0xff] %v2012
      %2021 = vst [vmem:[#allocation3 + $0x10] sm:$0xff] %v2013
      %2022 = vst [vmem:[#allocation3 + $0x18] sm:$0xff] %v2014
      %2023 = vst [vmem:[#allocation3 + $0x20] sm:$0xff] %v2015
      %2024 = vst [vmem:[#allocation3 + $0x28] sm:$0xff] %v2016
      %2025 = vst [vmem:[#allocation3 + $0x30] sm:$0xff] %v2017
      %2026 = vst [vmem:[#allocation3 + $0x38] sm:$0xff] %v2018
      %2027 = vrot.lane.b32.xlu0 %v1959, 17
      %v2028 = vpop.permute.xlu0 %2027
      %2029 = vrot.lane.b32.xlu0 %v1961, 17
      %v2030 = vpop.permute.xlu0 %2029
      %2031 = vrot.lane.b32.xlu0 %v1963, 17
      %v2032 = vpop.permute.xlu0 %2031
      %2033 = vrot.lane.b32.xlu0 %v1965, 17
      %v2034 = vpop.permute.xlu0 %2033
      %2035 = vrot.lane.b32.xlu0 %v1960, 17
      %v2036 = vpop.permute.xlu0 %2035
      %2037 = vrot.lane.b32.xlu0 %v1962, 17
      %v2038 = vpop.permute.xlu0 %2037
      %2039 = vrot.lane.b32.xlu0 %v1964, 17
      %v2040 = vpop.permute.xlu0 %2039
      %2041 = vrot.lane.b32.xlu0 %v1966, 17
      %v2042 = vpop.permute.xlu0 %2041
      %v2043 = vsel %vm501, %v2028, %v2036
      %v2044 = vsel %vm501, %v2030, %v2038
      %v2045 = vsel %vm501, %v2032, %v2040
      %v2046 = vsel %vm501, %v2034, %v2042
      %v2047 = vsel %vm501, %v2036, %v2028
      %v2048 = vsel %vm501, %v2038, %v2030
      %v2049 = vsel %vm501, %v2040, %v2032
      %v2050 = vsel %vm501, %v2042, %v2034
      %v2051 = vmul.f32 %v2047, %v2004
      %v2052 = vmul.f32 %v2043, %v2008
      %v2053 = vmul.f32 %v2048, %v2004
      %v2054 = vmul.f32 %v2044, %v2008
      %v2055 = vmul.f32 %v2049, %v2004
      %v2056 = vmul.f32 %v2045, %v2008
      %v2057 = vmul.f32 %v2050, %v2004
      %v2058 = vmul.f32 %v2046, %v2008
      %2059 = vst [vmem:[#allocation3 + $0x40] sm:$0xff] %v2051
      %2060 = vst [vmem:[#allocation3 + $0x48] sm:$0xff] %v2052
      %2061 = vst [vmem:[#allocation3 + $0x50] sm:$0xff] %v2053
      %2062 = vst [vmem:[#allocation3 + $0x58] sm:$0xff] %v2054
      %2063 = vst [vmem:[#allocation3 + $0x60] sm:$0xff] %v2055
      %2064 = vst [vmem:[#allocation3 + $0x68] sm:$0xff] %v2056
      %2065 = vst [vmem:[#allocation3 + $0x70] sm:$0xff] %v2057
      %2066 = vst [vmem:[#allocation3 + $0x78] sm:$0xff] %v2058
      %v2067 = vld [vmem:[%s537] ss:$8 sm:$0x3]
      %2068 = vrot.lane.b32.xlu0 %v1935, 16
      %v2069 = vpop.permute.xlu0 %2068
      %2070 = vrot.lane.b32.xlu0 %v1937, 16
      %v2071 = vpop.permute.xlu0 %2070
      %2072 = vrot.lane.b32.xlu0 %v1939, 16
      %v2073 = vpop.permute.xlu0 %2072
      %2074 = vrot.lane.b32.xlu0 %v1941, 16
      %v2075 = vpop.permute.xlu0 %2074
      %2076 = vrot.lane.b32.xlu0 %v1936, 16
      %v2077 = vpop.permute.xlu0 %2076
      %2078 = vrot.lane.b32.xlu0 %v1938, 16
      %v2079 = vpop.permute.xlu0 %2078
      %2080 = vrot.lane.b32.xlu0 %v1940, 16
      %v2081 = vpop.permute.xlu0 %2080
      %2082 = vrot.lane.b32.xlu0 %v1942, 16
      %v2083 = vpop.permute.xlu0 %2082
      %v2084 = vsel %vm555, %v2069, %v2077
      %v2085 = vsel %vm555, %v2071, %v2079
      %v2086 = vsel %vm555, %v2073, %v2081
      %v2087 = vsel %vm555, %v2075, %v2083
      %v2088 = vsel %vm555, %v2077, %v2069
      %v2089 = vsel %vm555, %v2079, %v2071
      %v2090 = vsel %vm555, %v2081, %v2073
      %v2091 = vsel %vm555, %v2083, %v2075
      %v2093 = vlaneseq
      %v2094 = vshrl.u32 %v2093, 7
      %v2095 = vsub.s32 0, %v2094
      %v2096 = vrot.slane %v2067, %v2095
      %v2097 = vlaneseq
      %v2098 = vshrl.u32 %v2097, 7
      %v2099 = vsub.s32 1, %v2098
      %v2100 = vrot.slane %v2067, %v2099
      %v2103 = vmul.f32 %v2088, %v2096
      %v2104 = vmul.f32 %v2084, %v2100
      %v2105 = vmul.f32 %v2089, %v2096
      %v2106 = vmul.f32 %v2085, %v2100
      %v2107 = vmul.f32 %v2090, %v2096
      %v2108 = vmul.f32 %v2086, %v2100
      %v2109 = vmul.f32 %v2091, %v2096
      %v2110 = vmul.f32 %v2087, %v2100
      %2111 = vst [vmem:[#allocation3 + $0x80] sm:$0xff] %v2103
      %2112 = vst [vmem:[#allocation3 + $0x88] sm:$0xff] %v2104
      %2113 = vst [vmem:[#allocation3 + $0x90] sm:$0xff] %v2105
      %2114 = vst [vmem:[#allocation3 + $0x98] sm:$0xff] %v2106
      %2115 = vst [vmem:[#allocation3 + $0xa0] sm:$0xff] %v2107
      %2116 = vst [vmem:[#allocation3 + $0xa8] sm:$0xff] %v2108
      %2117 = vst [vmem:[#allocation3 + $0xb0] sm:$0xff] %v2109
      %2118 = vst [vmem:[#allocation3 + $0xb8] sm:$0xff] %v2110
      %2119 = vrot.lane.b32.xlu0 %v1959, 16
      %v2120 = vpop.permute.xlu0 %2119
      %2121 = vrot.lane.b32.xlu0 %v1961, 16
      %v2122 = vpop.permute.xlu0 %2121
      %2123 = vrot.lane.b32.xlu0 %v1963, 16
      %v2124 = vpop.permute.xlu0 %2123
      %2125 = vrot.lane.b32.xlu0 %v1965, 16
      %v2126 = vpop.permute.xlu0 %2125
      %2127 = vrot.lane.b32.xlu0 %v1960, 16
      %v2128 = vpop.permute.xlu0 %2127
      %2129 = vrot.lane.b32.xlu0 %v1962, 16
      %v2130 = vpop.permute.xlu0 %2129
      %2131 = vrot.lane.b32.xlu0 %v1964, 16
      %v2132 = vpop.permute.xlu0 %2131
      %2133 = vrot.lane.b32.xlu0 %v1966, 16
      %v2134 = vpop.permute.xlu0 %2133
      %v2135 = vsel %vm555, %v2120, %v2128
      %v2136 = vsel %vm555, %v2122, %v2130
      %v2137 = vsel %vm555, %v2124, %v2132
      %v2138 = vsel %vm555, %v2126, %v2134
      %v2139 = vsel %vm555, %v2128, %v2120
      %v2140 = vsel %vm555, %v2130, %v2122
      %v2141 = vsel %vm555, %v2132, %v2124
      %v2142 = vsel %vm555, %v2134, %v2126
      %v2143 = vmul.f32 %v2139, %v2096
      %v2144 = vmul.f32 %v2135, %v2100
      %v2145 = vmul.f32 %v2140, %v2096
      %v2146 = vmul.f32 %v2136, %v2100
      %v2147 = vmul.f32 %v2141, %v2096
      %v2148 = vmul.f32 %v2137, %v2100
      %v2149 = vmul.f32 %v2142, %v2096
      %v2150 = vmul.f32 %v2138, %v2100
      %2151 = vst [vmem:[#allocation3 + $0xc0] sm:$0xff] %v2143
      %2152 = vst [vmem:[#allocation3 + $0xc8] sm:$0xff] %v2144
      %2153 = vst [vmem:[#allocation3 + $0xd0] sm:$0xff] %v2145
      %2154 = vst [vmem:[#allocation3 + $0xd8] sm:$0xff] %v2146
      %2155 = vst [vmem:[#allocation3 + $0xe0] sm:$0xff] %v2147
      %2156 = vst [vmem:[#allocation3 + $0xe8] sm:$0xff] %v2148
      %2157 = vst [vmem:[#allocation3 + $0xf0] sm:$0xff] %v2149
      %2158 = vst [vmem:[#allocation3 + $0xf8] sm:$0xff] %v2150
      %v2159 = vld [vmem:[%s591] ss:$8 sm:$0x3]
      %2160 = vrot.lane.b32.xlu0 %v1935, 15
      %v2161 = vpop.permute.xlu0 %2160
      %2162 = vrot.lane.b32.xlu0 %v1937, 15
      %v2163 = vpop.permute.xlu0 %2162
      %2164 = vrot.lane.b32.xlu0 %v1939, 15
      %v2165 = vpop.permute.xlu0 %2164
      %2166 = vrot.lane.b32.xlu0 %v1941, 15
      %v2167 = vpop.permute.xlu0 %2166
      %2168 = vrot.lane.b32.xlu0 %v1936, 15
      %v2169 = vpop.permute.xlu0 %2168
      %2170 = vrot.lane.b32.xlu0 %v1938, 15
      %v2171 = vpop.permute.xlu0 %2170
      %2172 = vrot.lane.b32.xlu0 %v1940, 15
      %v2173 = vpop.permute.xlu0 %2172
      %2174 = vrot.lane.b32.xlu0 %v1942, 15
      %v2175 = vpop.permute.xlu0 %2174
      %v2176 = vsel %vm609, %v2161, %v2169
      %v2177 = vsel %vm609, %v2163, %v2171
      %v2178 = vsel %vm609, %v2165, %v2173
      %v2179 = vsel %vm609, %v2167, %v2175
      %v2180 = vsel %vm609, %v2169, %v2161
      %v2181 = vsel %vm609, %v2171, %v2163
      %v2182 = vsel %vm609, %v2173, %v2165
      %v2183 = vsel %vm609, %v2175, %v2167
      %v2185 = vlaneseq
      %v2186 = vshrl.u32 %v2185, 7
      %v2187 = vsub.s32 0, %v2186
      %v2188 = vrot.slane %v2159, %v2187
      %v2189 = vlaneseq
      %v2190 = vshrl.u32 %v2189, 7
      %v2191 = vsub.s32 1, %v2190
      %v2192 = vrot.slane %v2159, %v2191
      %v2195 = vmul.f32 %v2180, %v2188
      %v2196 = vmul.f32 %v2176, %v2192
      %v2197 = vmul.f32 %v2181, %v2188
      %v2198 = vmul.f32 %v2177, %v2192
      %v2199 = vmul.f32 %v2182, %v2188
      %v2200 = vmul.f32 %v2178, %v2192
      %v2201 = vmul.f32 %v2183, %v2188
      %v2202 = vmul.f32 %v2179, %v2192
      %2203 = vst [vmem:[#allocation3 + $0x100] sm:$0xff] %v2195
      %2204 = vst [vmem:[#allocation3 + $0x108] sm:$0xff] %v2196
      %2205 = vst [vmem:[#allocation3 + $0x110] sm:$0xff] %v2197
      %2206 = vst [vmem:[#allocation3 + $0x118] sm:$0xff] %v2198
      %2207 = vst [vmem:[#allocation3 + $0x120] sm:$0xff] %v2199
      %2208 = vst [vmem:[#allocation3 + $0x128] sm:$0xff] %v2200
      %2209 = vst [vmem:[#allocation3 + $0x130] sm:$0xff] %v2201
      %2210 = vst [vmem:[#allocation3 + $0x138] sm:$0xff] %v2202
      %2211 = vrot.lane.b32.xlu0 %v1959, 15
      %v2212 = vpop.permute.xlu0 %2211
      %2213 = vrot.lane.b32.xlu0 %v1961, 15
      %v2214 = vpop.permute.xlu0 %2213
      %2215 = vrot.lane.b32.xlu0 %v1963, 15
      %v2216 = vpop.permute.xlu0 %2215
      %2217 = vrot.lane.b32.xlu0 %v1965, 15
      %v2218 = vpop.permute.xlu0 %2217
      %2219 = vrot.lane.b32.xlu0 %v1960, 15
      %v2220 = vpop.permute.xlu0 %2219
      %2221 = vrot.lane.b32.xlu0 %v1962, 15
      %v2222 = vpop.permute.xlu0 %2221
      %2223 = vrot.lane.b32.xlu0 %v1964, 15
      %v2224 = vpop.permute.xlu0 %2223
      %2225 = vrot.lane.b32.xlu0 %v1966, 15
      %v2226 = vpop.permute.xlu0 %2225
      %v2227 = vsel %vm609, %v2212, %v2220
      %v2228 = vsel %vm609, %v2214, %v2222
      %v2229 = vsel %vm609, %v2216, %v2224
      %v2230 = vsel %vm609, %v2218, %v2226
      %v2231 = vsel %vm609, %v2220, %v2212
      %v2232 = vsel %vm609, %v2222, %v2214
      %v2233 = vsel %vm609, %v2224, %v2216
      %v2234 = vsel %vm609, %v2226, %v2218
      %v2235 = vmul.f32 %v2231, %v2188
      %v2236 = vmul.f32 %v2227, %v2192
      %v2237 = vmul.f32 %v2232, %v2188
      %v2238 = vmul.f32 %v2228, %v2192
      %v2239 = vmul.f32 %v2233, %v2188
      %v2240 = vmul.f32 %v2229, %v2192
      %v2241 = vmul.f32 %v2234, %v2188
      %v2242 = vmul.f32 %v2230, %v2192
      %2243 = vst [vmem:[#allocation3 + $0x140] sm:$0xff] %v2235
      %2244 = vst [vmem:[#allocation3 + $0x148] sm:$0xff] %v2236
      %2245 = vst [vmem:[#allocation3 + $0x150] sm:$0xff] %v2237
      %2246 = vst [vmem:[#allocation3 + $0x158] sm:$0xff] %v2238
      %2247 = vst [vmem:[#allocation3 + $0x160] sm:$0xff] %v2239
      %2248 = vst [vmem:[#allocation3 + $0x168] sm:$0xff] %v2240
      %2249 = vst [vmem:[#allocation3 + $0x170] sm:$0xff] %v2241
      %2250 = vst [vmem:[#allocation3 + $0x178] sm:$0xff] %v2242
      %v2251 = vld [vmem:[%s645] ss:$8 sm:$0x3]
      %2252 = vrot.lane.b32.xlu0 %v1935, 1
      %v2253 = vpop.permute.xlu0 %2252
      %2254 = vrot.lane.b32.xlu0 %v1937, 1
      %v2255 = vpop.permute.xlu0 %2254
      %2256 = vrot.lane.b32.xlu0 %v1939, 1
      %v2257 = vpop.permute.xlu0 %2256
      %2258 = vrot.lane.b32.xlu0 %v1941, 1
      %v2259 = vpop.permute.xlu0 %2258
      %2260 = vrot.lane.b32.xlu0 %v1936, 1
      %v2261 = vpop.permute.xlu0 %2260
      %2262 = vrot.lane.b32.xlu0 %v1938, 1
      %v2263 = vpop.permute.xlu0 %2262
      %2264 = vrot.lane.b32.xlu0 %v1940, 1
      %v2265 = vpop.permute.xlu0 %2264
      %2266 = vrot.lane.b32.xlu0 %v1942, 1
      %v2267 = vpop.permute.xlu0 %2266
      %v2268 = vsel %vm663, %v2253, %v2261
      %v2269 = vsel %vm663, %v2255, %v2263
      %v2270 = vsel %vm663, %v2257, %v2265
      %v2271 = vsel %vm663, %v2259, %v2267
      %v2272 = vsel %vm663, %v2261, %v2253
      %v2273 = vsel %vm663, %v2263, %v2255
      %v2274 = vsel %vm663, %v2265, %v2257
      %v2275 = vsel %vm663, %v2267, %v2259
      %v2277 = vlaneseq
      %v2278 = vshrl.u32 %v2277, 7
      %v2279 = vsub.s32 0, %v2278
      %v2280 = vrot.slane %v2251, %v2279
      %v2281 = vlaneseq
      %v2282 = vshrl.u32 %v2281, 7
      %v2283 = vsub.s32 1, %v2282
      %v2284 = vrot.slane %v2251, %v2283
      %v2287 = vmul.f32 %v2272, %v2280
      %v2288 = vmul.f32 %v2268, %v2284
      %v2289 = vmul.f32 %v2273, %v2280
      %v2290 = vmul.f32 %v2269, %v2284
      %v2291 = vmul.f32 %v2274, %v2280
      %v2292 = vmul.f32 %v2270, %v2284
      %v2293 = vmul.f32 %v2275, %v2280
      %v2294 = vmul.f32 %v2271, %v2284
      %2295 = vst [vmem:[#allocation3 + $0x180] sm:$0xff] %v2287
      %2296 = vst [vmem:[#allocation3 + $0x188] sm:$0xff] %v2288
      %2297 = vst [vmem:[#allocation3 + $0x190] sm:$0xff] %v2289
      %2298 = vst [vmem:[#allocation3 + $0x198] sm:$0xff] %v2290
      %2299 = vst [vmem:[#allocation3 + $0x1a0] sm:$0xff] %v2291
      %2300 = vst [vmem:[#allocation3 + $0x1a8] sm:$0xff] %v2292
      %2301 = vst [vmem:[#allocation3 + $0x1b0] sm:$0xff] %v2293
      %2302 = vst [vmem:[#allocation3 + $0x1b8] sm:$0xff] %v2294
      %2303 = vrot.lane.b32.xlu0 %v1959, 1
      %v2304 = vpop.permute.xlu0 %2303
      %2305 = vrot.lane.b32.xlu0 %v1961, 1
      %v2306 = vpop.permute.xlu0 %2305
      %2307 = vrot.lane.b32.xlu0 %v1963, 1
      %v2308 = vpop.permute.xlu0 %2307
      %2309 = vrot.lane.b32.xlu0 %v1965, 1
      %v2310 = vpop.permute.xlu0 %2309
      %2311 = vrot.lane.b32.xlu0 %v1960, 1
      %v2312 = vpop.permute.xlu0 %2311
      %2313 = vrot.lane.b32.xlu0 %v1962, 1
      %v2314 = vpop.permute.xlu0 %2313
      %2315 = vrot.lane.b32.xlu0 %v1964, 1
      %v2316 = vpop.permute.xlu0 %2315
      %2317 = vrot.lane.b32.xlu0 %v1966, 1
      %v2318 = vpop.permute.xlu0 %2317
      %v2319 = vsel %vm663, %v2304, %v2312
      %v2320 = vsel %vm663, %v2306, %v2314
      %v2321 = vsel %vm663, %v2308, %v2316
      %v2322 = vsel %vm663, %v2310, %v2318
      %v2323 = vsel %vm663, %v2312, %v2304
      %v2324 = vsel %vm663, %v2314, %v2306
      %v2325 = vsel %vm663, %v2316, %v2308
      %v2326 = vsel %vm663, %v2318, %v2310
      %v2327 = vmul.f32 %v2323, %v2280
      %v2328 = vmul.f32 %v2319, %v2284
      %v2329 = vmul.f32 %v2324, %v2280
      %v2330 = vmul.f32 %v2320, %v2284
      %v2331 = vmul.f32 %v2325, %v2280
      %v2332 = vmul.f32 %v2321, %v2284
      %v2333 = vmul.f32 %v2326, %v2280
      %v2334 = vmul.f32 %v2322, %v2284
      %2335 = vst [vmem:[#allocation3 + $0x1c0] sm:$0xff] %v2327
      %2336 = vst [vmem:[#allocation3 + $0x1c8] sm:$0xff] %v2328
      %2337 = vst [vmem:[#allocation3 + $0x1d0] sm:$0xff] %v2329
      %2338 = vst [vmem:[#allocation3 + $0x1d8] sm:$0xff] %v2330
      %2339 = vst [vmem:[#allocation3 + $0x1e0] sm:$0xff] %v2331
      %2340 = vst [vmem:[#allocation3 + $0x1e8] sm:$0xff] %v2332
      %2341 = vst [vmem:[#allocation3 + $0x1f0] sm:$0xff] %v2333
      %2342 = vst [vmem:[#allocation3 + $0x1f8] sm:$0xff] %v2334
      %v2343 = vld [vmem:[%s699] ss:$8 sm:$0x3]
      %v2345 = vlaneseq
      %v2346 = vshrl.u32 %v2345, 7
      %v2347 = vsub.s32 0, %v2346
      %v2348 = vrot.slane %v2343, %v2347
      %v2349 = vlaneseq
      %v2350 = vshrl.u32 %v2349, 7
      %v2351 = vsub.s32 1, %v2350
      %v2352 = vrot.slane %v2343, %v2351
      %v2355 = vmul.f32 %v1935, %v2348
      %v2356 = vmul.f32 %v1936, %v2352
      %v2357 = vmul.f32 %v1937, %v2348
      %v2358 = vmul.f32 %v1938, %v2352
      %v2359 = vmul.f32 %v1939, %v2348
      %v2360 = vmul.f32 %v1940, %v2352
      %v2361 = vmul.f32 %v1941, %v2348
      %v2362 = vmul.f32 %v1942, %v2352
      %2363 = vst [vmem:[#allocation3 + $0x200] sm:$0xff] %v2355
      %2364 = vst [vmem:[#allocation3 + $0x208] sm:$0xff] %v2356
      %2365 = vst [vmem:[#allocation3 + $0x210] sm:$0xff] %v2357
      %2366 = vst [vmem:[#allocation3 + $0x218] sm:$0xff] %v2358
      %2367 = vst [vmem:[#allocation3 + $0x220] sm:$0xff] %v2359
      %2368 = vst [vmem:[#allocation3 + $0x228] sm:$0xff] %v2360
      %2369 = vst [vmem:[#allocation3 + $0x230] sm:$0xff] %v2361
      %2370 = vst [vmem:[#allocation3 + $0x238] sm:$0xff] %v2362
      %v2371 = vmul.f32 %v1959, %v2348
      %v2372 = vmul.f32 %v1960, %v2352
      %v2373 = vmul.f32 %v1961, %v2348
      %v2374 = vmul.f32 %v1962, %v2352
      %v2375 = vmul.f32 %v1963, %v2348
      %v2376 = vmul.f32 %v1964, %v2352
      %v2377 = vmul.f32 %v1965, %v2348
      %v2378 = vmul.f32 %v1966, %v2352
      %2379 = vst [vmem:[#allocation3 + $0x240] sm:$0xff] %v2371
      %2380 = vst [vmem:[#allocation3 + $0x248] sm:$0xff] %v2372
      %2381 = vst [vmem:[#allocation3 + $0x250] sm:$0xff] %v2373
      %2382 = vst [vmem:[#allocation3 + $0x258] sm:$0xff] %v2374
      %2383 = vst [vmem:[#allocation3 + $0x260] sm:$0xff] %v2375
      %2384 = vst [vmem:[#allocation3 + $0x268] sm:$0xff] %v2376
      %2385 = vst [vmem:[#allocation3 + $0x270] sm:$0xff] %v2377
      %2386 = vst [vmem:[#allocation3 + $0x278] sm:$0xff] %v2378
      %v2387 = vld [vmem:[%s728] ss:$8 sm:$0x3]
      %2388 = vrot.lane.b32.xlu0 %v1935, 127
      %v2389 = vpop.permute.xlu0 %2388
      %2390 = vrot.lane.b32.xlu0 %v1937, 127
      %v2391 = vpop.permute.xlu0 %2390
      %2392 = vrot.lane.b32.xlu0 %v1939, 127
      %v2393 = vpop.permute.xlu0 %2392
      %2394 = vrot.lane.b32.xlu0 %v1941, 127
      %v2395 = vpop.permute.xlu0 %2394
      %2396 = vrot.lane.b32.xlu0 %v1936, 127
      %v2397 = vpop.permute.xlu0 %2396
      %2398 = vrot.lane.b32.xlu0 %v1938, 127
      %v2399 = vpop.permute.xlu0 %2398
      %2400 = vrot.lane.b32.xlu0 %v1940, 127
      %v2401 = vpop.permute.xlu0 %2400
      %2402 = vrot.lane.b32.xlu0 %v1942, 127
      %v2403 = vpop.permute.xlu0 %2402
      %v2404 = vsel %vm746, %v2389, %v2397
      %v2405 = vsel %vm746, %v2391, %v2399
      %v2406 = vsel %vm746, %v2393, %v2401
      %v2407 = vsel %vm746, %v2395, %v2403
      %v2408 = vsel %vm746, %v2397, %v2389
      %v2409 = vsel %vm746, %v2399, %v2391
      %v2410 = vsel %vm746, %v2401, %v2393
      %v2411 = vsel %vm746, %v2403, %v2395
      %v2413 = vlaneseq
      %v2414 = vshrl.u32 %v2413, 7
      %v2415 = vsub.s32 0, %v2414
      %v2416 = vrot.slane %v2387, %v2415
      %v2417 = vlaneseq
      %v2418 = vshrl.u32 %v2417, 7
      %v2419 = vsub.s32 1, %v2418
      %v2420 = vrot.slane %v2387, %v2419
      %v2423 = vmul.f32 %v2404, %v2416
      %v2424 = vmul.f32 %v2408, %v2420
      %v2425 = vmul.f32 %v2405, %v2416
      %v2426 = vmul.f32 %v2409, %v2420
      %v2427 = vmul.f32 %v2406, %v2416
      %v2428 = vmul.f32 %v2410, %v2420
      %v2429 = vmul.f32 %v2407, %v2416
      %v2430 = vmul.f32 %v2411, %v2420
      %2431 = vst [vmem:[#allocation3 + $0x280] sm:$0xff] %v2423
      %2432 = vst [vmem:[#allocation3 + $0x288] sm:$0xff] %v2424
      %2433 = vst [vmem:[#allocation3 + $0x290] sm:$0xff] %v2425
      %2434 = vst [vmem:[#allocation3 + $0x298] sm:$0xff] %v2426
      %2435 = vst [vmem:[#allocation3 + $0x2a0] sm:$0xff] %v2427
      %2436 = vst [vmem:[#allocation3 + $0x2a8] sm:$0xff] %v2428
      %2437 = vst [vmem:[#allocation3 + $0x2b0] sm:$0xff] %v2429
      %2438 = vst [vmem:[#allocation3 + $0x2b8] sm:$0xff] %v2430
      %2439 = vrot.lane.b32.xlu0 %v1959, 127
      %v2440 = vpop.permute.xlu0 %2439
      %2441 = vrot.lane.b32.xlu0 %v1961, 127
      %v2442 = vpop.permute.xlu0 %2441
      %2443 = vrot.lane.b32.xlu0 %v1963, 127
      %v2444 = vpop.permute.xlu0 %2443
      %2445 = vrot.lane.b32.xlu0 %v1965, 127
      %v2446 = vpop.permute.xlu0 %2445
      %2447 = vrot.lane.b32.xlu0 %v1960, 127
      %v2448 = vpop.permute.xlu0 %2447
      %2449 = vrot.lane.b32.xlu0 %v1962, 127
      %v2450 = vpop.permute.xlu0 %2449
      %2451 = vrot.lane.b32.xlu0 %v1964, 127
      %v2452 = vpop.permute.xlu0 %2451
      %2453 = vrot.lane.b32.xlu0 %v1966, 127
      %v2454 = vpop.permute.xlu0 %2453
      %v2455 = vsel %vm746, %v2440, %v2448
      %v2456 = vsel %vm746, %v2442, %v2450
      %v2457 = vsel %vm746, %v2444, %v2452
      %v2458 = vsel %vm746, %v2446, %v2454
      %v2459 = vsel %vm746, %v2448, %v2440
      %v2460 = vsel %vm746, %v2450, %v2442
      %v2461 = vsel %vm746, %v2452, %v2444
      %v2462 = vsel %vm746, %v2454, %v2446
      %v2463 = vmul.f32 %v2455, %v2416
      %v2464 = vmul.f32 %v2459, %v2420
      %v2465 = vmul.f32 %v2456, %v2416
      %v2466 = vmul.f32 %v2460, %v2420
      %v2467 = vmul.f32 %v2457, %v2416
      %v2468 = vmul.f32 %v2461, %v2420
      %v2469 = vmul.f32 %v2458, %v2416
      %v2470 = vmul.f32 %v2462, %v2420
      %2471 = vst [vmem:[#allocation3 + $0x2c0] sm:$0xff] %v2463
      %2472 = vst [vmem:[#allocation3 + $0x2c8] sm:$0xff] %v2464
      %2473 = vst [vmem:[#allocation3 + $0x2d0] sm:$0xff] %v2465
      %2474 = vst [vmem:[#allocation3 + $0x2d8] sm:$0xff] %v2466
      %2475 = vst [vmem:[#allocation3 + $0x2e0] sm:$0xff] %v2467
      %2476 = vst [vmem:[#allocation3 + $0x2e8] sm:$0xff] %v2468
      %2477 = vst [vmem:[#allocation3 + $0x2f0] sm:$0xff] %v2469
      %2478 = vst [vmem:[#allocation3 + $0x2f8] sm:$0xff] %v2470
      %v2479 = vld [vmem:[%s782] ss:$8 sm:$0x3]
      %2480 = vrot.lane.b32.xlu0 %v1935, 113
      %v2481 = vpop.permute.xlu0 %2480
      %2482 = vrot.lane.b32.xlu0 %v1937, 113
      %v2483 = vpop.permute.xlu0 %2482
      %2484 = vrot.lane.b32.xlu0 %v1939, 113
      %v2485 = vpop.permute.xlu0 %2484
      %2486 = vrot.lane.b32.xlu0 %v1941, 113
      %v2487 = vpop.permute.xlu0 %2486
      %2488 = vrot.lane.b32.xlu0 %v1936, 113
      %v2489 = vpop.permute.xlu0 %2488
      %2490 = vrot.lane.b32.xlu0 %v1938, 113
      %v2491 = vpop.permute.xlu0 %2490
      %2492 = vrot.lane.b32.xlu0 %v1940, 113
      %v2493 = vpop.permute.xlu0 %2492
      %2494 = vrot.lane.b32.xlu0 %v1942, 113
      %v2495 = vpop.permute.xlu0 %2494
      %v2496 = vsel %vm800, %v2481, %v2489
      %v2497 = vsel %vm800, %v2483, %v2491
      %v2498 = vsel %vm800, %v2485, %v2493
      %v2499 = vsel %vm800, %v2487, %v2495
      %v2500 = vsel %vm800, %v2489, %v2481
      %v2501 = vsel %vm800, %v2491, %v2483
      %v2502 = vsel %vm800, %v2493, %v2485
      %v2503 = vsel %vm800, %v2495, %v2487
      %v2505 = vlaneseq
      %v2506 = vshrl.u32 %v2505, 7
      %v2507 = vsub.s32 0, %v2506
      %v2508 = vrot.slane %v2479, %v2507
      %v2509 = vlaneseq
      %v2510 = vshrl.u32 %v2509, 7
      %v2511 = vsub.s32 1, %v2510
      %v2512 = vrot.slane %v2479, %v2511
      %v2515 = vmul.f32 %v2496, %v2508
      %v2516 = vmul.f32 %v2500, %v2512
      %v2517 = vmul.f32 %v2497, %v2508
      %v2518 = vmul.f32 %v2501, %v2512
      %v2519 = vmul.f32 %v2498, %v2508
      %v2520 = vmul.f32 %v2502, %v2512
      %v2521 = vmul.f32 %v2499, %v2508
      %v2522 = vmul.f32 %v2503, %v2512
      %2523 = vst [vmem:[#allocation3 + $0x300] sm:$0xff] %v2515
      %2524 = vst [vmem:[#allocation3 + $0x308] sm:$0xff] %v2516
      %2525 = vst [vmem:[#allocation3 + $0x310] sm:$0xff] %v2517
      %2526 = vst [vmem:[#allocation3 + $0x318] sm:$0xff] %v2518
      %2527 = vst [vmem:[#allocation3 + $0x320] sm:$0xff] %v2519
      %2528 = vst [vmem:[#allocation3 + $0x328] sm:$0xff] %v2520
      %2529 = vst [vmem:[#allocation3 + $0x330] sm:$0xff] %v2521
      %2530 = vst [vmem:[#allocation3 + $0x338] sm:$0xff] %v2522
      %2531 = vrot.lane.b32.xlu0 %v1959, 113
      %v2532 = vpop.permute.xlu0 %2531
      %2533 = vrot.lane.b32.xlu0 %v1961, 113
      %v2534 = vpop.permute.xlu0 %2533
      %2535 = vrot.lane.b32.xlu0 %v1963, 113
      %v2536 = vpop.permute.xlu0 %2535
      %2537 = vrot.lane.b32.xlu0 %v1965, 113
      %v2538 = vpop.permute.xlu0 %2537
      %2539 = vrot.lane.b32.xlu0 %v1960, 113
      %v2540 = vpop.permute.xlu0 %2539
      %2541 = vrot.lane.b32.xlu0 %v1962, 113
      %v2542 = vpop.permute.xlu0 %2541
      %2543 = vrot.lane.b32.xlu0 %v1964, 113
      %v2544 = vpop.permute.xlu0 %2543
      %2545 = vrot.lane.b32.xlu0 %v1966, 113
      %v2546 = vpop.permute.xlu0 %2545
      %v2547 = vsel %vm800, %v2532, %v2540
      %v2548 = vsel %vm800, %v2534, %v2542
      %v2549 = vsel %vm800, %v2536, %v2544
      %v2550 = vsel %vm800, %v2538, %v2546
      %v2551 = vsel %vm800, %v2540, %v2532
      %v2552 = vsel %vm800, %v2542, %v2534
      %v2553 = vsel %vm800, %v2544, %v2536
      %v2554 = vsel %vm800, %v2546, %v2538
      %v2555 = vmul.f32 %v2547, %v2508
      %v2556 = vmul.f32 %v2551, %v2512
      %v2557 = vmul.f32 %v2548, %v2508
      %v2558 = vmul.f32 %v2552, %v2512
      %v2559 = vmul.f32 %v2549, %v2508
      %v2560 = vmul.f32 %v2553, %v2512
      %v2561 = vmul.f32 %v2550, %v2508
      %v2562 = vmul.f32 %v2554, %v2512
      %2563 = vst [vmem:[#allocation3 + $0x340] sm:$0xff] %v2555
      %2564 = vst [vmem:[#allocation3 + $0x348] sm:$0xff] %v2556
      %2565 = vst [vmem:[#allocation3 + $0x350] sm:$0xff] %v2557
      %2566 = vst [vmem:[#allocation3 + $0x358] sm:$0xff] %v2558
      %2567 = vst [vmem:[#allocation3 + $0x360] sm:$0xff] %v2559
      %2568 = vst [vmem:[#allocation3 + $0x368] sm:$0xff] %v2560
      %2569 = vst [vmem:[#allocation3 + $0x370] sm:$0xff] %v2561
      %2570 = vst [vmem:[#allocation3 + $0x378] sm:$0xff] %v2562
      %v2571 = vld [vmem:[%s836] ss:$8 sm:$0x3]
      %2572 = vrot.lane.b32.xlu0 %v1935, 112
      %v2573 = vpop.permute.xlu0 %2572
      %2574 = vrot.lane.b32.xlu0 %v1937, 112
      %v2575 = vpop.permute.xlu0 %2574
      %2576 = vrot.lane.b32.xlu0 %v1939, 112
      %v2577 = vpop.permute.xlu0 %2576
      %2578 = vrot.lane.b32.xlu0 %v1941, 112
      %v2579 = vpop.permute.xlu0 %2578
      %2580 = vrot.lane.b32.xlu0 %v1936, 112
      %v2581 = vpop.permute.xlu0 %2580
      %2582 = vrot.lane.b32.xlu0 %v1938, 112
      %v2583 = vpop.permute.xlu0 %2582
      %2584 = vrot.lane.b32.xlu0 %v1940, 112
      %v2585 = vpop.permute.xlu0 %2584
      %2586 = vrot.lane.b32.xlu0 %v1942, 112
      %v2587 = vpop.permute.xlu0 %2586
      %v2588 = vsel %vm854, %v2573, %v2581
      %v2589 = vsel %vm854, %v2575, %v2583
      %v2590 = vsel %vm854, %v2577, %v2585
      %v2591 = vsel %vm854, %v2579, %v2587
      %v2592 = vsel %vm854, %v2581, %v2573
      %v2593 = vsel %vm854, %v2583, %v2575
      %v2594 = vsel %vm854, %v2585, %v2577
      %v2595 = vsel %vm854, %v2587, %v2579
      %v2597 = vlaneseq
      %v2598 = vshrl.u32 %v2597, 7
      %v2599 = vsub.s32 0, %v2598
      %v2600 = vrot.slane %v2571, %v2599
      %v2601 = vlaneseq
      %v2602 = vshrl.u32 %v2601, 7
      %v2603 = vsub.s32 1, %v2602
      %v2604 = vrot.slane %v2571, %v2603
      %v2607 = vmul.f32 %v2588, %v2600
      %v2608 = vmul.f32 %v2592, %v2604
      %v2609 = vmul.f32 %v2589, %v2600
      %v2610 = vmul.f32 %v2593, %v2604
      %v2611 = vmul.f32 %v2590, %v2600
      %v2612 = vmul.f32 %v2594, %v2604
      %v2613 = vmul.f32 %v2591, %v2600
      %v2614 = vmul.f32 %v2595, %v2604
      %2615 = vst [vmem:[#allocation3 + $0x380] sm:$0xff] %v2607
      %2616 = vst [vmem:[#allocation3 + $0x388] sm:$0xff] %v2608
      %2617 = vst [vmem:[#allocation3 + $0x390] sm:$0xff] %v2609
      %2618 = vst [vmem:[#allocation3 + $0x398] sm:$0xff] %v2610
      %2619 = vst [vmem:[#allocation3 + $0x3a0] sm:$0xff] %v2611
      %2620 = vst [vmem:[#allocation3 + $0x3a8] sm:$0xff] %v2612
      %2621 = vst [vmem:[#allocation3 + $0x3b0] sm:$0xff] %v2613
      %2622 = vst [vmem:[#allocation3 + $0x3b8] sm:$0xff] %v2614
      %2623 = vrot.lane.b32.xlu0 %v1959, 112
      %v2624 = vpop.permute.xlu0 %2623
      %2625 = vrot.lane.b32.xlu0 %v1961, 112
      %v2626 = vpop.permute.xlu0 %2625
      %2627 = vrot.lane.b32.xlu0 %v1963, 112
      %v2628 = vpop.permute.xlu0 %2627
      %2629 = vrot.lane.b32.xlu0 %v1965, 112
      %v2630 = vpop.permute.xlu0 %2629
      %2631 = vrot.lane.b32.xlu0 %v1960, 112
      %v2632 = vpop.permute.xlu0 %2631
      %2633 = vrot.lane.b32.xlu0 %v1962, 112
      %v2634 = vpop.permute.xlu0 %2633
      %2635 = vrot.lane.b32.xlu0 %v1964, 112
      %v2636 = vpop.permute.xlu0 %2635
      %2637 = vrot.lane.b32.xlu0 %v1966, 112
      %v2638 = vpop.permute.xlu0 %2637
      %v2639 = vsel %vm854, %v2624, %v2632
      %v2640 = vsel %vm854, %v2626, %v2634
      %v2641 = vsel %vm854, %v2628, %v2636
      %v2642 = vsel %vm854, %v2630, %v2638
      %v2643 = vsel %vm854, %v2632, %v2624
      %v2644 = vsel %vm854, %v2634, %v2626
      %v2645 = vsel %vm854, %v2636, %v2628
      %v2646 = vsel %vm854, %v2638, %v2630
      %v2647 = vmul.f32 %v2639, %v2600
      %v2648 = vmul.f32 %v2643, %v2604
      %v2649 = vmul.f32 %v2640, %v2600
      %v2650 = vmul.f32 %v2644, %v2604
      %v2651 = vmul.f32 %v2641, %v2600
      %v2652 = vmul.f32 %v2645, %v2604
      %v2653 = vmul.f32 %v2642, %v2600
      %v2654 = vmul.f32 %v2646, %v2604
      %2655 = vst [vmem:[#allocation3 + $0x3c0] sm:$0xff] %v2647
      %2656 = vst [vmem:[#allocation3 + $0x3c8] sm:$0xff] %v2648
      %2657 = vst [vmem:[#allocation3 + $0x3d0] sm:$0xff] %v2649
      %2658 = vst [vmem:[#allocation3 + $0x3d8] sm:$0xff] %v2650
      %2659 = vst [vmem:[#allocation3 + $0x3e0] sm:$0xff] %v2651
      %2660 = vst [vmem:[#allocation3 + $0x3e8] sm:$0xff] %v2652
      %2661 = vst [vmem:[#allocation3 + $0x3f0] sm:$0xff] %v2653
      %2662 = vst [vmem:[#allocation3 + $0x3f8] sm:$0xff] %v2654
      %v2663 = vld [vmem:[%s890] ss:$8 sm:$0x3]
      %2664 = vrot.lane.b32.xlu0 %v1935, 111
      %v2665 = vpop.permute.xlu0 %2664
      %2666 = vrot.lane.b32.xlu0 %v1937, 111
      %v2667 = vpop.permute.xlu0 %2666
      %2668 = vrot.lane.b32.xlu0 %v1939, 111
      %v2669 = vpop.permute.xlu0 %2668
      %2670 = vrot.lane.b32.xlu0 %v1941, 111
      %v2671 = vpop.permute.xlu0 %2670
      %2672 = vrot.lane.b32.xlu0 %v1936, 111
      %v2673 = vpop.permute.xlu0 %2672
      %2674 = vrot.lane.b32.xlu0 %v1938, 111
      %v2675 = vpop.permute.xlu0 %2674
      %2676 = vrot.lane.b32.xlu0 %v1940, 111
      %v2677 = vpop.permute.xlu0 %2676
      %2678 = vrot.lane.b32.xlu0 %v1942, 111
      %v2679 = vpop.permute.xlu0 %2678
      %v2680 = vsel %vm908, %v2665, %v2673
      %v2681 = vsel %vm908, %v2667, %v2675
      %v2682 = vsel %vm908, %v2669, %v2677
      %v2683 = vsel %vm908, %v2671, %v2679
      %v2684 = vsel %vm908, %v2673, %v2665
      %v2685 = vsel %vm908, %v2675, %v2667
      %v2686 = vsel %vm908, %v2677, %v2669
      %v2687 = vsel %vm908, %v2679, %v2671
      %v2689 = vlaneseq
      %v2690 = vshrl.u32 %v2689, 7
      %v2691 = vsub.s32 0, %v2690
      %v2692 = vrot.slane %v2663, %v2691
      %v2693 = vlaneseq
      %v2694 = vshrl.u32 %v2693, 7
      %v2695 = vsub.s32 1, %v2694
      %v2696 = vrot.slane %v2663, %v2695
      %v2699 = vmul.f32 %v2680, %v2692
      %v2700 = vmul.f32 %v2684, %v2696
      %v2701 = vmul.f32 %v2681, %v2692
      %v2702 = vmul.f32 %v2685, %v2696
      %v2703 = vmul.f32 %v2682, %v2692
      %v2704 = vmul.f32 %v2686, %v2696
      %v2705 = vmul.f32 %v2683, %v2692
      %v2706 = vmul.f32 %v2687, %v2696
      %2707 = vst [vmem:[#allocation3 + $0x400] sm:$0xff] %v2699
      %2708 = vst [vmem:[#allocation3 + $0x408] sm:$0xff] %v2700
      %2709 = vst [vmem:[#allocation3 + $0x410] sm:$0xff] %v2701
      %2710 = vst [vmem:[#allocation3 + $0x418] sm:$0xff] %v2702
      %2711 = vst [vmem:[#allocation3 + $0x420] sm:$0xff] %v2703
      %2712 = vst [vmem:[#allocation3 + $0x428] sm:$0xff] %v2704
      %2713 = vst [vmem:[#allocation3 + $0x430] sm:$0xff] %v2705
      %2714 = vst [vmem:[#allocation3 + $0x438] sm:$0xff] %v2706
      %2715 = vrot.lane.b32.xlu0 %v1959, 111
      %v2716 = vpop.permute.xlu0 %2715
      %2717 = vrot.lane.b32.xlu0 %v1961, 111
      %v2718 = vpop.permute.xlu0 %2717
      %2719 = vrot.lane.b32.xlu0 %v1963, 111
      %v2720 = vpop.permute.xlu0 %2719
      %2721 = vrot.lane.b32.xlu0 %v1965, 111
      %v2722 = vpop.permute.xlu0 %2721
      %2723 = vrot.lane.b32.xlu0 %v1960, 111
      %v2724 = vpop.permute.xlu0 %2723
      %2725 = vrot.lane.b32.xlu0 %v1962, 111
      %v2726 = vpop.permute.xlu0 %2725
      %2727 = vrot.lane.b32.xlu0 %v1964, 111
      %v2728 = vpop.permute.xlu0 %2727
      %2729 = vrot.lane.b32.xlu0 %v1966, 111
      %v2730 = vpop.permute.xlu0 %2729
      %v2731 = vsel %vm908, %v2716, %v2724
      %v2732 = vsel %vm908, %v2718, %v2726
      %v2733 = vsel %vm908, %v2720, %v2728
      %v2734 = vsel %vm908, %v2722, %v2730
      %v2735 = vsel %vm908, %v2724, %v2716
      %v2736 = vsel %vm908, %v2726, %v2718
      %v2737 = vsel %vm908, %v2728, %v2720
      %v2738 = vsel %vm908, %v2730, %v2722
      %v2739 = vmul.f32 %v2731, %v2692
      %v2740 = vmul.f32 %v2735, %v2696
      %v2741 = vmul.f32 %v2732, %v2692
      %v2742 = vmul.f32 %v2736, %v2696
      %v2743 = vmul.f32 %v2733, %v2692
      %v2744 = vmul.f32 %v2737, %v2696
      %v2745 = vmul.f32 %v2734, %v2692
      %v2746 = vmul.f32 %v2738, %v2696
      %2747 = vst [vmem:[#allocation3 + $0x440] sm:$0xff] %v2739
      %2748 = vst [vmem:[#allocation3 + $0x448] sm:$0xff] %v2740
      %2749 = vst [vmem:[#allocation3 + $0x450] sm:$0xff] %v2741
      %2750 = vst [vmem:[#allocation3 + $0x458] sm:$0xff] %v2742
      %2751 = vst [vmem:[#allocation3 + $0x460] sm:$0xff] %v2743
      %2752 = vst [vmem:[#allocation3 + $0x468] sm:$0xff] %v2744
      %2753 = vst [vmem:[#allocation3 + $0x470] sm:$0xff] %v2745
      %2754 = vst [vmem:[#allocation3 + $0x478] sm:$0xff] %v2746
      %v2755 = vld [vmem:[%s3] sm:$0xff]
      %v2756 = vld [vmem:[%s3 + $0x8] sm:$0xff]
      %v2757 = vld [vmem:[%s3 + $0x10] sm:$0xff]
      %v2758 = vld [vmem:[%s3 + $0x18] sm:$0xff]
      %v2759 = vld [vmem:[%s3 + $0x20] sm:$0xff]
      %v2760 = vld [vmem:[%s3 + $0x28] sm:$0xff]
      %v2761 = vld [vmem:[%s3 + $0x30] sm:$0xff]
      %v2762 = vld [vmem:[%s3 + $0x38] sm:$0xff]
      %v2763 = vld [vmem:[%s3 + $0x40] sm:$0xff]
      %v2764 = vld [vmem:[%s3 + $0x48] sm:$0xff]
      %v2765 = vld [vmem:[%s3 + $0x50] sm:$0xff]
      %v2766 = vld [vmem:[%s3 + $0x58] sm:$0xff]
      %v2767 = vld [vmem:[%s3 + $0x60] sm:$0xff]
      %v2768 = vld [vmem:[%s3 + $0x68] sm:$0xff]
      %v2769 = vld [vmem:[%s3 + $0x70] sm:$0xff]
      %v2770 = vld [vmem:[%s3 + $0x78] sm:$0xff]
      %v2771 = vld [vmem:[%s3 + $0x80] sm:$0xff]
      %v2772 = vld [vmem:[%s3 + $0x88] sm:$0xff]
      %v2773 = vld [vmem:[%s3 + $0x90] sm:$0xff]
      %v2774 = vld [vmem:[%s3 + $0x98] sm:$0xff]
      %v2775 = vld [vmem:[%s3 + $0xa0] sm:$0xff]
      %v2776 = vld [vmem:[%s3 + $0xa8] sm:$0xff]
      %v2777 = vld [vmem:[%s3 + $0xb0] sm:$0xff]
      %v2778 = vld [vmem:[%s3 + $0xb8] sm:$0xff]
      %v2779 = vld [vmem:[%s3 + $0xc0] sm:$0xff]
      %v2780 = vld [vmem:[%s3 + $0xc8] sm:$0xff]
      %v2781 = vld [vmem:[%s3 + $0xd0] sm:$0xff]
      %v2782 = vld [vmem:[%s3 + $0xd8] sm:$0xff]
      %v2783 = vld [vmem:[%s3 + $0xe0] sm:$0xff]
      %v2784 = vld [vmem:[%s3 + $0xe8] sm:$0xff]
      %v2785 = vld [vmem:[%s3 + $0xf0] sm:$0xff]
      %v2786 = vld [vmem:[%s3 + $0xf8] sm:$0xff]
      %v2787 = vld [vmem:[%s3 + $0x100] sm:$0xff]
      %v2788 = vld [vmem:[%s3 + $0x108] sm:$0xff]
      %v2789 = vld [vmem:[%s3 + $0x110] sm:$0xff]
      %v2790 = vld [vmem:[%s3 + $0x118] sm:$0xff]
      %v2791 = vld [vmem:[%s3 + $0x120] sm:$0xff]
      %v2792 = vld [vmem:[%s3 + $0x128] sm:$0xff]
      %v2793 = vld [vmem:[%s3 + $0x130] sm:$0xff]
      %v2794 = vld [vmem:[%s3 + $0x138] sm:$0xff]
      %v2795 = vld [vmem:[%s3 + $0x140] sm:$0xff]
      %v2796 = vld [vmem:[%s3 + $0x148] sm:$0xff]
      %v2797 = vld [vmem:[%s3 + $0x150] sm:$0xff]
      %v2798 = vld [vmem:[%s3 + $0x158] sm:$0xff]
      %v2799 = vld [vmem:[%s3 + $0x160] sm:$0xff]
      %v2800 = vld [vmem:[%s3 + $0x168] sm:$0xff]
      %v2801 = vld [vmem:[%s3 + $0x170] sm:$0xff]
      %v2802 = vld [vmem:[%s3 + $0x178] sm:$0xff]
      %v2803 = vld [vmem:[%s3 + $0x180] sm:$0xff]
      %v2804 = vld [vmem:[%s3 + $0x188] sm:$0xff]
      %v2805 = vld [vmem:[%s3 + $0x190] sm:$0xff]
      %v2806 = vld [vmem:[%s3 + $0x198] sm:$0xff]
      %v2807 = vld [vmem:[%s3 + $0x1a0] sm:$0xff]
      %v2808 = vld [vmem:[%s3 + $0x1a8] sm:$0xff]
      %v2809 = vld [vmem:[%s3 + $0x1b0] sm:$0xff]
      %v2810 = vld [vmem:[%s3 + $0x1b8] sm:$0xff]
      %v2811 = vld [vmem:[%s3 + $0x1c0] sm:$0xff]
      %v2812 = vld [vmem:[%s3 + $0x1c8] sm:$0xff]
      %v2813 = vld [vmem:[%s3 + $0x1d0] sm:$0xff]
      %v2814 = vld [vmem:[%s3 + $0x1d8] sm:$0xff]
      %v2815 = vld [vmem:[%s3 + $0x1e0] sm:$0xff]
      %v2816 = vld [vmem:[%s3 + $0x1e8] sm:$0xff]
      %v2817 = vld [vmem:[%s3 + $0x1f0] sm:$0xff]
      %v2818 = vld [vmem:[%s3 + $0x1f8] sm:$0xff]
      %v2819 = vld [vmem:[%s3 + $0x200] sm:$0xff]
      %v2820 = vld [vmem:[%s3 + $0x208] sm:$0xff]
      %v2821 = vld [vmem:[%s3 + $0x210] sm:$0xff]
      %v2822 = vld [vmem:[%s3 + $0x218] sm:$0xff]
      %v2823 = vld [vmem:[%s3 + $0x220] sm:$0xff]
      %v2824 = vld [vmem:[%s3 + $0x228] sm:$0xff]
      %v2825 = vld [vmem:[%s3 + $0x230] sm:$0xff]
      %v2826 = vld [vmem:[%s3 + $0x238] sm:$0xff]
      %v2827 = vld [vmem:[%s3 + $0x240] sm:$0xff]
      %v2828 = vld [vmem:[%s3 + $0x248] sm:$0xff]
      %v2829 = vld [vmem:[%s3 + $0x250] sm:$0xff]
      %v2830 = vld [vmem:[%s3 + $0x258] sm:$0xff]
      %v2831 = vld [vmem:[%s3 + $0x260] sm:$0xff]
      %v2832 = vld [vmem:[%s3 + $0x268] sm:$0xff]
      %v2833 = vld [vmem:[%s3 + $0x270] sm:$0xff]
      %v2834 = vld [vmem:[%s3 + $0x278] sm:$0xff]
      %v2835 = vld [vmem:[#allocation3] sm:$0xff]
      %v2836 = vld [vmem:[#allocation3 + $0x8] sm:$0xff]
      %v2837 = vld [vmem:[#allocation3 + $0x10] sm:$0xff]
      %v2838 = vld [vmem:[#allocation3 + $0x18] sm:$0xff]
      %v2839 = vld [vmem:[#allocation3 + $0x20] sm:$0xff]
      %v2840 = vld [vmem:[#allocation3 + $0x28] sm:$0xff]
      %v2841 = vld [vmem:[#allocation3 + $0x30] sm:$0xff]
      %v2842 = vld [vmem:[#allocation3 + $0x38] sm:$0xff]
      %v2843 = vld [vmem:[#allocation3 + $0x40] sm:$0xff]
      %v2844 = vld [vmem:[#allocation3 + $0x48] sm:$0xff]
      %v2845 = vld [vmem:[#allocation3 + $0x50] sm:$0xff]
      %v2846 = vld [vmem:[#allocation3 + $0x58] sm:$0xff]
      %v2847 = vld [vmem:[#allocation3 + $0x60] sm:$0xff]
      %v2848 = vld [vmem:[#allocation3 + $0x68] sm:$0xff]
      %v2849 = vld [vmem:[#allocation3 + $0x70] sm:$0xff]
      %v2850 = vld [vmem:[#allocation3 + $0x78] sm:$0xff]
      %v2851 = vld [vmem:[#allocation3 + $0x80] sm:$0xff]
      %v2852 = vld [vmem:[#allocation3 + $0x88] sm:$0xff]
      %v2853 = vld [vmem:[#allocation3 + $0x90] sm:$0xff]
      %v2854 = vld [vmem:[#allocation3 + $0x98] sm:$0xff]
      %v2855 = vld [vmem:[#allocation3 + $0xa0] sm:$0xff]
      %v2856 = vld [vmem:[#allocation3 + $0xa8] sm:$0xff]
      %v2857 = vld [vmem:[#allocation3 + $0xb0] sm:$0xff]
      %v2858 = vld [vmem:[#allocation3 + $0xb8] sm:$0xff]
      %v2859 = vld [vmem:[#allocation3 + $0xc0] sm:$0xff]
      %v2860 = vld [vmem:[#allocation3 + $0xc8] sm:$0xff]
      %v2861 = vld [vmem:[#allocation3 + $0xd0] sm:$0xff]
      %v2862 = vld [vmem:[#allocation3 + $0xd8] sm:$0xff]
      %v2863 = vld [vmem:[#allocation3 + $0xe0] sm:$0xff]
      %v2864 = vld [vmem:[#allocation3 + $0xe8] sm:$0xff]
      %v2865 = vld [vmem:[#allocation3 + $0xf0] sm:$0xff]
      %v2866 = vld [vmem:[#allocation3 + $0xf8] sm:$0xff]
      %v2867 = vld [vmem:[#allocation3 + $0x100] sm:$0xff]
      %v2868 = vld [vmem:[#allocation3 + $0x108] sm:$0xff]
      %v2869 = vld [vmem:[#allocation3 + $0x110] sm:$0xff]
      %v2870 = vld [vmem:[#allocation3 + $0x118] sm:$0xff]
      %v2871 = vld [vmem:[#allocation3 + $0x120] sm:$0xff]
      %v2872 = vld [vmem:[#allocation3 + $0x128] sm:$0xff]
      %v2873 = vld [vmem:[#allocation3 + $0x130] sm:$0xff]
      %v2874 = vld [vmem:[#allocation3 + $0x138] sm:$0xff]
      %v2875 = vld [vmem:[#allocation3 + $0x140] sm:$0xff]
      %v2876 = vld [vmem:[#allocation3 + $0x148] sm:$0xff]
      %v2877 = vld [vmem:[#allocation3 + $0x150] sm:$0xff]
      %v2878 = vld [vmem:[#allocation3 + $0x158] sm:$0xff]
      %v2879 = vld [vmem:[#allocation3 + $0x160] sm:$0xff]
      %v2880 = vld [vmem:[#allocation3 + $0x168] sm:$0xff]
      %v2881 = vld [vmem:[#allocation3 + $0x170] sm:$0xff]
      %v2882 = vld [vmem:[#allocation3 + $0x178] sm:$0xff]
      %v2883 = vld [vmem:[#allocation3 + $0x180] sm:$0xff]
      %v2884 = vld [vmem:[#allocation3 + $0x188] sm:$0xff]
      %v2885 = vld [vmem:[#allocation3 + $0x190] sm:$0xff]
      %v2886 = vld [vmem:[#allocation3 + $0x198] sm:$0xff]
      %v2887 = vld [vmem:[#allocation3 + $0x1a0] sm:$0xff]
      %v2888 = vld [vmem:[#allocation3 + $0x1a8] sm:$0xff]
      %v2889 = vld [vmem:[#allocation3 + $0x1b0] sm:$0xff]
      %v2890 = vld [vmem:[#allocation3 + $0x1b8] sm:$0xff]
      %v2891 = vld [vmem:[#allocation3 + $0x1c0] sm:$0xff]
      %v2892 = vld [vmem:[#allocation3 + $0x1c8] sm:$0xff]
      %v2893 = vld [vmem:[#allocation3 + $0x1d0] sm:$0xff]
      %v2894 = vld [vmem:[#allocation3 + $0x1d8] sm:$0xff]
      %v2895 = vld [vmem:[#allocation3 + $0x1e0] sm:$0xff]
      %v2896 = vld [vmem:[#allocation3 + $0x1e8] sm:$0xff]
      %v2897 = vld [vmem:[#allocation3 + $0x1f0] sm:$0xff]
      %v2898 = vld [vmem:[#allocation3 + $0x1f8] sm:$0xff]
      %v2899 = vld [vmem:[#allocation3 + $0x200] sm:$0xff]
      %v2900 = vld [vmem:[#allocation3 + $0x208] sm:$0xff]
      %v2901 = vld [vmem:[#allocation3 + $0x210] sm:$0xff]
      %v2902 = vld [vmem:[#allocation3 + $0x218] sm:$0xff]
      %v2903 = vld [vmem:[#allocation3 + $0x220] sm:$0xff]
      %v2904 = vld [vmem:[#allocation3 + $0x228] sm:$0xff]
      %v2905 = vld [vmem:[#allocation3 + $0x230] sm:$0xff]
      %v2906 = vld [vmem:[#allocation3 + $0x238] sm:$0xff]
      %v2907 = vld [vmem:[#allocation3 + $0x240] sm:$0xff]
      %v2908 = vld [vmem:[#allocation3 + $0x248] sm:$0xff]
      %v2909 = vld [vmem:[#allocation3 + $0x250] sm:$0xff]
      %v2910 = vld [vmem:[#allocation3 + $0x258] sm:$0xff]
      %v2911 = vld [vmem:[#allocation3 + $0x260] sm:$0xff]
      %v2912 = vld [vmem:[#allocation3 + $0x268] sm:$0xff]
      %v2913 = vld [vmem:[#allocation3 + $0x270] sm:$0xff]
      %v2914 = vld [vmem:[#allocation3 + $0x278] sm:$0xff]
      %v2915 = vld [vmem:[#allocation3 + $0x280] sm:$0xff]
      %v2916 = vld [vmem:[#allocation3 + $0x288] sm:$0xff]
      %v2917 = vld [vmem:[#allocation3 + $0x290] sm:$0xff]
      %v2918 = vld [vmem:[#allocation3 + $0x298] sm:$0xff]
      %v2919 = vld [vmem:[#allocation3 + $0x2a0] sm:$0xff]
      %v2920 = vld [vmem:[#allocation3 + $0x2a8] sm:$0xff]
      %v2921 = vld [vmem:[#allocation3 + $0x2b0] sm:$0xff]
      %v2922 = vld [vmem:[#allocation3 + $0x2b8] sm:$0xff]
      %v2923 = vld [vmem:[#allocation3 + $0x2c0] sm:$0xff]
      %v2924 = vld [vmem:[#allocation3 + $0x2c8] sm:$0xff]
      %v2925 = vld [vmem:[#allocation3 + $0x2d0] sm:$0xff]
      %v2926 = vld [vmem:[#allocation3 + $0x2d8] sm:$0xff]
      %v2927 = vld [vmem:[#allocation3 + $0x2e0] sm:$0xff]
      %v2928 = vld [vmem:[#allocation3 + $0x2e8] sm:$0xff]
      %v2929 = vld [vmem:[#allocation3 + $0x2f0] sm:$0xff]
      %v2930 = vld [vmem:[#allocation3 + $0x2f8] sm:$0xff]
      %v2931 = vld [vmem:[#allocation3 + $0x300] sm:$0xff]
      %v2932 = vld [vmem:[#allocation3 + $0x308] sm:$0xff]
      %v2933 = vld [vmem:[#allocation3 + $0x310] sm:$0xff]
      %v2934 = vld [vmem:[#allocation3 + $0x318] sm:$0xff]
      %v2935 = vld [vmem:[#allocation3 + $0x320] sm:$0xff]
      %v2936 = vld [vmem:[#allocation3 + $0x328] sm:$0xff]
      %v2937 = vld [vmem:[#allocation3 + $0x330] sm:$0xff]
      %v2938 = vld [vmem:[#allocation3 + $0x338] sm:$0xff]
      %v2939 = vld [vmem:[#allocation3 + $0x340] sm:$0xff]
      %v2940 = vld [vmem:[#allocation3 + $0x348] sm:$0xff]
      %v2941 = vld [vmem:[#allocation3 + $0x350] sm:$0xff]
      %v2942 = vld [vmem:[#allocation3 + $0x358] sm:$0xff]
      %v2943 = vld [vmem:[#allocation3 + $0x360] sm:$0xff]
      %v2944 = vld [vmem:[#allocation3 + $0x368] sm:$0xff]
      %v2945 = vld [vmem:[#allocation3 + $0x370] sm:$0xff]
      %v2946 = vld [vmem:[#allocation3 + $0x378] sm:$0xff]
      %v2947 = vld [vmem:[#allocation3 + $0x380] sm:$0xff]
      %v2948 = vld [vmem:[#allocation3 + $0x388] sm:$0xff]
      %v2949 = vld [vmem:[#allocation3 + $0x390] sm:$0xff]
      %v2950 = vld [vmem:[#allocation3 + $0x398] sm:$0xff]
      %v2951 = vld [vmem:[#allocation3 + $0x3a0] sm:$0xff]
      %v2952 = vld [vmem:[#allocation3 + $0x3a8] sm:$0xff]
      %v2953 = vld [vmem:[#allocation3 + $0x3b0] sm:$0xff]
      %v2954 = vld [vmem:[#allocation3 + $0x3b8] sm:$0xff]
      %v2955 = vld [vmem:[#allocation3 + $0x3c0] sm:$0xff]
      %v2956 = vld [vmem:[#allocation3 + $0x3c8] sm:$0xff]
      %v2957 = vld [vmem:[#allocation3 + $0x3d0] sm:$0xff]
      %v2958 = vld [vmem:[#allocation3 + $0x3d8] sm:$0xff]
      %v2959 = vld [vmem:[#allocation3 + $0x3e0] sm:$0xff]
      %v2960 = vld [vmem:[#allocation3 + $0x3e8] sm:$0xff]
      %v2961 = vld [vmem:[#allocation3 + $0x3f0] sm:$0xff]
      %v2962 = vld [vmem:[#allocation3 + $0x3f8] sm:$0xff]
      %v2963 = vld [vmem:[#allocation3 + $0x400] sm:$0xff]
      %v2964 = vld [vmem:[#allocation3 + $0x408] sm:$0xff]
      %v2965 = vld [vmem:[#allocation3 + $0x410] sm:$0xff]
      %v2966 = vld [vmem:[#allocation3 + $0x418] sm:$0xff]
      %v2967 = vld [vmem:[#allocation3 + $0x420] sm:$0xff]
      %v2968 = vld [vmem:[#allocation3 + $0x428] sm:$0xff]
      %v2969 = vld [vmem:[#allocation3 + $0x430] sm:$0xff]
      %v2970 = vld [vmem:[#allocation3 + $0x438] sm:$0xff]
      %v2971 = vld [vmem:[#allocation3 + $0x440] sm:$0xff]
      %v2972 = vld [vmem:[#allocation3 + $0x448] sm:$0xff]
      %v2973 = vld [vmem:[#allocation3 + $0x450] sm:$0xff]
      %v2974 = vld [vmem:[#allocation3 + $0x458] sm:$0xff]
      %v2975 = vld [vmem:[#allocation3 + $0x460] sm:$0xff]
      %v2976 = vld [vmem:[#allocation3 + $0x468] sm:$0xff]
      %v2977 = vld [vmem:[#allocation3 + $0x470] sm:$0xff]
      %v2978 = vld [vmem:[#allocation3 + $0x478] sm:$0xff]
      %v2979 = vld [vmem:[%s5] sm:$0xff]
      %v2980 = vld [vmem:[%s5 + $0x8] sm:$0xff]
      %v2981 = vld [vmem:[%s5 + $0x10] sm:$0xff]
      %v2982 = vld [vmem:[%s5 + $0x18] sm:$0xff]
      %v2983 = vld [vmem:[%s5 + $0x20] sm:$0xff]
      %v2984 = vld [vmem:[%s5 + $0x28] sm:$0xff]
      %v2985 = vld [vmem:[%s5 + $0x30] sm:$0xff]
      %v2986 = vld [vmem:[%s5 + $0x38] sm:$0xff]
      %v2987 = vld [vmem:[%s5 + $0x40] sm:$0xff]
      %v2988 = vld [vmem:[%s5 + $0x48] sm:$0xff]
      %v2989 = vld [vmem:[%s5 + $0x50] sm:$0xff]
      %v2990 = vld [vmem:[%s5 + $0x58] sm:$0xff]
      %v2991 = vld [vmem:[%s5 + $0x60] sm:$0xff]
      %v2992 = vld [vmem:[%s5 + $0x68] sm:$0xff]
      %v2993 = vld [vmem:[%s5 + $0x70] sm:$0xff]
      %v2994 = vld [vmem:[%s5 + $0x78] sm:$0xff]
      %2996 = vset.pattern.permute.xlu0 0
      %2997 = vperm.xlu0 %2996, %v2979
      %v2998 = vpop.permute.xlu0 %2997
      %3001 = vset.pattern.permute.xlu0 0
      %3002 = vperm.xlu0 %3001, %v2980
      %v3003 = vpop.permute.xlu0 %3002
      %3006 = vset.pattern.permute.xlu0 0
      %3007 = vperm.xlu0 %3006, %v2981
      %v3008 = vpop.permute.xlu0 %3007
      %3011 = vset.pattern.permute.xlu0 0
      %3012 = vperm.xlu0 %3011, %v2982
      %v3013 = vpop.permute.xlu0 %3012
      %3016 = vset.pattern.permute.xlu0 0
      %3017 = vperm.xlu0 %3016, %v2983
      %v3018 = vpop.permute.xlu0 %3017
      %3021 = vset.pattern.permute.xlu0 0
      %3022 = vperm.xlu0 %3021, %v2984
      %v3023 = vpop.permute.xlu0 %3022
      %3026 = vset.pattern.permute.xlu0 0
      %3027 = vperm.xlu0 %3026, %v2985
      %v3028 = vpop.permute.xlu0 %3027
      %3031 = vset.pattern.permute.xlu0 0
      %3032 = vperm.xlu0 %3031, %v2986
      %v3033 = vpop.permute.xlu0 %3032
      %3036 = vset.pattern.permute.xlu0 0
      %3037 = vperm.xlu0 %3036, %v2987
      %v3038 = vpop.permute.xlu0 %3037
      %3041 = vset.pattern.permute.xlu0 0
      %3042 = vperm.xlu0 %3041, %v2988
      %v3043 = vpop.permute.xlu0 %3042
      %3046 = vset.pattern.permute.xlu0 0
      %3047 = vperm.xlu0 %3046, %v2989
      %v3048 = vpop.permute.xlu0 %3047
      %3051 = vset.pattern.permute.xlu0 0
      %3052 = vperm.xlu0 %3051, %v2990
      %v3053 = vpop.permute.xlu0 %3052
      %3056 = vset.pattern.permute.xlu0 0
      %3057 = vperm.xlu0 %3056, %v2991
      %v3058 = vpop.permute.xlu0 %3057
      %3061 = vset.pattern.permute.xlu0 0
      %3062 = vperm.xlu0 %3061, %v2992
      %v3063 = vpop.permute.xlu0 %3062
      %3066 = vset.pattern.permute.xlu0 0
      %3067 = vperm.xlu0 %3066, %v2993
      %v3068 = vpop.permute.xlu0 %3067
      %3071 = vset.pattern.permute.xlu0 0
      %3072 = vperm.xlu0 %3071, %v2994
      %v3073 = vpop.permute.xlu0 %3072
      %vm3075 = vcmask 523264
      %v3077 = vsel %vm3075, %v2759, 0
      %v3080 = vsel %vm3075, %v2764, 0
      %v3083 = vsel %vm3075, %v2769, 0
      %v3086 = vsel %vm3075, %v2774, 0
      %v3089 = vsel %vm3075, %v2779, 0
      %v3092 = vsel %vm3075, %v2784, 0
      %v3095 = vsel %vm3075, %v2789, 0
      %v3098 = vsel %vm3075, %v2794, 0
      %v3101 = vsel %vm3075, %v2799, 0
      %v3104 = vsel %vm3075, %v2804, 0
      %v3107 = vsel %vm3075, %v2809, 0
      %v3110 = vsel %vm3075, %v2814, 0
      %v3113 = vsel %vm3075, %v2819, 0
      %v3116 = vsel %vm3075, %v2824, 0
      %v3119 = vsel %vm3075, %v2829, 0
      %v3122 = vsel %vm3075, %v2834, 0
      %3124 = vmatprep.subr.mxu0 %v2836
      %3125 = vmatpush1.msra.mxu0 %v2835
      %3126 = vmatprep.subr.mxu0 %v2838
      %3127 = vmatpush1.msra.mxu0 %v2837
      %3128 = vmatprep.subr.mxu0 %v2840
      %3129 = vmatpush1.msra.mxu0 %v2839
      %3130 = vmatprep.subr.mxu0 %v2842
      %3131 = vmatpush1.msra.mxu0 %v2841
      %3132 = vmatprep.subr.mxu0 %v2844
      %3133 = vmatpush1.msra.mxu0 %v2843
      %3134 = vmatprep.subr.mxu0 %v2846
      %3135 = vmatpush1.msra.mxu0 %v2845
      %3136 = vmatprep.subr.mxu0 %v2848
      %3137 = vmatpush1.msra.mxu0 %v2847
      %3138 = vmatprep.subr.mxu0 %v2850
      %3139 = vmatpush1.msra.mxu0 %v2849
      %3140 = vmatprep.subr.mxu0 %v2852
      %3141 = vmatpush1.msra.mxu0 %v2851
      %3142 = vmatprep.subr.mxu0 %v2854
      %3143 = vmatpush1.msra.mxu0 %v2853
      %3144 = vmatprep.subr.mxu0 %v2856
      %3145 = vmatpush1.msra.mxu0 %v2855
      %3146 = vmatprep.subr.mxu0 %v2858
      %3147 = vmatpush1.msra.mxu0 %v2857
      %3148 = vmatprep.subr.mxu0 %v2860
      %3149 = vmatpush1.msra.mxu0 %v2859
      %3150 = vmatprep.subr.mxu0 %v2862
      %3151 = vmatpush1.msra.mxu0 %v2861
      %3152 = vmatprep.subr.mxu0 %v2864
      %3153 = vmatpush1.msra.mxu0 %v2863
      %3154 = vmatprep.subr.mxu0 %v2866
      %3155 = vmatpush1.msra.mxu0 %v2865
      %3156 = vmatprep.subr.mxu0 %v2868
      %3157 = vmatpush1.msra.mxu0 %v2867
      %3158 = vmatprep.subr.mxu0 %v2870
      %3159 = vmatpush1.msra.mxu0 %v2869
      %3160 = vmatprep.subr.mxu0 %v2872
      %3161 = vmatpush1.msra.mxu0 %v2871
      %3162 = vmatprep.subr.mxu0 %v2874
      %3163 = vmatpush1.msra.mxu0 %v2873
      %3164 = vmatprep.subr.mxu0 %v2876
      %3165 = vmatpush1.msra.mxu0 %v2875
      %3166 = vmatprep.subr.mxu0 %v2878
      %3167 = vmatpush1.msra.mxu0 %v2877
      %3168 = vmatprep.subr.mxu0 %v2880
      %3169 = vmatpush1.msra.mxu0 %v2879
      %3170 = vmatprep.subr.mxu0 %v2882
      %3171 = vmatpush1.msra.mxu0 %v2881
      %3172 = vmatprep.subr.mxu0 %v2884
      %3173 = vmatpush1.msra.mxu0 %v2883
      %3174 = vmatprep.subr.mxu0 %v2886
      %3175 = vmatpush1.msra.mxu0 %v2885
      %3176 = vmatprep.subr.mxu0 %v2888
      %3177 = vmatpush1.msra.mxu0 %v2887
      %3178 = vmatprep.subr.mxu0 %v2890
      %3179 = vmatpush1.msra.mxu0 %v2889
      %3180 = vmatprep.subr.mxu0 %v2892
      %3181 = vmatpush1.msra.mxu0 %v2891
      %3182 = vmatprep.subr.mxu0 %v2894
      %3183 = vmatpush1.msra.mxu0 %v2893
      %3184 = vmatprep.subr.mxu0 %v2896
      %3185 = vmatpush1.msra.mxu0 %v2895
      %3186 = vmatprep.subr.mxu0 %v2898
      %3187 = vmatpush1.msra.mxu0 %v2897
      %3188 = vmatprep.mubr.f32.mxu0 %v2756
      %3189 = vmatmul.mubr.f32.gmra.mrb[0].mxu0 %v2755
      %v3190 = vpop.f32.mrb[0].mxu0
      %v3191 = vadd.f32 %v2998, %v3190
      %v3192 = vpop.f32.mrb[0].mxu0
      %v3193 = vadd.f32 %v2998, %v3192
      %3194 = vmatprep.mubr.f32.mxu0 %v2761
      %3195 = vmatmul.mubr.f32.gmra.mrb[0].mxu0 %v2760
      %v3196 = vpop.f32.mrb[0].mxu0
      %v3197 = vadd.f32 %v3003, %v3196
      %v3198 = vpop.f32.mrb[0].mxu0
      %v3199 = vadd.f32 %v3003, %v3198
      %3200 = vmatprep.mubr.f32.mxu0 %v2766
      %3201 = vmatmul.mubr.f32.gmra.mrb[0].mxu0 %v2765
      %v3202 = vpop.f32.mrb[0].mxu0
      %v3203 = vadd.f32 %v3008, %v3202
      %v3204 = vpop.f32.mrb[0].mxu0
      %v3205 = vadd.f32 %v3008, %v3204
      %3206 = vmatprep.mubr.f32.mxu0 %v2771
      %3207 = vmatmul.mubr.f32.gmra.mrb[0].mxu0 %v2770
      %v3208 = vpop.f32.mrb[0].mxu0
      %v3209 = vadd.f32 %v3013, %v3208
      %v3210 = vpop.f32.mrb[0].mxu0
      %v3211 = vadd.f32 %v3013, %v3210
      %3212 = vmatprep.mubr.f32.mxu0 %v2776
      %3213 = vmatmul.mubr.f32.gmra.mrb[0].mxu0 %v2775
      %v3214 = vpop.f32.mrb[0].mxu0
      %v3215 = vadd.f32 %v3018, %v3214
      %v3216 = vpop.f32.mrb[0].mxu0
      %v3217 = vadd.f32 %v3018, %v3216
      %3218 = vmatprep.mubr.f32.mxu0 %v2781
      %3219 = vmatmul.mubr.f32.gmra.mrb[0].mxu0 %v2780
      %v3220 = vpop.f32.mrb[0].mxu0
      %v3221 = vadd.f32 %v3023, %v3220
      %v3222 = vpop.f32.mrb[0].mxu0
      %v3223 = vadd.f32 %v3023, %v3222
      %3224 = vmatprep.mubr.f32.mxu0 %v2786
      %3225 = vmatmul.mubr.f32.gmra.mrb[0].mxu0 %v2785
      %v3226 = vpop.f32.mrb[0].mxu0
      %v3227 = vadd.f32 %v3028, %v3226
      %v3228 = vpop.f32.mrb[0].mxu0
      %v3229 = vadd.f32 %v3028, %v3228
      %3230 = vmatprep.mubr.f32.mxu0 %v2791
      %3231 = vmatmul.mubr.f32.gmra.mrb[0].mxu0 %v2790
      %v3232 = vpop.f32.mrb[0].mxu0
      %v3233 = vadd.f32 %v3033, %v3232
      %v3234 = vpop.f32.mrb[0].mxu0
      %v3235 = vadd.f32 %v3033, %v3234
      %3236 = vmatprep.mubr.f32.mxu0 %v2796
      %3237 = vmatmul.mubr.f32.gmra.mrb[0].mxu0 %v2795
      %v3238 = vpop.f32.mrb[0].mxu0
      %v3239 = vadd.f32 %v3038, %v3238
      %v3240 = vpop.f32.mrb[0].mxu0
      %v3241 = vadd.f32 %v3038, %v3240
      %3242 = vmatprep.mubr.f32.mxu0 %v2801
      %3243 = vmatmul.mubr.f32.gmra.mrb[0].mxu0 %v2800
      %v3244 = vpop.f32.mrb[0].mxu0
      %v3245 = vadd.f32 %v3043, %v3244
      %v3246 = vpop.f32.mrb[0].mxu0
      %v3247 = vadd.f32 %v3043, %v3246
      %3248 = vmatprep.mubr.f32.mxu0 %v2806
      %3249 = vmatmul.mubr.f32.gmra.mrb[0].mxu0 %v2805
      %v3250 = vpop.f32.mrb[0].mxu0
      %v3251 = vadd.f32 %v3048, %v3250
      %v3252 = vpop.f32.mrb[0].mxu0
      %v3253 = vadd.f32 %v3048, %v3252
      %3254 = vmatprep.mubr.f32.mxu0 %v2811
      %3255 = vmatmul.mubr.f32.gmra.mrb[0].mxu0 %v2810
      %v3256 = vpop.f32.mrb[0].mxu0
      %v3257 = vadd.f32 %v3053, %v3256
      %v3258 = vpop.f32.mrb[0].mxu0
      %v3259 = vadd.f32 %v3053, %v3258
      %3260 = vmatprep.mubr.f32.mxu0 %v2816
      %3261 = vmatmul.mubr.f32.gmra.mrb[0].mxu0 %v2815
      %v3262 = vpop.f32.mrb[0].mxu0
      %v3263 = vadd.f32 %v3058, %v3262
      %v3264 = vpop.f32.mrb[0].mxu0
      %v3265 = vadd.f32 %v3058, %v3264
      %3266 = vmatprep.mubr.f32.mxu0 %v2821
      %3267 = vmatmul.mubr.f32.gmra.mrb[0].mxu0 %v2820
      %v3268 = vpop.f32.mrb[0].mxu0
      %v3269 = vadd.f32 %v3063, %v3268
      %v3270 = vpop.f32.mrb[0].mxu0
      %v3271 = vadd.f32 %v3063, %v3270
      %3272 = vmatprep.mubr.f32.mxu0 %v2826
      %3273 = vmatmul.mubr.f32.gmra.mrb[0].mxu0 %v2825
      %v3274 = vpop.f32.mrb[0].mxu0
      %v3275 = vadd.f32 %v3068, %v3274
      %v3276 = vpop.f32.mrb[0].mxu0
      %v3277 = vadd.f32 %v3068, %v3276
      %3278 = vmatprep.mubr.f32.mxu0 %v2831
      %3279 = vmatmul.mubr.f32.gmra.mrb[0].mxu0 %v2830
      %v3280 = vpop.f32.mrb[0].mxu0
      %v3281 = vadd.f32 %v3073, %v3280
      %v3282 = vpop.f32.mrb[0].mxu0
      %v3283 = vadd.f32 %v3073, %v3282
      %3284 = vdwg.mxu0
      %3285 = vmatprep.subr.mxu0 %v2900
      %3286 = vmatpush1.msra.mxu0 %v2899
      %3287 = vmatprep.subr.mxu0 %v2902
      %3288 = vmatpush1.msra.mxu0 %v2901
      %3289 = vmatprep.subr.mxu0 %v2904
      %3290 = vmatpush1.msra.mxu0 %v2903
      %3291 = vmatprep.subr.mxu0 %v2906
      %3292 = vmatpush1.msra.mxu0 %v2905
      %3293 = vmatprep.subr.mxu0 %v2908
      %3294 = vmatpush1.msra.mxu0 %v2907
      %3295 = vmatprep.subr.mxu0 %v2910
      %3296 = vmatpush1.msra.mxu0 %v2909
      %3297 = vmatprep.subr.mxu0 %v2912
      %3298 = vmatpush1.msra.mxu0 %v2911
      %3299 = vmatprep.subr.mxu0 %v2914
      %3300 = vmatpush1.msra.mxu0 %v2913
      %3301 = vmatprep.subr.mxu0 %v2916
      %3302 = vmatpush1.msra.mxu0 %v2915
      %3303 = vmatprep.subr.mxu0 %v2918
      %3304 = vmatpush1.msra.mxu0 %v2917
      %3305 = vmatprep.subr.mxu0 %v2920
      %3306 = vmatpush1.msra.mxu0 %v2919
      %3307 = vmatprep.subr.mxu0 %v2922
      %3308 = vmatpush1.msra.mxu0 %v2921
      %3309 = vmatprep.subr.mxu0 %v2924
      %3310 = vmatpush1.msra.mxu0 %v2923
      %3311 = vmatprep.subr.mxu0 %v2926
      %3312 = vmatpush1.msra.mxu0 %v2925
      %3313 = vmatprep.subr.mxu0 %v2928
      %3314 = vmatpush1.msra.mxu0 %v2927
      %3315 = vmatprep.subr.mxu0 %v2930
      %3316 = vmatpush1.msra.mxu0 %v2929
      %3317 = vmatprep.subr.mxu0 %v2932
      %3318 = vmatpush1.msra.mxu0 %v2931
      %3319 = vmatprep.subr.mxu0 %v2934
      %3320 = vmatpush1.msra.mxu0 %v2933
      %3321 = vmatprep.subr.mxu0 %v2936
      %3322 = vmatpush1.msra.mxu0 %v2935
      %3323 = vmatprep.subr.mxu0 %v2938
      %3324 = vmatpush1.msra.mxu0 %v2937
      %3325 = vmatprep.subr.mxu0 %v2940
      %3326 = vmatpush1.msra.mxu0 %v2939
      %3327 = vmatprep.subr.mxu0 %v2942
      %3328 = vmatpush1.msra.mxu0 %v2941
      %3329 = vmatprep.subr.mxu0 %v2944
      %3330 = vmatpush1.msra.mxu0 %v2943
      %3331 = vmatprep.subr.mxu0 %v2946
      %3332 = vmatpush1.msra.mxu0 %v2945
      %3333 = vmatprep.subr.mxu0 %v2948
      %3334 = vmatpush1.msra.mxu0 %v2947
      %3335 = vmatprep.subr.mxu0 %v2950
      %3336 = vmatpush1.msra.mxu0 %v2949
      %3337 = vmatprep.subr.mxu0 %v2952
      %3338 = vmatpush1.msra.mxu0 %v2951
      %3339 = vmatprep.subr.mxu0 %v2954
      %3340 = vmatpush1.msra.mxu0 %v2953
      %3341 = vmatprep.subr.mxu0 %v2956
      %3342 = vmatpush1.msra.mxu0 %v2955
      %3343 = vmatprep.subr.mxu0 %v2958
      %3344 = vmatpush1.msra.mxu0 %v2957
      %3345 = vmatprep.subr.mxu0 %v2960
      %3346 = vmatpush1.msra.mxu0 %v2959
      %3347 = vmatprep.subr.mxu0 %v2962
      %3348 = vmatpush1.msra.mxu0 %v2961
      %3349 = vmatprep.mubr.f32.mxu0 %v2758
      %3350 = vmatmul.mubr.f32.gmra.mrb[0].mxu0 %v2757
      %v3351 = vpop.f32.mrb[0].mxu0
      %v3352 = vadd.f32 %v3191, %v3351
      %v3353 = vpop.f32.mrb[0].mxu0
      %v3354 = vadd.f32 %v3193, %v3353
      %3355 = vmatprep.mubr.f32.mxu0 %v2763
      %3356 = vmatmul.mubr.f32.gmra.mrb[0].mxu0 %v2762
      %v3357 = vpop.f32.mrb[0].mxu0
      %v3358 = vadd.f32 %v3197, %v3357
      %v3359 = vpop.f32.mrb[0].mxu0
      %v3360 = vadd.f32 %v3199, %v3359
      %3361 = vmatprep.mubr.f32.mxu0 %v2768
      %3362 = vmatmul.mubr.f32.gmra.mrb[0].mxu0 %v2767
      %v3363 = vpop.f32.mrb[0].mxu0
      %v3364 = vadd.f32 %v3203, %v3363
      %v3365 = vpop.f32.mrb[0].mxu0
      %v3366 = vadd.f32 %v3205, %v3365
      %3367 = vmatprep.mubr.f32.mxu0 %v2773
      %3368 = vmatmul.mubr.f32.gmra.mrb[0].mxu0 %v2772
      %v3369 = vpop.f32.mrb[0].mxu0
      %v3370 = vadd.f32 %v3209, %v3369
      %v3371 = vpop.f32.mrb[0].mxu0
      %v3372 = vadd.f32 %v3211, %v3371
      %3373 = vmatprep.mubr.f32.mxu0 %v2778
      %3374 = vmatmul.mubr.f32.gmra.mrb[0].mxu0 %v2777
      %v3375 = vpop.f32.mrb[0].mxu0
      %v3376 = vadd.f32 %v3215, %v3375
      %v3377 = vpop.f32.mrb[0].mxu0
      %v3378 = vadd.f32 %v3217, %v3377
      %3379 = vmatprep.mubr.f32.mxu0 %v2783
      %3380 = vmatmul.mubr.f32.gmra.mrb[0].mxu0 %v2782
      %v3381 = vpop.f32.mrb[0].mxu0
      %v3382 = vadd.f32 %v3221, %v3381
      %v3383 = vpop.f32.mrb[0].mxu0
      %v3384 = vadd.f32 %v3223, %v3383
      %3385 = vmatprep.mubr.f32.mxu0 %v2788
      %3386 = vmatmul.mubr.f32.gmra.mrb[0].mxu0 %v2787
      %v3387 = vpop.f32.mrb[0].mxu0
      %v3388 = vadd.f32 %v3227, %v3387
      %v3389 = vpop.f32.mrb[0].mxu0
      %v3390 = vadd.f32 %v3229, %v3389
      %3391 = vmatprep.mubr.f32.mxu0 %v2793
      %3392 = vmatmul.mubr.f32.gmra.mrb[0].mxu0 %v2792
      %v3393 = vpop.f32.mrb[0].mxu0
      %v3394 = vadd.f32 %v3233, %v3393
      %v3395 = vpop.f32.mrb[0].mxu0
      %v3396 = vadd.f32 %v3235, %v3395
      %3397 = vmatprep.mubr.f32.mxu0 %v2798
      %3398 = vmatmul.mubr.f32.gmra.mrb[0].mxu0 %v2797
      %v3399 = vpop.f32.mrb[0].mxu0
      %v3400 = vadd.f32 %v3239, %v3399
      %v3401 = vpop.f32.mrb[0].mxu0
      %v3402 = vadd.f32 %v3241, %v3401
      %3403 = vmatprep.mubr.f32.mxu0 %v2803
      %3404 = vmatmul.mubr.f32.gmra.mrb[0].mxu0 %v2802
      %v3405 = vpop.f32.mrb[0].mxu0
      %v3406 = vadd.f32 %v3245, %v3405
      %v3407 = vpop.f32.mrb[0].mxu0
      %v3408 = vadd.f32 %v3247, %v3407
      %3409 = vmatprep.mubr.f32.mxu0 %v2808
      %3410 = vmatmul.mubr.f32.gmra.mrb[0].mxu0 %v2807
      %v3411 = vpop.f32.mrb[0].mxu0
      %v3412 = vadd.f32 %v3251, %v3411
      %v3413 = vpop.f32.mrb[0].mxu0
      %v3414 = vadd.f32 %v3253, %v3413
      %3415 = vmatprep.mubr.f32.mxu0 %v2813
      %3416 = vmatmul.mubr.f32.gmra.mrb[0].mxu0 %v2812
      %v3417 = vpop.f32.mrb[0].mxu0
      %v3418 = vadd.f32 %v3257, %v3417
      %v3419 = vpop.f32.mrb[0].mxu0
      %v3420 = vadd.f32 %v3259, %v3419
      %3421 = vmatprep.mubr.f32.mxu0 %v2818
      %3422 = vmatmul.mubr.f32.gmra.mrb[0].mxu0 %v2817
      %v3423 = vpop.f32.mrb[0].mxu0
      %v3424 = vadd.f32 %v3263, %v3423
      %v3425 = vpop.f32.mrb[0].mxu0
      %v3426 = vadd.f32 %v3265, %v3425
      %3427 = vmatprep.mubr.f32.mxu0 %v2823
      %3428 = vmatmul.mubr.f32.gmra.mrb[0].mxu0 %v2822
      %v3429 = vpop.f32.mrb[0].mxu0
      %v3430 = vadd.f32 %v3269, %v3429
      %v3431 = vpop.f32.mrb[0].mxu0
      %v3432 = vadd.f32 %v3271, %v3431
      %3433 = vmatprep.mubr.f32.mxu0 %v2828
      %3434 = vmatmul.mubr.f32.gmra.mrb[0].mxu0 %v2827
      %v3435 = vpop.f32.mrb[0].mxu0
      %v3436 = vadd.f32 %v3275, %v3435
      %v3437 = vpop.f32.mrb[0].mxu0
      %v3438 = vadd.f32 %v3277, %v3437
      %3439 = vmatprep.mubr.f32.mxu0 %v2833
      %3440 = vmatmul.mubr.f32.gmra.mrb[0].mxu0 %v2832
      %v3441 = vpop.f32.mrb[0].mxu0
      %v3442 = vadd.f32 %v3281, %v3441
      %v3443 = vpop.f32.mrb[0].mxu0
      %v3444 = vadd.f32 %v3283, %v3443
      %3445 = vdwg.mxu0
      %3446 = vmatprep.subr.mxu0 %v2964
      %3447 = vmatpush1.msra.mxu0 %v2963
      %3448 = vmatprep.subr.mxu0 %v2966
      %3449 = vmatpush1.msra.mxu0 %v2965
      %3450 = vmatprep.subr.mxu0 %v2968
      %3451 = vmatpush1.msra.mxu0 %v2967
      %3452 = vmatprep.subr.mxu0 %v2970
      %3453 = vmatpush1.msra.mxu0 %v2969
      %3454 = vmatprep.subr.mxu0 %v2972
      %3455 = vmatpush1.msra.mxu0 %v2971
      %3456 = vmatprep.subr.mxu0 %v2974
      %3457 = vmatpush1.msra.mxu0 %v2973
      %3458 = vmatprep.subr.mxu0 %v2976
      %3459 = vmatpush1.msra.mxu0 %v2975
      %3460 = vmatprep.subr.mxu0 %v2978
      %3461 = vmatpush1.msra.mxu0 %v2977
      %3462 = vmatprep.subr.mxu0 0.0
      %3463 = vmatpush1.msra.mxu0 0.0
      %3464 = vmatprep.subr.mxu0 0.0
      %3465 = vmatpush1.msra.mxu0 0.0
      %3466 = vmatprep.subr.mxu0 0.0
      %3467 = vmatpush1.msra.mxu0 0.0
      %3468 = vmatprep.subr.mxu0 0.0
      %3469 = vmatpush1.msra.mxu0 0.0
      %3470 = vmatprep.subr.mxu0 0.0
      %3471 = vmatpush1.msra.mxu0 0.0
      %3472 = vmatprep.subr.mxu0 0.0
      %3473 = vmatpush1.msra.mxu0 0.0
      %3474 = vmatprep.subr.mxu0 0.0
      %3475 = vmatpush1.msra.mxu0 0.0
      %3476 = vmatprep.subr.mxu0 0.0
      %3477 = vmatpush1.msra.mxu0 0.0
      %3478 = vmatprep.subr.mxu0 0.0
      %3479 = vmatpush1.msra.mxu0 0.0
      %3480 = vmatprep.subr.mxu0 0.0
      %3481 = vmatpush1.msra.mxu0 0.0
      %3482 = vmatprep.subr.mxu0 0.0
      %3483 = vmatpush1.msra.mxu0 0.0
      %3484 = vmatprep.subr.mxu0 0.0
      %3485 = vmatpush1.msra.mxu0 0.0
      %3486 = vmatprep.subr.mxu0 0.0
      %3487 = vmatpush1.msra.mxu0 0.0
      %3488 = vmatprep.subr.mxu0 0.0
      %3489 = vmatpush1.msra.mxu0 0.0
      %3490 = vmatprep.subr.mxu0 0.0
      %3491 = vmatpush1.msra.mxu0 0.0
      %3492 = vmatprep.subr.mxu0 0.0
      %3493 = vmatpush1.msra.mxu0 0.0
      %3494 = vmatprep.subr.mxu0 0.0
      %3495 = vmatpush1.msra.mxu0 0.0
      %3496 = vmatprep.subr.mxu0 0.0
      %3497 = vmatpush1.msra.mxu0 0.0
      %3498 = vmatprep.subr.mxu0 0.0
      %3499 = vmatpush1.msra.mxu0 0.0
      %3500 = vmatprep.subr.mxu0 0.0
      %3501 = vmatpush1.msra.mxu0 0.0
      %3502 = vmatprep.subr.mxu0 0.0
      %3503 = vmatpush1.msra.mxu0 0.0
      %3504 = vmatprep.subr.mxu0 0.0
      %3505 = vmatpush1.msra.mxu0 0.0
      %3506 = vmatprep.subr.mxu0 0.0
      %3507 = vmatpush1.msra.mxu0 0.0
      %3508 = vmatprep.subr.mxu0 0.0
      %3509 = vmatpush1.msra.mxu0 0.0
      %3510 = vmatprep.mubr.f32.mxu0 0.0
      %3511 = vmatmul.mubr.f32.gmra.mrb[0].mxu0 %v3077
      %v3512 = vpop.f32.mrb[0].mxu0
      %v3513 = vadd.f32 %v3352, %v3512
      %v3514 = vpop.f32.mrb[0].mxu0
      %v3515 = vadd.f32 %v3354, %v3514
      %3516 = vmatprep.mubr.f32.mxu0 0.0
      %3517 = vmatmul.mubr.f32.gmra.mrb[0].mxu0 %v3080
      %v3518 = vpop.f32.mrb[0].mxu0
      %v3519 = vadd.f32 %v3358, %v3518
      %v3520 = vpop.f32.mrb[0].mxu0
      %v3521 = vadd.f32 %v3360, %v3520
      %3522 = vmatprep.mubr.f32.mxu0 0.0
      %3523 = vmatmul.mubr.f32.gmra.mrb[0].mxu0 %v3083
      %v3524 = vpop.f32.mrb[0].mxu0
      %v3525 = vadd.f32 %v3364, %v3524
      %v3526 = vpop.f32.mrb[0].mxu0
      %v3527 = vadd.f32 %v3366, %v3526
      %3528 = vmatprep.mubr.f32.mxu0 0.0
      %3529 = vmatmul.mubr.f32.gmra.mrb[0].mxu0 %v3086
      %v3530 = vpop.f32.mrb[0].mxu0
      %v3531 = vadd.f32 %v3370, %v3530
      %v3532 = vpop.f32.mrb[0].mxu0
      %v3533 = vadd.f32 %v3372, %v3532
      %3534 = vmatprep.mubr.f32.mxu0 0.0
      %3535 = vmatmul.mubr.f32.gmra.mrb[0].mxu0 %v3089
      %v3536 = vpop.f32.mrb[0].mxu0
      %v3537 = vadd.f32 %v3376, %v3536
      %v3538 = vpop.f32.mrb[0].mxu0
      %v3539 = vadd.f32 %v3378, %v3538
      %3540 = vmatprep.mubr.f32.mxu0 0.0
      %3541 = vmatmul.mubr.f32.gmra.mrb[0].mxu0 %v3092
      %v3542 = vpop.f32.mrb[0].mxu0
      %v3543 = vadd.f32 %v3382, %v3542
      %v3544 = vpop.f32.mrb[0].mxu0
      %v3545 = vadd.f32 %v3384, %v3544
      %3546 = vmatprep.mubr.f32.mxu0 0.0
      %3547 = vmatmul.mubr.f32.gmra.mrb[0].mxu0 %v3095
      %v3548 = vpop.f32.mrb[0].mxu0
      %v3549 = vadd.f32 %v3388, %v3548
      %v3550 = vpop.f32.mrb[0].mxu0
      %v3551 = vadd.f32 %v3390, %v3550
      %3552 = vmatprep.mubr.f32.mxu0 0.0
      %3553 = vmatmul.mubr.f32.gmra.mrb[0].mxu0 %v3098
      %v3554 = vpop.f32.mrb[0].mxu0
      %v3555 = vadd.f32 %v3394, %v3554
      %v3556 = vpop.f32.mrb[0].mxu0
      %v3557 = vadd.f32 %v3396, %v3556
      %3558 = vmatprep.mubr.f32.mxu0 0.0
      %3559 = vmatmul.mubr.f32.gmra.mrb[0].mxu0 %v3101
      %v3560 = vpop.f32.mrb[0].mxu0
      %v3561 = vadd.f32 %v3400, %v3560
      %v3562 = vpop.f32.mrb[0].mxu0
      %v3563 = vadd.f32 %v3402, %v3562
      %3564 = vmatprep.mubr.f32.mxu0 0.0
      %3565 = vmatmul.mubr.f32.gmra.mrb[0].mxu0 %v3104
      %v3566 = vpop.f32.mrb[0].mxu0
      %v3567 = vadd.f32 %v3406, %v3566
      %v3568 = vpop.f32.mrb[0].mxu0
      %v3569 = vadd.f32 %v3408, %v3568
      %3570 = vmatprep.mubr.f32.mxu0 0.0
      %3571 = vmatmul.mubr.f32.gmra.mrb[0].mxu0 %v3107
      %v3572 = vpop.f32.mrb[0].mxu0
      %v3573 = vadd.f32 %v3412, %v3572
      %v3574 = vpop.f32.mrb[0].mxu0
      %v3575 = vadd.f32 %v3414, %v3574
      %3576 = vmatprep.mubr.f32.mxu0 0.0
      %3577 = vmatmul.mubr.f32.gmra.mrb[0].mxu0 %v3110
      %v3578 = vpop.f32.mrb[0].mxu0
      %v3579 = vadd.f32 %v3418, %v3578
      %v3580 = vpop.f32.mrb[0].mxu0
      %v3581 = vadd.f32 %v3420, %v3580
      %3582 = vmatprep.mubr.f32.mxu0 0.0
      %3583 = vmatmul.mubr.f32.gmra.mrb[0].mxu0 %v3113
      %v3584 = vpop.f32.mrb[0].mxu0
      %v3585 = vadd.f32 %v3424, %v3584
      %v3586 = vpop.f32.mrb[0].mxu0
      %v3587 = vadd.f32 %v3426, %v3586
      %3588 = vmatprep.mubr.f32.mxu0 0.0
      %3589 = vmatmul.mubr.f32.gmra.mrb[0].mxu0 %v3116
      %v3590 = vpop.f32.mrb[0].mxu0
      %v3591 = vadd.f32 %v3430, %v3590
      %v3592 = vpop.f32.mrb[0].mxu0
      %v3593 = vadd.f32 %v3432, %v3592
      %3594 = vmatprep.mubr.f32.mxu0 0.0
      %3595 = vmatmul.mubr.f32.gmra.mrb[0].mxu0 %v3119
      %v3596 = vpop.f32.mrb[0].mxu0
      %v3597 = vadd.f32 %v3436, %v3596
      %v3598 = vpop.f32.mrb[0].mxu0
      %v3599 = vadd.f32 %v3438, %v3598
      %3600 = vmatprep.mubr.f32.mxu0 0.0
      %3601 = vmatmul.mubr.f32.gmra.mrb[0].mxu0 %v3122
      %v3602 = vpop.f32.mrb[0].mxu0
      %v3603 = vadd.f32 %v3442, %v3602
      %v3604 = vpop.f32.mrb[0].mxu0
      %v3605 = vadd.f32 %v3444, %v3604
      %3606 = vdwg.mxu0
      %v3607 = vmul.f32 %v3513, 0.5
      %v3608 = vmul.f32 %v3515, 0.5
      %v3609 = vmul.f32 %v3519, 0.5
      %v3610 = vmul.f32 %v3521, 0.5
      %v3611 = vmul.f32 %v3525, 0.5
      %v3612 = vmul.f32 %v3527, 0.5
      %v3613 = vmul.f32 %v3531, 0.5
      %v3614 = vmul.f32 %v3533, 0.5
      %v3615 = vtanh.pop %v3607
      %v3616 = vtanh.pop %v3608
      %v3617 = vtanh.pop %v3609
      %v3618 = vtanh.pop %v3610
      %v3619 = vtanh.pop %v3611
      %v3620 = vtanh.pop %v3612
      %v3621 = vtanh.pop %v3613
      %v3622 = vtanh.pop %v3614
      %v3623 = vmul.f32 %v3615, 0.5
      %v3624 = vmul.f32 %v3616, 0.5
      %v3625 = vmul.f32 %v3617, 0.5
      %v3626 = vmul.f32 %v3618, 0.5
      %v3627 = vmul.f32 %v3619, 0.5
      %v3628 = vmul.f32 %v3620, 0.5
      %v3629 = vmul.f32 %v3621, 0.5
      %v3630 = vmul.f32 %v3622, 0.5
      %v3631 = vadd.f32 %v3623, 0.5
      %v3632 = vadd.f32 %v3624, 0.5
      %v3633 = vadd.f32 %v3625, 0.5
      %v3634 = vadd.f32 %v3626, 0.5
      %v3635 = vadd.f32 %v3627, 0.5
      %v3636 = vadd.f32 %v3628, 0.5
      %v3637 = vadd.f32 %v3629, 0.5
      %v3638 = vadd.f32 %v3630, 0.5
      %v3639 = vmul.f32 %v3537, 0.5
      %v3640 = vmul.f32 %v3539, 0.5
      %v3641 = vmul.f32 %v3543, 0.5
      %v3642 = vmul.f32 %v3545, 0.5
      %v3643 = vmul.f32 %v3549, 0.5
      %v3644 = vmul.f32 %v3551, 0.5
      %v3645 = vmul.f32 %v3555, 0.5
      %v3646 = vmul.f32 %v3557, 0.5
      %v3647 = vtanh.pop %v3639
      %v3648 = vtanh.pop %v3640
      %v3649 = vtanh.pop %v3641
      %v3650 = vtanh.pop %v3642
      %v3651 = vtanh.pop %v3643
      %v3652 = vtanh.pop %v3644
      %v3653 = vtanh.pop %v3645
      %v3654 = vtanh.pop %v3646
      %v3655 = vmul.f32 %v3647, 0.5
      %v3656 = vmul.f32 %v3648, 0.5
      %v3657 = vmul.f32 %v3649, 0.5
      %v3658 = vmul.f32 %v3650, 0.5
      %v3659 = vmul.f32 %v3651, 0.5
      %v3660 = vmul.f32 %v3652, 0.5
      %v3661 = vmul.f32 %v3653, 0.5
      %v3662 = vmul.f32 %v3654, 0.5
      %v3663 = vadd.f32 %v3655, 0.5
      %v3664 = vadd.f32 %v3656, 0.5
      %v3665 = vadd.f32 %v3657, 0.5
      %v3666 = vadd.f32 %v3658, 0.5
      %v3667 = vadd.f32 %v3659, 0.5
      %v3668 = vadd.f32 %v3660, 0.5
      %v3669 = vadd.f32 %v3661, 0.5
      %v3670 = vadd.f32 %v3662, 0.5
      %v3671 = vmul.f32 %v3561, 0.5
      %v3672 = vmul.f32 %v3563, 0.5
      %v3673 = vmul.f32 %v3567, 0.5
      %v3674 = vmul.f32 %v3569, 0.5
      %v3675 = vmul.f32 %v3573, 0.5
      %v3676 = vmul.f32 %v3575, 0.5
      %v3677 = vmul.f32 %v3579, 0.5
      %v3678 = vmul.f32 %v3581, 0.5
      %v3679 = vtanh.pop %v3671
      %v3680 = vtanh.pop %v3672
      %v3681 = vtanh.pop %v3673
      %v3682 = vtanh.pop %v3674
      %v3683 = vtanh.pop %v3675
      %v3684 = vtanh.pop %v3676
      %v3685 = vtanh.pop %v3677
      %v3686 = vtanh.pop %v3678
      %v3687 = vmul.f32 %v3679, 0.5
      %v3688 = vmul.f32 %v3680, 0.5
      %v3689 = vmul.f32 %v3681, 0.5
      %v3690 = vmul.f32 %v3682, 0.5
      %v3691 = vmul.f32 %v3683, 0.5
      %v3692 = vmul.f32 %v3684, 0.5
      %v3693 = vmul.f32 %v3685, 0.5
      %v3694 = vmul.f32 %v3686, 0.5
      %v3695 = vadd.f32 %v3687, 0.5
      %v3696 = vadd.f32 %v3688, 0.5
      %v3697 = vadd.f32 %v3689, 0.5
      %v3698 = vadd.f32 %v3690, 0.5
      %v3699 = vadd.f32 %v3691, 0.5
      %v3700 = vadd.f32 %v3692, 0.5
      %v3701 = vadd.f32 %v3693, 0.5
      %v3702 = vadd.f32 %v3694, 0.5
      %v3703 = vtanh.pop %v3585
      %v3704 = vtanh.pop %v3587
      %v3705 = vtanh.pop %v3591
      %v3706 = vtanh.pop %v3593
      %v3707 = vtanh.pop %v3597
      %v3708 = vtanh.pop %v3599
      %v3709 = vtanh.pop %v3603
      %v3710 = vtanh.pop %v3605
      %v3711 = vmul.f32 %v3663, %v1967
      %v3712 = vmul.f32 %v3664, %v1968
      %v3713 = vmul.f32 %v3665, %v1969
      %v3714 = vmul.f32 %v3666, %v1970
      %v3715 = vmul.f32 %v3667, %v1971
      %v3716 = vmul.f32 %v3668, %v1972
      %v3717 = vmul.f32 %v3669, %v1973
      %v3718 = vmul.f32 %v3670, %v1974
      %v3719 = vmul.f32 %v3631, %v3703
      %v3720 = vmul.f32 %v3632, %v3704
      %v3721 = vmul.f32 %v3633, %v3705
      %v3722 = vmul.f32 %v3634, %v3706
      %v3723 = vmul.f32 %v3635, %v3707
      %v3724 = vmul.f32 %v3636, %v3708
      %v3725 = vmul.f32 %v3637, %v3709
      %v3726 = vmul.f32 %v3638, %v3710
      %v3727 = vadd.f32 %v3711, %v3719
      %v3728 = vadd.f32 %v3712, %v3720
      %v3729 = vadd.f32 %v3713, %v3721
      %v3730 = vadd.f32 %v3714, %v3722
      %v3731 = vadd.f32 %v3715, %v3723
      %v3732 = vadd.f32 %v3716, %v3724
      %v3733 = vadd.f32 %v3717, %v3725
      %v3734 = vadd.f32 %v3718, %v3726
      %v3735 = vtanh.pop %v3727
      %v3736 = vtanh.pop %v3728
      %v3737 = vtanh.pop %v3729
      %v3738 = vtanh.pop %v3730
      %v3739 = vtanh.pop %v3731
      %v3740 = vtanh.pop %v3732
      %v3741 = vtanh.pop %v3733
      %v3742 = vtanh.pop %v3734
      %v3743 = vmul.f32 %v3695, %v3735
      %v3744 = vmul.f32 %v3696, %v3736
      %v3745 = vmul.f32 %v3697, %v3737
      %v3746 = vmul.f32 %v3698, %v3738
      %v3747 = vmul.f32 %v3699, %v3739
      %v3748 = vmul.f32 %v3700, %v3740
      %v3749 = vmul.f32 %v3701, %v3741
      %v3750 = vmul.f32 %v3702, %v3742
      %3751 = vst [vmem:[%s13] sm:$0xff] %v3727
      %3752 = vst [vmem:[%s13 + $0x8] sm:$0xff] %v3728
      %3753 = vst [vmem:[%s13 + $0x10] sm:$0xff] %v3729
      %3754 = vst [vmem:[%s13 + $0x18] sm:$0xff] %v3730
      %3755 = vst [vmem:[%s13 + $0x20] sm:$0xff] %v3731
      %3756 = vst [vmem:[%s13 + $0x28] sm:$0xff] %v3732
      %3757 = vst [vmem:[%s13 + $0x30] sm:$0xff] %v3733
      %3758 = vst [vmem:[%s13 + $0x38] sm:$0xff] %v3734
      %3759 = vst [vmem:[%s11] sm:$0xff] %v3743
      %3760 = vst [vmem:[%s11 + $0x8] sm:$0xff] %v3744
      %3761 = vst [vmem:[%s11 + $0x10] sm:$0xff] %v3745
      %3762 = vst [vmem:[%s11 + $0x18] sm:$0xff] %v3746
      %3763 = vst [vmem:[%s11 + $0x20] sm:$0xff] %v3747
      %3764 = vst [vmem:[%s11 + $0x28] sm:$0xff] %v3748
      %3765 = vst [vmem:[%s11 + $0x30] sm:$0xff] %v3749
      %3766 = vst [vmem:[%s11 + $0x38] sm:$0xff] %v3750
      %v3767 = vld [vmem:[%s8] ss:$8 sm:$0x3]
      %3768 = vrot.lane.b32.xlu0 %v3743, 17
      %v3769 = vpop.permute.xlu0 %3768
      %3770 = vrot.lane.b32.xlu0 %v3745, 17
      %v3771 = vpop.permute.xlu0 %3770
      %3772 = vrot.lane.b32.xlu0 %v3747, 17
      %v3773 = vpop.permute.xlu0 %3772
      %3774 = vrot.lane.b32.xlu0 %v3749, 17
      %v3775 = vpop.permute.xlu0 %3774
      %3776 = vrot.lane.b32.xlu0 %v3744, 17
      %v3777 = vpop.permute.xlu0 %3776
      %3778 = vrot.lane.b32.xlu0 %v3746, 17
      %v3779 = vpop.permute.xlu0 %3778
      %3780 = vrot.lane.b32.xlu0 %v3748, 17
      %v3781 = vpop.permute.xlu0 %3780
      %3782 = vrot.lane.b32.xlu0 %v3750, 17
      %v3783 = vpop.permute.xlu0 %3782
      %v3784 = vsel %vm501, %v3769, %v3777
      %v3785 = vsel %vm501, %v3771, %v3779
      %v3786 = vsel %vm501, %v3773, %v3781
      %v3787 = vsel %vm501, %v3775, %v3783
      %v3788 = vsel %vm501, %v3777, %v3769
      %v3789 = vsel %vm501, %v3779, %v3771
      %v3790 = vsel %vm501, %v3781, %v3773
      %v3791 = vsel %vm501, %v3783, %v3775
      %v3793 = vlaneseq
      %v3794 = vshrl.u32 %v3793, 7
      %v3795 = vsub.s32 0, %v3794
      %v3796 = vrot.slane %v3767, %v3795
      %v3797 = vlaneseq
      %v3798 = vshrl.u32 %v3797, 7
      %v3799 = vsub.s32 1, %v3798
      %v3800 = vrot.slane %v3767, %v3799
      %v3803 = vmul.f32 %v3788, %v3796
      %v3804 = vmul.f32 %v3784, %v3800
      %v3805 = vmul.f32 %v3789, %v3796
      %v3806 = vmul.f32 %v3785, %v3800
      %v3807 = vmul.f32 %v3790, %v3796
      %v3808 = vmul.f32 %v3786, %v3800
      %v3809 = vmul.f32 %v3791, %v3796
      %v3810 = vmul.f32 %v3787, %v3800
      %3811 = vst [vmem:[#allocation4] sm:$0xff] %v3803
      %3812 = vst [vmem:[#allocation4 + $0x8] sm:$0xff] %v3804
      %3813 = vst [vmem:[#allocation4 + $0x10] sm:$0xff] %v3805
      %3814 = vst [vmem:[#allocation4 + $0x18] sm:$0xff] %v3806
      %3815 = vst [vmem:[#allocation4 + $0x20] sm:$0xff] %v3807
      %3816 = vst [vmem:[#allocation4 + $0x28] sm:$0xff] %v3808
      %3817 = vst [vmem:[#allocation4 + $0x30] sm:$0xff] %v3809
      %3818 = vst [vmem:[#allocation4 + $0x38] sm:$0xff] %v3810
      %v3819 = vld [vmem:[%s537] ss:$8 sm:$0x3]
      %3820 = vrot.lane.b32.xlu0 %v3743, 16
      %v3821 = vpop.permute.xlu0 %3820
      %3822 = vrot.lane.b32.xlu0 %v3745, 16
      %v3823 = vpop.permute.xlu0 %3822
      %3824 = vrot.lane.b32.xlu0 %v3747, 16
      %v3825 = vpop.permute.xlu0 %3824
      %3826 = vrot.lane.b32.xlu0 %v3749, 16
      %v3827 = vpop.permute.xlu0 %3826
      %3828 = vrot.lane.b32.xlu0 %v3744, 16
      %v3829 = vpop.permute.xlu0 %3828
      %3830 = vrot.lane.b32.xlu0 %v3746, 16
      %v3831 = vpop.permute.xlu0 %3830
      %3832 = vrot.lane.b32.xlu0 %v3748, 16
      %v3833 = vpop.permute.xlu0 %3832
      %3834 = vrot.lane.b32.xlu0 %v3750, 16
      %v3835 = vpop.permute.xlu0 %3834
      %v3836 = vsel %vm555, %v3821, %v3829
      %v3837 = vsel %vm555, %v3823, %v3831
      %v3838 = vsel %vm555, %v3825, %v3833
      %v3839 = vsel %vm555, %v3827, %v3835
      %v3840 = vsel %vm555, %v3829, %v3821
      %v3841 = vsel %vm555, %v3831, %v3823
      %v3842 = vsel %vm555, %v3833, %v3825
      %v3843 = vsel %vm555, %v3835, %v3827
      %v3845 = vlaneseq
      %v3846 = vshrl.u32 %v3845, 7
      %v3847 = vsub.s32 0, %v3846
      %v3848 = vrot.slane %v3819, %v3847
      %v3849 = vlaneseq
      %v3850 = vshrl.u32 %v3849, 7
      %v3851 = vsub.s32 1, %v3850
      %v3852 = vrot.slane %v3819, %v3851
      %v3855 = vmul.f32 %v3840, %v3848
      %v3856 = vmul.f32 %v3836, %v3852
      %v3857 = vmul.f32 %v3841, %v3848
      %v3858 = vmul.f32 %v3837, %v3852
      %v3859 = vmul.f32 %v3842, %v3848
      %v3860 = vmul.f32 %v3838, %v3852
      %v3861 = vmul.f32 %v3843, %v3848
      %v3862 = vmul.f32 %v3839, %v3852
      %3863 = vst [vmem:[#allocation4 + $0x40] sm:$0xff] %v3855
      %3864 = vst [vmem:[#allocation4 + $0x48] sm:$0xff] %v3856
      %3865 = vst [vmem:[#allocation4 + $0x50] sm:$0xff] %v3857
      %3866 = vst [vmem:[#allocation4 + $0x58] sm:$0xff] %v3858
      %3867 = vst [vmem:[#allocation4 + $0x60] sm:$0xff] %v3859
      %3868 = vst [vmem:[#allocation4 + $0x68] sm:$0xff] %v3860
      %3869 = vst [vmem:[#allocation4 + $0x70] sm:$0xff] %v3861
      %3870 = vst [vmem:[#allocation4 + $0x78] sm:$0xff] %v3862
      %v3871 = vld [vmem:[%s591] ss:$8 sm:$0x3]
      %3872 = vrot.lane.b32.xlu0 %v3743, 15
      %v3873 = vpop.permute.xlu0 %3872
      %3874 = vrot.lane.b32.xlu0 %v3745, 15
      %v3875 = vpop.permute.xlu0 %3874
      %3876 = vrot.lane.b32.xlu0 %v3747, 15
      %v3877 = vpop.permute.xlu0 %3876
      %3878 = vrot.lane.b32.xlu0 %v3749, 15
      %v3879 = vpop.permute.xlu0 %3878
      %3880 = vrot.lane.b32.xlu0 %v3744, 15
      %v3881 = vpop.permute.xlu0 %3880
      %3882 = vrot.lane.b32.xlu0 %v3746, 15
      %v3883 = vpop.permute.xlu0 %3882
      %3884 = vrot.lane.b32.xlu0 %v3748, 15
      %v3885 = vpop.permute.xlu0 %3884
      %3886 = vrot.lane.b32.xlu0 %v3750, 15
      %v3887 = vpop.permute.xlu0 %3886
      %v3888 = vsel %vm609, %v3873, %v3881
      %v3889 = vsel %vm609, %v3875, %v3883
      %v3890 = vsel %vm609, %v3877, %v3885
      %v3891 = vsel %vm609, %v3879, %v3887
      %v3892 = vsel %vm609, %v3881, %v3873
      %v3893 = vsel %vm609, %v3883, %v3875
      %v3894 = vsel %vm609, %v3885, %v3877
      %v3895 = vsel %vm609, %v3887, %v3879
      %v3897 = vlaneseq
      %v3898 = vshrl.u32 %v3897, 7
      %v3899 = vsub.s32 0, %v3898
      %v3900 = vrot.slane %v3871, %v3899
      %v3901 = vlaneseq
      %v3902 = vshrl.u32 %v3901, 7
      %v3903 = vsub.s32 1, %v3902
      %v3904 = vrot.slane %v3871, %v3903
      %v3907 = vmul.f32 %v3892, %v3900
      %v3908 = vmul.f32 %v3888, %v3904
      %v3909 = vmul.f32 %v3893, %v3900
      %v3910 = vmul.f32 %v3889, %v3904
      %v3911 = vmul.f32 %v3894, %v3900
      %v3912 = vmul.f32 %v3890, %v3904
      %v3913 = vmul.f32 %v3895, %v3900
      %v3914 = vmul.f32 %v3891, %v3904
      %3915 = vst [vmem:[#allocation4 + $0x80] sm:$0xff] %v3907
      %3916 = vst [vmem:[#allocation4 + $0x88] sm:$0xff] %v3908
      %3917 = vst [vmem:[#allocation4 + $0x90] sm:$0xff] %v3909
      %3918 = vst [vmem:[#allocation4 + $0x98] sm:$0xff] %v3910
      %3919 = vst [vmem:[#allocation4 + $0xa0] sm:$0xff] %v3911
      %3920 = vst [vmem:[#allocation4 + $0xa8] sm:$0xff] %v3912
      %3921 = vst [vmem:[#allocation4 + $0xb0] sm:$0xff] %v3913
      %3922 = vst [vmem:[#allocation4 + $0xb8] sm:$0xff] %v3914
      %v3923 = vld [vmem:[%s645] ss:$8 sm:$0x3]
      %3924 = vrot.lane.b32.xlu0 %v3743, 1
      %v3925 = vpop.permute.xlu0 %3924
      %3926 = vrot.lane.b32.xlu0 %v3745, 1
      %v3927 = vpop.permute.xlu0 %3926
      %3928 = vrot.lane.b32.xlu0 %v3747, 1
      %v3929 = vpop.permute.xlu0 %3928
      %3930 = vrot.lane.b32.xlu0 %v3749, 1
      %v3931 = vpop.permute.xlu0 %3930
      %3932 = vrot.lane.b32.xlu0 %v3744, 1
      %v3933 = vpop.permute.xlu0 %3932
      %3934 = vrot.lane.b32.xlu0 %v3746, 1
      %v3935 = vpop.permute.xlu0 %3934
      %3936 = vrot.lane.b32.xlu0 %v3748, 1
      %v3937 = vpop.permute.xlu0 %3936
      %3938 = vrot.lane.b32.xlu0 %v3750, 1
      %v3939 = vpop.permute.xlu0 %3938
      %v3940 = vsel %vm663, %v3925, %v3933
      %v3941 = vsel %vm663, %v3927, %v3935
      %v3942 = vsel %vm663, %v3929, %v3937
      %v3943 = vsel %vm663, %v3931, %v3939
      %v3944 = vsel %vm663, %v3933, %v3925
      %v3945 = vsel %vm663, %v3935, %v3927
      %v3946 = vsel %vm663, %v3937, %v3929
      %v3947 = vsel %vm663, %v3939, %v3931
      %v3949 = vlaneseq
      %v3950 = vshrl.u32 %v3949, 7
      %v3951 = vsub.s32 0, %v3950
      %v3952 = vrot.slane %v3923, %v3951
      %v3953 = vlaneseq
      %v3954 = vshrl.u32 %v3953, 7
      %v3955 = vsub.s32 1, %v3954
      %v3956 = vrot.slane %v3923, %v3955
      %v3959 = vmul.f32 %v3944, %v3952
      %v3960 = vmul.f32 %v3940, %v3956
      %v3961 = vmul.f32 %v3945, %v3952
      %v3962 = vmul.f32 %v3941, %v3956
      %v3963 = vmul.f32 %v3946, %v3952
      %v3964 = vmul.f32 %v3942, %v3956
      %v3965 = vmul.f32 %v3947, %v3952
      %v3966 = vmul.f32 %v3943, %v3956
      %3967 = vst [vmem:[#allocation4 + $0xc0] sm:$0xff] %v3959
      %3968 = vst [vmem:[#allocation4 + $0xc8] sm:$0xff] %v3960
      %3969 = vst [vmem:[#allocation4 + $0xd0] sm:$0xff] %v3961
      %3970 = vst [vmem:[#allocation4 + $0xd8] sm:$0xff] %v3962
      %3971 = vst [vmem:[#allocation4 + $0xe0] sm:$0xff] %v3963
      %3972 = vst [vmem:[#allocation4 + $0xe8] sm:$0xff] %v3964
      %3973 = vst [vmem:[#allocation4 + $0xf0] sm:$0xff] %v3965
      %3974 = vst [vmem:[#allocation4 + $0xf8] sm:$0xff] %v3966
      %v3975 = vld [vmem:[%s699] ss:$8 sm:$0x3]
      %v3977 = vlaneseq
      %v3978 = vshrl.u32 %v3977, 7
      %v3979 = vsub.s32 0, %v3978
      %v3980 = vrot.slane %v3975, %v3979
      %v3981 = vlaneseq
      %v3982 = vshrl.u32 %v3981, 7
      %v3983 = vsub.s32 1, %v3982
      %v3984 = vrot.slane %v3975, %v3983
      %v3987 = vmul.f32 %v3743, %v3980
      %v3988 = vmul.f32 %v3744, %v3984
      %v3989 = vmul.f32 %v3745, %v3980
      %v3990 = vmul.f32 %v3746, %v3984
      %v3991 = vmul.f32 %v3747, %v3980
      %v3992 = vmul.f32 %v3748, %v3984
      %v3993 = vmul.f32 %v3749, %v3980
      %v3994 = vmul.f32 %v3750, %v3984
      %3995 = vst [vmem:[#allocation4 + $0x100] sm:$0xff] %v3987
      %3996 = vst [vmem:[#allocation4 + $0x108] sm:$0xff] %v3988
      %3997 = vst [vmem:[#allocation4 + $0x110] sm:$0xff] %v3989
      %3998 = vst [vmem:[#allocation4 + $0x118] sm:$0xff] %v3990
      %3999 = vst [vmem:[#allocation4 + $0x120] sm:$0xff] %v3991
      %4000 = vst [vmem:[#allocation4 + $0x128] sm:$0xff] %v3992
      %4001 = vst [vmem:[#allocation4 + $0x130] sm:$0xff] %v3993
      %4002 = vst [vmem:[#allocation4 + $0x138] sm:$0xff] %v3994
      %v4003 = vld [vmem:[%s728] ss:$8 sm:$0x3]
      %4004 = vrot.lane.b32.xlu0 %v3743, 127
      %v4005 = vpop.permute.xlu0 %4004
      %4006 = vrot.lane.b32.xlu0 %v3745, 127
      %v4007 = vpop.permute.xlu0 %4006
      %4008 = vrot.lane.b32.xlu0 %v3747, 127
      %v4009 = vpop.permute.xlu0 %4008
      %4010 = vrot.lane.b32.xlu0 %v3749, 127
      %v4011 = vpop.permute.xlu0 %4010
      %4012 = vrot.lane.b32.xlu0 %v3744, 127
      %v4013 = vpop.permute.xlu0 %4012
      %4014 = vrot.lane.b32.xlu0 %v3746, 127
      %v4015 = vpop.permute.xlu0 %4014
      %4016 = vrot.lane.b32.xlu0 %v3748, 127
      %v4017 = vpop.permute.xlu0 %4016
      %4018 = vrot.lane.b32.xlu0 %v3750, 127
      %v4019 = vpop.permute.xlu0 %4018
      %v4020 = vsel %vm746, %v4005, %v4013
      %v4021 = vsel %vm746, %v4007, %v4015
      %v4022 = vsel %vm746, %v4009, %v4017
      %v4023 = vsel %vm746, %v4011, %v4019
      %v4024 = vsel %vm746, %v4013, %v4005
      %v4025 = vsel %vm746, %v4015, %v4007
      %v4026 = vsel %vm746, %v4017, %v4009
      %v4027 = vsel %vm746, %v4019, %v4011
      %v4029 = vlaneseq
      %v4030 = vshrl.u32 %v4029, 7
      %v4031 = vsub.s32 0, %v4030
      %v4032 = vrot.slane %v4003, %v4031
      %v4033 = vlaneseq
      %v4034 = vshrl.u32 %v4033, 7
      %v4035 = vsub.s32 1, %v4034
      %v4036 = vrot.slane %v4003, %v4035
      %v4039 = vmul.f32 %v4020, %v4032
      %v4040 = vmul.f32 %v4024, %v4036
      %v4041 = vmul.f32 %v4021, %v4032
      %v4042 = vmul.f32 %v4025, %v4036
      %v4043 = vmul.f32 %v4022, %v4032
      %v4044 = vmul.f32 %v4026, %v4036
      %v4045 = vmul.f32 %v4023, %v4032
      %v4046 = vmul.f32 %v4027, %v4036
      %4047 = vst [vmem:[#allocation4 + $0x140] sm:$0xff] %v4039
      %4048 = vst [vmem:[#allocation4 + $0x148] sm:$0xff] %v4040
      %4049 = vst [vmem:[#allocation4 + $0x150] sm:$0xff] %v4041
      %4050 = vst [vmem:[#allocation4 + $0x158] sm:$0xff] %v4042
      %4051 = vst [vmem:[#allocation4 + $0x160] sm:$0xff] %v4043
      %4052 = vst [vmem:[#allocation4 + $0x168] sm:$0xff] %v4044
      %4053 = vst [vmem:[#allocation4 + $0x170] sm:$0xff] %v4045
      %4054 = vst [vmem:[#allocation4 + $0x178] sm:$0xff] %v4046
      %v4055 = vld [vmem:[%s782] ss:$8 sm:$0x3]
      %4056 = vrot.lane.b32.xlu0 %v3743, 113
      %v4057 = vpop.permute.xlu0 %4056
      %4058 = vrot.lane.b32.xlu0 %v3745, 113
      %v4059 = vpop.permute.xlu0 %4058
      %4060 = vrot.lane.b32.xlu0 %v3747, 113
      %v4061 = vpop.permute.xlu0 %4060
      %4062 = vrot.lane.b32.xlu0 %v3749, 113
      %v4063 = vpop.permute.xlu0 %4062
      %4064 = vrot.lane.b32.xlu0 %v3744, 113
      %v4065 = vpop.permute.xlu0 %4064
      %4066 = vrot.lane.b32.xlu0 %v3746, 113
      %v4067 = vpop.permute.xlu0 %4066
      %4068 = vrot.lane.b32.xlu0 %v3748, 113
      %v4069 = vpop.permute.xlu0 %4068
      %4070 = vrot.lane.b32.xlu0 %v3750, 113
      %v4071 = vpop.permute.xlu0 %4070
      %v4072 = vsel %vm800, %v4057, %v4065
      %v4073 = vsel %vm800, %v4059, %v4067
      %v4074 = vsel %vm800, %v4061, %v4069
      %v4075 = vsel %vm800, %v4063, %v4071
      %v4076 = vsel %vm800, %v4065, %v4057
      %v4077 = vsel %vm800, %v4067, %v4059
      %v4078 = vsel %vm800, %v4069, %v4061
      %v4079 = vsel %vm800, %v4071, %v4063
      %v4081 = vlaneseq
      %v4082 = vshrl.u32 %v4081, 7
      %v4083 = vsub.s32 0, %v4082
      %v4084 = vrot.slane %v4055, %v4083
      %v4085 = vlaneseq
      %v4086 = vshrl.u32 %v4085, 7
      %v4087 = vsub.s32 1, %v4086
      %v4088 = vrot.slane %v4055, %v4087
      %v4091 = vmul.f32 %v4072, %v4084
      %v4092 = vmul.f32 %v4076, %v4088
      %v4093 = vmul.f32 %v4073, %v4084
      %v4094 = vmul.f32 %v4077, %v4088
      %v4095 = vmul.f32 %v4074, %v4084
      %v4096 = vmul.f32 %v4078, %v4088
      %v4097 = vmul.f32 %v4075, %v4084
      %v4098 = vmul.f32 %v4079, %v4088
      %4099 = vst [vmem:[#allocation4 + $0x180] sm:$0xff] %v4091
      %4100 = vst [vmem:[#allocation4 + $0x188] sm:$0xff] %v4092
      %4101 = vst [vmem:[#allocation4 + $0x190] sm:$0xff] %v4093
      %4102 = vst [vmem:[#allocation4 + $0x198] sm:$0xff] %v4094
      %4103 = vst [vmem:[#allocation4 + $0x1a0] sm:$0xff] %v4095
      %4104 = vst [vmem:[#allocation4 + $0x1a8] sm:$0xff] %v4096
      %4105 = vst [vmem:[#allocation4 + $0x1b0] sm:$0xff] %v4097
      %4106 = vst [vmem:[#allocation4 + $0x1b8] sm:$0xff] %v4098
      %v4107 = vld [vmem:[%s836] ss:$8 sm:$0x3]
      %4108 = vrot.lane.b32.xlu0 %v3743, 112
      %v4109 = vpop.permute.xlu0 %4108
      %4110 = vrot.lane.b32.xlu0 %v3745, 112
      %v4111 = vpop.permute.xlu0 %4110
      %4112 = vrot.lane.b32.xlu0 %v3747, 112
      %v4113 = vpop.permute.xlu0 %4112
      %4114 = vrot.lane.b32.xlu0 %v3749, 112
      %v4115 = vpop.permute.xlu0 %4114
      %4116 = vrot.lane.b32.xlu0 %v3744, 112
      %v4117 = vpop.permute.xlu0 %4116
      %4118 = vrot.lane.b32.xlu0 %v3746, 112
      %v4119 = vpop.permute.xlu0 %4118
      %4120 = vrot.lane.b32.xlu0 %v3748, 112
      %v4121 = vpop.permute.xlu0 %4120
      %4122 = vrot.lane.b32.xlu0 %v3750, 112
      %v4123 = vpop.permute.xlu0 %4122
      %v4124 = vsel %vm854, %v4109, %v4117
      %v4125 = vsel %vm854, %v4111, %v4119
      %v4126 = vsel %vm854, %v4113, %v4121
      %v4127 = vsel %vm854, %v4115, %v4123
      %v4128 = vsel %vm854, %v4117, %v4109
      %v4129 = vsel %vm854, %v4119, %v4111
      %v4130 = vsel %vm854, %v4121, %v4113
      %v4131 = vsel %vm854, %v4123, %v4115
      %v4133 = vlaneseq
      %v4134 = vshrl.u32 %v4133, 7
      %v4135 = vsub.s32 0, %v4134
      %v4136 = vrot.slane %v4107, %v4135
      %v4137 = vlaneseq
      %v4138 = vshrl.u32 %v4137, 7
      %v4139 = vsub.s32 1, %v4138
      %v4140 = vrot.slane %v4107, %v4139
      %v4143 = vmul.f32 %v4124, %v4136
      %v4144 = vmul.f32 %v4128, %v4140
      %v4145 = vmul.f32 %v4125, %v4136
      %v4146 = vmul.f32 %v4129, %v4140
      %v4147 = vmul.f32 %v4126, %v4136
      %v4148 = vmul.f32 %v4130, %v4140
      %v4149 = vmul.f32 %v4127, %v4136
      %v4150 = vmul.f32 %v4131, %v4140
      %4151 = vst [vmem:[#allocation4 + $0x1c0] sm:$0xff] %v4143
      %4152 = vst [vmem:[#allocation4 + $0x1c8] sm:$0xff] %v4144
      %4153 = vst [vmem:[#allocation4 + $0x1d0] sm:$0xff] %v4145
      %4154 = vst [vmem:[#allocation4 + $0x1d8] sm:$0xff] %v4146
      %4155 = vst [vmem:[#allocation4 + $0x1e0] sm:$0xff] %v4147
      %4156 = vst [vmem:[#allocation4 + $0x1e8] sm:$0xff] %v4148
      %4157 = vst [vmem:[#allocation4 + $0x1f0] sm:$0xff] %v4149
      %4158 = vst [vmem:[#allocation4 + $0x1f8] sm:$0xff] %v4150
      %v4159 = vld [vmem:[%s890] ss:$8 sm:$0x3]
      %4160 = vrot.lane.b32.xlu0 %v3743, 111
      %v4161 = vpop.permute.xlu0 %4160
      %4162 = vrot.lane.b32.xlu0 %v3745, 111
      %v4163 = vpop.permute.xlu0 %4162
      %4164 = vrot.lane.b32.xlu0 %v3747, 111
      %v4165 = vpop.permute.xlu0 %4164
      %4166 = vrot.lane.b32.xlu0 %v3749, 111
      %v4167 = vpop.permute.xlu0 %4166
      %4168 = vrot.lane.b32.xlu0 %v3744, 111
      %v4169 = vpop.permute.xlu0 %4168
      %4170 = vrot.lane.b32.xlu0 %v3746, 111
      %v4171 = vpop.permute.xlu0 %4170
      %4172 = vrot.lane.b32.xlu0 %v3748, 111
      %v4173 = vpop.permute.xlu0 %4172
      %4174 = vrot.lane.b32.xlu0 %v3750, 111
      %v4175 = vpop.permute.xlu0 %4174
      %v4176 = vsel %vm908, %v4161, %v4169
      %v4177 = vsel %vm908, %v4163, %v4171
      %v4178 = vsel %vm908, %v4165, %v4173
      %v4179 = vsel %vm908, %v4167, %v4175
      %v4180 = vsel %vm908, %v4169, %v4161
      %v4181 = vsel %vm908, %v4171, %v4163
      %v4182 = vsel %vm908, %v4173, %v4165
      %v4183 = vsel %vm908, %v4175, %v4167
      %v4185 = vlaneseq
      %v4186 = vshrl.u32 %v4185, 7
      %v4187 = vsub.s32 0, %v4186
      %v4188 = vrot.slane %v4159, %v4187
      %v4189 = vlaneseq
      %v4190 = vshrl.u32 %v4189, 7
      %v4191 = vsub.s32 1, %v4190
      %v4192 = vrot.slane %v4159, %v4191
      %v4195 = vmul.f32 %v4176, %v4188
      %v4196 = vmul.f32 %v4180, %v4192
      %v4197 = vmul.f32 %v4177, %v4188
      %v4198 = vmul.f32 %v4181, %v4192
      %v4199 = vmul.f32 %v4178, %v4188
      %v4200 = vmul.f32 %v4182, %v4192
      %v4201 = vmul.f32 %v4179, %v4188
      %v4202 = vmul.f32 %v4183, %v4192
      %4203 = vst [vmem:[#allocation4 + $0x200] sm:$0xff] %v4195
      %4204 = vst [vmem:[#allocation4 + $0x208] sm:$0xff] %v4196
      %4205 = vst [vmem:[#allocation4 + $0x210] sm:$0xff] %v4197
      %4206 = vst [vmem:[#allocation4 + $0x218] sm:$0xff] %v4198
      %4207 = vst [vmem:[#allocation4 + $0x220] sm:$0xff] %v4199
      %4208 = vst [vmem:[#allocation4 + $0x228] sm:$0xff] %v4200
      %4209 = vst [vmem:[#allocation4 + $0x230] sm:$0xff] %v4201
      %4210 = vst [vmem:[#allocation4 + $0x238] sm:$0xff] %v4202
      %v4211 = vld [vmem:[%s6] sm:$0xff]
      %v4212 = vld [vmem:[%s6 + $0x8] sm:$0xff]
      %v4213 = vld [vmem:[%s6 + $0x10] sm:$0xff]
      %v4214 = vld [vmem:[#allocation4] sm:$0xff]
      %v4215 = vld [vmem:[#allocation4 + $0x8] sm:$0xff]
      %v4216 = vld [vmem:[#allocation4 + $0x10] sm:$0xff]
      %v4217 = vld [vmem:[#allocation4 + $0x18] sm:$0xff]
      %v4218 = vld [vmem:[#allocation4 + $0x20] sm:$0xff]
      %v4219 = vld [vmem:[#allocation4 + $0x28] sm:$0xff]
      %v4220 = vld [vmem:[#allocation4 + $0x30] sm:$0xff]
      %v4221 = vld [vmem:[#allocation4 + $0x38] sm:$0xff]
      %v4222 = vld [vmem:[#allocation4 + $0x40] sm:$0xff]
      %v4223 = vld [vmem:[#allocation4 + $0x48] sm:$0xff]
      %v4224 = vld [vmem:[#allocation4 + $0x50] sm:$0xff]
      %v4225 = vld [vmem:[#allocation4 + $0x58] sm:$0xff]
      %v4226 = vld [vmem:[#allocation4 + $0x60] sm:$0xff]
      %v4227 = vld [vmem:[#allocation4 + $0x68] sm:$0xff]
      %v4228 = vld [vmem:[#allocation4 + $0x70] sm:$0xff]
      %v4229 = vld [vmem:[#allocation4 + $0x78] sm:$0xff]
      %v4230 = vld [vmem:[#allocation4 + $0x80] sm:$0xff]
      %v4231 = vld [vmem:[#allocation4 + $0x88] sm:$0xff]
      %v4232 = vld [vmem:[#allocation4 + $0x90] sm:$0xff]
      %v4233 = vld [vmem:[#allocation4 + $0x98] sm:$0xff]
      %v4234 = vld [vmem:[#allocation4 + $0xa0] sm:$0xff]
      %v4235 = vld [vmem:[#allocation4 + $0xa8] sm:$0xff]
      %v4236 = vld [vmem:[#allocation4 + $0xb0] sm:$0xff]
      %v4237 = vld [vmem:[#allocation4 + $0xb8] sm:$0xff]
      %v4238 = vld [vmem:[#allocation4 + $0xc0] sm:$0xff]
      %v4239 = vld [vmem:[#allocation4 + $0xc8] sm:$0xff]
      %v4240 = vld [vmem:[#allocation4 + $0xd0] sm:$0xff]
      %v4241 = vld [vmem:[#allocation4 + $0xd8] sm:$0xff]
      %v4242 = vld [vmem:[#allocation4 + $0xe0] sm:$0xff]
      %v4243 = vld [vmem:[#allocation4 + $0xe8] sm:$0xff]
      %v4244 = vld [vmem:[#allocation4 + $0xf0] sm:$0xff]
      %v4245 = vld [vmem:[#allocation4 + $0xf8] sm:$0xff]
      %v4246 = vld [vmem:[#allocation4 + $0x100] sm:$0xff]
      %v4247 = vld [vmem:[#allocation4 + $0x108] sm:$0xff]
      %v4248 = vld [vmem:[#allocation4 + $0x110] sm:$0xff]
      %v4249 = vld [vmem:[#allocation4 + $0x118] sm:$0xff]
      %v4250 = vld [vmem:[#allocation4 + $0x120] sm:$0xff]
      %v4251 = vld [vmem:[#allocation4 + $0x128] sm:$0xff]
      %v4252 = vld [vmem:[#allocation4 + $0x130] sm:$0xff]
      %v4253 = vld [vmem:[#allocation4 + $0x138] sm:$0xff]
      %v4254 = vld [vmem:[#allocation4 + $0x140] sm:$0xff]
      %v4255 = vld [vmem:[#allocation4 + $0x148] sm:$0xff]
      %v4256 = vld [vmem:[#allocation4 + $0x150] sm:$0xff]
      %v4257 = vld [vmem:[#allocation4 + $0x158] sm:$0xff]
      %v4258 = vld [vmem:[#allocation4 + $0x160] sm:$0xff]
      %v4259 = vld [vmem:[#allocation4 + $0x168] sm:$0xff]
      %v4260 = vld [vmem:[#allocation4 + $0x170] sm:$0xff]
      %v4261 = vld [vmem:[#allocation4 + $0x178] sm:$0xff]
      %v4262 = vld [vmem:[#allocation4 + $0x180] sm:$0xff]
      %v4263 = vld [vmem:[#allocation4 + $0x188] sm:$0xff]
      %v4264 = vld [vmem:[#allocation4 + $0x190] sm:$0xff]
      %v4265 = vld [vmem:[#allocation4 + $0x198] sm:$0xff]
      %v4266 = vld [vmem:[#allocation4 + $0x1a0] sm:$0xff]
      %v4267 = vld [vmem:[#allocation4 + $0x1a8] sm:$0xff]
      %v4268 = vld [vmem:[#allocation4 + $0x1b0] sm:$0xff]
      %v4269 = vld [vmem:[#allocation4 + $0x1b8] sm:$0xff]
      %v4270 = vld [vmem:[#allocation4 + $0x1c0] sm:$0xff]
      %v4271 = vld [vmem:[#allocation4 + $0x1c8] sm:$0xff]
      %v4272 = vld [vmem:[#allocation4 + $0x1d0] sm:$0xff]
      %v4273 = vld [vmem:[#allocation4 + $0x1d8] sm:$0xff]
      %v4274 = vld [vmem:[#allocation4 + $0x1e0] sm:$0xff]
      %v4275 = vld [vmem:[#allocation4 + $0x1e8] sm:$0xff]
      %v4276 = vld [vmem:[#allocation4 + $0x1f0] sm:$0xff]
      %v4277 = vld [vmem:[#allocation4 + $0x1f8] sm:$0xff]
      %v4278 = vld [vmem:[#allocation4 + $0x200] sm:$0xff]
      %v4279 = vld [vmem:[#allocation4 + $0x208] sm:$0xff]
      %v4280 = vld [vmem:[#allocation4 + $0x210] sm:$0xff]
      %v4281 = vld [vmem:[#allocation4 + $0x218] sm:$0xff]
      %v4282 = vld [vmem:[#allocation4 + $0x220] sm:$0xff]
      %v4283 = vld [vmem:[#allocation4 + $0x228] sm:$0xff]
      %v4284 = vld [vmem:[#allocation4 + $0x230] sm:$0xff]
      %v4285 = vld [vmem:[#allocation4 + $0x238] sm:$0xff]
      %v4286 = vld [vmem:[#allocation5] sm:$0x1]
      %v4288 = vlaneseq
      %v4289 = vshrl.u32 %v4288, 7
      %v4290 = vsub.s32 0, %v4289
      %v4291 = vrot.slane %v4286, %v4290
      %4292 = vset.pattern.permute.xlu0 0
      %4293 = vperm.xlu0 %4292, %v4291
      %v4294 = vpop.permute.xlu0 %4293
      %v4297 = vsel %vm1090, %v4213, 0
      %4299 = vmatprep.subr.mxu0 %v4215
      %4300 = vmatpush1.msra.mxu0 %v4214
      %4301 = vmatprep.subr.mxu0 %v4217
      %4302 = vmatpush1.msra.mxu0 %v4216
      %4303 = vmatprep.subr.mxu0 %v4219
      %4304 = vmatpush1.msra.mxu0 %v4218
      %4305 = vmatprep.subr.mxu0 %v4221
      %4306 = vmatpush1.msra.mxu0 %v4220
      %4307 = vmatprep.subr.mxu0 %v4223
      %4308 = vmatpush1.msra.mxu0 %v4222
      %4309 = vmatprep.subr.mxu0 %v4225
      %4310 = vmatpush1.msra.mxu0 %v4224
      %4311 = vmatprep.subr.mxu0 %v4227
      %4312 = vmatpush1.msra.mxu0 %v4226
      %4313 = vmatprep.subr.mxu0 %v4229
      %4314 = vmatpush1.msra.mxu0 %v4228
      %4315 = vmatprep.subr.mxu0 %v4231
      %4316 = vmatpush1.msra.mxu0 %v4230
      %4317 = vmatprep.subr.mxu0 %v4233
      %4318 = vmatpush1.msra.mxu0 %v4232
      %4319 = vmatprep.subr.mxu0 %v4235
      %4320 = vmatpush1.msra.mxu0 %v4234
      %4321 = vmatprep.subr.mxu0 %v4237
      %4322 = vmatpush1.msra.mxu0 %v4236
      %4323 = vmatprep.subr.mxu0 %v4239
      %4324 = vmatpush1.msra.mxu0 %v4238
      %4325 = vmatprep.subr.mxu0 %v4241
      %4326 = vmatpush1.msra.mxu0 %v4240
      %4327 = vmatprep.subr.mxu0 %v4243
      %4328 = vmatpush1.msra.mxu0 %v4242
      %4329 = vmatprep.subr.mxu0 %v4245
      %4330 = vmatpush1.msra.mxu0 %v4244
      %4331 = vmatprep.subr.mxu0 %v4247
      %4332 = vmatpush1.msra.mxu0 %v4246
      %4333 = vmatprep.subr.mxu0 %v4249
      %4334 = vmatpush1.msra.mxu0 %v4248
      %4335 = vmatprep.subr.mxu0 %v4251
      %4336 = vmatpush1.msra.mxu0 %v4250
      %4337 = vmatprep.subr.mxu0 %v4253
      %4338 = vmatpush1.msra.mxu0 %v4252
      %4339 = vmatprep.subr.mxu0 %v4255
      %4340 = vmatpush1.msra.mxu0 %v4254
      %4341 = vmatprep.subr.mxu0 %v4257
      %4342 = vmatpush1.msra.mxu0 %v4256
      %4343 = vmatprep.subr.mxu0 %v4259
      %4344 = vmatpush1.msra.mxu0 %v4258
      %4345 = vmatprep.subr.mxu0 %v4261
      %4346 = vmatpush1.msra.mxu0 %v4260
      %4347 = vmatprep.subr.mxu0 %v4263
      %4348 = vmatpush1.msra.mxu0 %v4262
      %4349 = vmatprep.subr.mxu0 %v4265
      %4350 = vmatpush1.msra.mxu0 %v4264
      %4351 = vmatprep.subr.mxu0 %v4267
      %4352 = vmatpush1.msra.mxu0 %v4266
      %4353 = vmatprep.subr.mxu0 %v4269
      %4354 = vmatpush1.msra.mxu0 %v4268
      %4355 = vmatprep.subr.mxu0 %v4271
      %4356 = vmatpush1.msra.mxu0 %v4270
      %4357 = vmatprep.subr.mxu0 %v4273
      %4358 = vmatpush1.msra.mxu0 %v4272
      %4359 = vmatprep.subr.mxu0 %v4275
      %4360 = vmatpush1.msra.mxu0 %v4274
      %4361 = vmatprep.subr.mxu0 %v4277
      %4362 = vmatpush1.msra.mxu0 %v4276
      %4363 = vmatprep.mubr.f32.mxu0 %v4212
      %4364 = vmatmul.mubr.f32.gmra.mrb[0].mxu0 %v4211
      %v4365 = vpop.f32.mrb[0].mxu0
      %v4366 = vadd.f32 %v4294, %v4365
      %v4367 = vpop.f32.mrb[0].mxu0
      %v4368 = vadd.f32 %v4294, %v4367
      %4369 = vdwg.mxu0
      %4370 = vmatprep.subr.mxu0 %v4279
      %4371 = vmatpush1.msra.mxu0 %v4278
      %4372 = vmatprep.subr.mxu0 %v4281
      %4373 = vmatpush1.msra.mxu0 %v4280
      %4374 = vmatprep.subr.mxu0 %v4283
      %4375 = vmatpush1.msra.mxu0 %v4282
      %4376 = vmatprep.subr.mxu0 %v4285
      %4377 = vmatpush1.msra.mxu0 %v4284
      %4378 = vmatprep.subr.mxu0 0.0
      %4379 = vmatpush1.msra.mxu0 0.0
      %4380 = vmatprep.subr.mxu0 0.0
      %4381 = vmatpush1.msra.mxu0 0.0
      %4382 = vmatprep.subr.mxu0 0.0
      %4383 = vmatpush1.msra.mxu0 0.0
      %4384 = vmatprep.subr.mxu0 0.0
      %4385 = vmatpush1.msra.mxu0 0.0
      %4386 = vmatprep.subr.mxu0 0.0
      %4387 = vmatpush1.msra.mxu0 0.0
      %4388 = vmatprep.subr.mxu0 0.0
      %4389 = vmatpush1.msra.mxu0 0.0
      %4390 = vmatprep.subr.mxu0 0.0
      %4391 = vmatpush1.msra.mxu0 0.0
      %4392 = vmatprep.subr.mxu0 0.0
      %4393 = vmatpush1.msra.mxu0 0.0
      %4394 = vmatprep.subr.mxu0 0.0
      %4395 = vmatpush1.msra.mxu0 0.0
      %4396 = vmatprep.subr.mxu0 0.0
      %4397 = vmatpush1.msra.mxu0 0.0
      %4398 = vmatprep.subr.mxu0 0.0
      %4399 = vmatpush1.msra.mxu0 0.0
      %4400 = vmatprep.subr.mxu0 0.0
      %4401 = vmatpush1.msra.mxu0 0.0
      %4402 = vmatprep.subr.mxu0 0.0
      %4403 = vmatpush1.msra.mxu0 0.0
      %4404 = vmatprep.subr.mxu0 0.0
      %4405 = vmatpush1.msra.mxu0 0.0
      %4406 = vmatprep.subr.mxu0 0.0
      %4407 = vmatpush1.msra.mxu0 0.0
      %4408 = vmatprep.subr.mxu0 0.0
      %4409 = vmatpush1.msra.mxu0 0.0
      %4410 = vmatprep.subr.mxu0 0.0
      %4411 = vmatpush1.msra.mxu0 0.0
      %4412 = vmatprep.subr.mxu0 0.0
      %4413 = vmatpush1.msra.mxu0 0.0
      %4414 = vmatprep.subr.mxu0 0.0
      %4415 = vmatpush1.msra.mxu0 0.0
      %4416 = vmatprep.subr.mxu0 0.0
      %4417 = vmatpush1.msra.mxu0 0.0
      %4418 = vmatprep.subr.mxu0 0.0
      %4419 = vmatpush1.msra.mxu0 0.0
      %4420 = vmatprep.subr.mxu0 0.0
      %4421 = vmatpush1.msra.mxu0 0.0
      %4422 = vmatprep.subr.mxu0 0.0
      %4423 = vmatpush1.msra.mxu0 0.0
      %4424 = vmatprep.subr.mxu0 0.0
      %4425 = vmatpush1.msra.mxu0 0.0
      %4426 = vmatprep.subr.mxu0 0.0
      %4427 = vmatpush1.msra.mxu0 0.0
      %4428 = vmatprep.subr.mxu0 0.0
      %4429 = vmatpush1.msra.mxu0 0.0
      %4430 = vmatprep.subr.mxu0 0.0
      %4431 = vmatpush1.msra.mxu0 0.0
      %4432 = vmatprep.subr.mxu0 0.0
      %4433 = vmatpush1.msra.mxu0 0.0
      %4434 = vmatprep.mubr.f32.mxu0 0.0
      %4435 = vmatmul.mubr.f32.gmra.mrb[0].mxu0 %v4297
      %v4436 = vpop.f32.mrb[0].mxu0
      %v4437 = vadd.f32 %v4366, %v4436
      %v4438 = vpop.f32.mrb[0].mxu0
      %v4439 = vadd.f32 %v4368, %v4438
      %4440 = vdwg.mxu0
      %v4443 = vcombine.low %v4437, %v4439
      %v4445 = vunpack.c.l.s4 1966171168
      %v4446 = vunpack.c.0.s8 %v4445
      %v4447 = vlaneseq
      %v4448 = vshrl.u32 %v4447, 7
      %v4449 = vsub.s32 %v4446, %v4448
      %v4450 = vrot.slane %v4443, %v4449
      %v4452 = vunpack.c.l.s4 1966171168
      %v4453 = vunpack.c.0.s8 %v4452
      %v4454 = vlaneseq
      %v4455 = vshrl.u32 %v4454, 7
      %v4456 = vsub.s32 %v4453, %v4455
      %v4457 = vrot.slane %v4450, %v4456
      %v4459 = vlaneseq
      %vm4460 = vcmp.ge.s32.totalorder %v4459, 0
      %vm4461 = vcmp.lt.s32.totalorder %v4459, 256
      %vm4462 = vmand %vm4460, %vm4461
      %4463 = vst.msk [vmem:[%s429] sm:$0x3] %vm4462, %v4457
      %p4464 = scmp.lt.s32.totalorder %s27, 7
      %s4465 = scalar_select %p4464, %s27, 7
      %s4466 = smul.addr %s4465, 2
      %s4467 = scalar_lea.vmem %s9, %s4466
      // Predicated region
      $region61: #{convlstm_forward.1} parent=55 // pred_check
        %p4468 = pneg %p239
      $region62: #{convlstm_forward.1} parent=55 // pred_check_branch
        %4470 = sbr.rel (%p4468) target = $region64
      $region63: #{convlstm_forward.1} parent=55 // pred_region
        _
      $region64: #{convlstm_forward.1} parent=55 // pred_fallthru
        _
      // Predicated region
      $region65: #{convlstm_forward.1} parent=55 // pred_check
        %p4471 = pneg %p260
      $region66: #{convlstm_forward.1} parent=55 // pred_check_branch
        %4473 = sbr.rel (%p4471) target = $region68
      $region67: #{convlstm_forward.1} parent=55 // pred_region
        _
      $region68: #{convlstm_forward.1} parent=55 // pred_fallthru
        _
      // Predicated region
      $region69: #{convlstm_forward.1} parent=55 // pred_check
        %p4474 = pneg %p281
      $region70: #{convlstm_forward.1} parent=55 // pred_check_branch
        %4476 = sbr.rel (%p4474) target = $region72
      $region71: #{convlstm_forward.1} parent=55 // pred_region
        _
      $region72: #{convlstm_forward.1} parent=55 // pred_fallthru
        _
      // Predicated region
      $region73: #{convlstm_forward.1} parent=55 // pred_check
        %p4477 = pneg %p302
      $region74: #{convlstm_forward.1} parent=55 // pred_check_branch
        %4479 = sbr.rel (%p4477) target = $region76
      $region75: #{convlstm_forward.1} parent=55 // pred_region
        _
      $region76: #{convlstm_forward.1} parent=55 // pred_fallthru
        _
      // Predicated region
      $region77: #{convlstm_forward.1} parent=55 // pred_check
        %p4480 = pneg %p323
      $region78: #{convlstm_forward.1} parent=55 // pred_check_branch
        %4482 = sbr.rel (%p4480) target = $region80
      $region79: #{convlstm_forward.1} parent=55 // pred_region
        _
      $region80: #{convlstm_forward.1} parent=55 // pred_fallthru
        _
      // Predicated region
      $region81: #{convlstm_forward.1} parent=55 // pred_check
        %p4483 = pneg %p260
      $region82: #{convlstm_forward.1} parent=55 // pred_check_branch
        %4485 = sbr.rel (%p4483) target = $region84
      $region83: #{convlstm_forward.1} parent=55 // pred_region
        _
      $region84: #{convlstm_forward.1} parent=55 // pred_fallthru
        _
      // Predicated region
      $region85: #{convlstm_forward.1} parent=55 // pred_check
        %p4486 = pneg %p281
      $region86: #{convlstm_forward.1} parent=55 // pred_check_branch
        %4488 = sbr.rel (%p4486) target = $region88
      $region87: #{convlstm_forward.1} parent=55 // pred_region
        _
      $region88: #{convlstm_forward.1} parent=55 // pred_fallthru
        _
      // Predicated region
      $region89: #{convlstm_forward.1} parent=55 // pred_check
        %p4489 = pneg %p302
      $region90: #{convlstm_forward.1} parent=55 // pred_check_branch
        %4491 = sbr.rel (%p4489) target = $region92
      $region91: #{convlstm_forward.1} parent=55 // pred_region
        _
      $region92: #{convlstm_forward.1} parent=55 // pred_fallthru
        _
      // Predicated region
      $region93: #{convlstm_forward.1} parent=55 // pred_check
        %p4492 = pneg %p323
      $region94: #{convlstm_forward.1} parent=55 // pred_check_branch
        %4494 = sbr.rel (%p4492) target = $region96
      $region95: #{convlstm_forward.1} parent=55 // pred_region
        _
      $region96: #{convlstm_forward.1} parent=55 // pred_fallthru
        _
    $region56: #{convlstm_forward.1} parent=5 // pred_fallthru
      _
    %p4495 = scmp.le.s32.totalorder 2, %s22
    // Predicated region
    $region97: #{convlstm_forward.1} parent=5 // pred_check
      %p4496 = pneg %p4495
    $region98: #{convlstm_forward.1} parent=5 // pred_check_branch
      %4498 = sbr.rel (%p4496) target = $region100
    $region99: #{convlstm_forward.1} parent=5 // pred_region
      %s4499 = ssub.s32 %s22, 2
      // Predicated region
      $region101: #{convlstm_forward.1} parent=99 // pred_check
        %p4500 = pneg %p245
      $region102: #{convlstm_forward.1} parent=99 // pred_check_branch
        %4502 = sbr.rel (%p4500) target = $region104
      $region103: #{convlstm_forward.1} parent=99 // pred_region
        %p4503 = scmp.lt.s32.totalorder %s28, 7
        %s4504 = scalar_select %p4503, %s28, 7
        %s4505 = smul.addr %s4504, 2
        %s4506 = scalar_lea.vmem %s9, %s4505
      $region104: #{convlstm_forward.1} parent=99 // pred_fallthru
        _
    $region100: #{convlstm_forward.1} parent=5 // pred_fallthru
      _
  $region6: #{convlstm_forward.1} parent=0 // loop_footer
    %s26 = sadd.s32 1, %s22
  $region7: #{convlstm_forward.1} parent=0 // loop_footer_branch
    %21 = sbr.rel target = $region3
  $region8: #{convlstm_forward.1} parent=0 // loop_exit
    _

</llo_original>
